<compile_context>
chip_gen: v5e
topology: v5e:2x2
jax: 0.10.0
libtpu: 0.0.40
codegen_flags: <defaults>
</compile_context>

<pallas_src>
import math
import functools

import jax
import jax.numpy as jnp
from jax.experimental import pallas as pl
from jax.experimental.pallas import tpu as pltpu


# -----------------------------------------------------------------------------
# In-kernel helpers
# -----------------------------------------------------------------------------
def _layer_norm(x, gamma, beta, eps=1e-5):
    mu = jnp.mean(x, axis=-1, keepdims=True)
    var = jnp.mean((x - mu) ** 2, axis=-1, keepdims=True)
    return (x - mu) * jax.lax.rsqrt(var + eps) * gamma + beta


# -----------------------------------------------------------------------------
# Pallas kernel: one full TransformerEncoderLayer for one batch element
# (q/k/v proj, head-batched causal attention + softmax, single out-proj,
#  residual+LN1, ReLU FFN, residual+LN2)
# -----------------------------------------------------------------------------
def _encoder_layer_kernel(x_ref,
                          wq_ref, wk_ref, wv_ref, bq_ref, bk_ref, bv_ref,
                          wo_ref, bo_ref, g1_ref, be1_ref,
                          w1_ref, b1_ref, w2_ref, b2_ref, g2_ref, be2_ref,
                          o_ref, *, nhead):
    f32 = jnp.float32
    bf16 = jnp.bfloat16

    x = x_ref[0]                                   # (S, D) f32
    S, D = x.shape
    dh = D // nhead
    scale = 1.0 / math.sqrt(dh)
    x_bf = x.astype(bf16)

    # --- projections: bf16 operands, f32 accumulation, f32 bias add ---------
    q = jnp.dot(x_bf, wq_ref[...], preferred_element_type=f32) + bq_ref[...]
    k = jnp.dot(x_bf, wk_ref[...], preferred_element_type=f32) + bk_ref[...]
    v = jnp.dot(x_bf, wv_ref[...], preferred_element_type=f32) + bv_ref[...]

    def split_heads(t):                            # (S, D) f32 -> (nhead, S, dh) bf16
        tb = t.astype(bf16)
        return jnp.stack([tb[:, h * dh:(h + 1) * dh] for h in range(nhead)], axis=0)

    qh = split_heads(q)
    kh = split_heads(k)
    vh = split_heads(v)

    # --- head-batched scores + causal mask (generated in-kernel) ------------
    s = jnp.einsum('hqd,hkd->hqk', qh, kh, preferred_element_type=f32) * scale
    row = jax.lax.broadcasted_iota(jnp.int32, (S, S), 0)
    col = jax.lax.broadcasted_iota(jnp.int32, (S, S), 1)
    s = jnp.where((col <= row)[None, :, :], s, -1e30)

    # --- softmax (f32 statistics, EUP reciprocal) ----------------------------
    m = jnp.max(s, axis=-1, keepdims=True)
    e = jnp.exp(s - m)
    denom = jnp.sum(e, axis=-1, keepdims=True)
    p = (e * pl.reciprocal(denom, approx=True)).astype(bf16)

    # --- p @ v, merge heads, single full-K output projection ----------------
    oh = jnp.einsum('hqk,hkd->hqd', p, vh, preferred_element_type=f32)   # (nhead,S,dh)
    attn = jnp.concatenate([oh[h] for h in range(nhead)], axis=-1)       # (S, D) f32
    attn = (jnp.dot(attn.astype(bf16), wo_ref[...], preferred_element_type=f32)
            + bo_ref[...])

    # --- residual + LayerNorm1 (PyTorch default: post-LN) --------------------
    y = _layer_norm(x + attn, g1_ref[...], be1_ref[...])

    # --- ReLU feed-forward + residual + LayerNorm2 ---------------------------
    h1 = jnp.maximum(
        jnp.dot(y.astype(bf16), w1_ref[...], preferred_element_type=f32) + b1_ref[...],
        0.0)
    h2 = jnp.dot(h1.astype(bf16), w2_ref[...], preferred_element_type=f32) + b2_ref[...]
    z = _layer_norm(y + h2, g2_ref[...], be2_ref[...])

    o_ref[0] = z.astype(o_ref.dtype)


def encoder_layer(x, layer_params, nhead):
    """x: (B, S, D) float32 -> (B, S, D)."""
    B, S, D = x.shape

    def rep(p):  # full-array, grid-invariant block (weights / biases / LN affines)
        return pl.BlockSpec(p.shape, lambda b: (0, 0))

    in_specs = [pl.BlockSpec((1, S, D), lambda b: (b, 0, 0))]
    in_specs += [rep(p) for p in layer_params]

    return pl.pallas_call(
        functools.partial(_encoder_layer_kernel, nhead=nhead),
        out_shape=jax.ShapeDtypeStruct((B, S, D), x.dtype),
        grid=(B,),
        in_specs=in_specs,
        out_specs=pl.BlockSpec((1, S, D), lambda b: (b, 0, 0)),
        compiler_params=pltpu.CompilerParams(dimension_semantics=("parallel",)),
    )(x, *layer_params)


# -----------------------------------------------------------------------------
# Pallas kernel: final decoder Linear(ninp -> n_labels), lane-padded output
# -----------------------------------------------------------------------------
def _decoder_kernel(x_ref, w_ref, b_ref, o_ref):
    xb = x_ref[0].astype(jnp.bfloat16)
    o_ref[0] = (jnp.dot(xb, w_ref[...], preferred_element_type=jnp.float32)
                + b_ref[...]).astype(o_ref.dtype)


def decoder(x, w_pad_bf16, b_pad):
    """x: (B,S,D) f32, w_pad: (D, Npad) bf16, b_pad: (1, Npad) f32 -> (B,S,Npad)."""
    B, S, D = x.shape
    N = w_pad_bf16.shape[1]
    return pl.pallas_call(
        _decoder_kernel,
        out_shape=jax.ShapeDtypeStruct((B, S, N), jnp.float32),
        grid=(B,),
        in_specs=[pl.BlockSpec((1, S, D), lambda b: (b, 0, 0)),
                  pl.BlockSpec((D, N), lambda b: (0, 0)),
                  pl.BlockSpec((1, N), lambda b: (0, 0))],
        out_specs=pl.BlockSpec((1, S, N), lambda b: (b, 0, 0)),
        compiler_params=pltpu.CompilerParams(dimension_semantics=("parallel",)),
    )(x, w_pad_bf16, b_pad)


# -----------------------------------------------------------------------------
# Plain-JAX glue: parameter init, positional encoding, forward
# -----------------------------------------------------------------------------
def positional_encoding_row0(d_model, max_len=5000):
    """Reproduces PositionalEncoding's pe buffer, then forward's pe[0, :]."""
    pe = jnp.zeros((max_len, d_model), jnp.float32)
    position = jnp.arange(0, max_len, dtype=jnp.float32)[:, None]
    div_term = jnp.exp(jnp.arange(0, d_model, 2, dtype=jnp.float32)
                       * (-math.log(10000.0) / d_model))
    pe = pe.at[:, 0::2].set(jnp.sin(position * div_term))
    pe = pe.at[:, 1::2].set(jnp.cos(position * div_term))
    # torch: pe.unsqueeze(0).transpose(0,1) -> (max_len, 1, d); forward adds pe[0, :]
    return pe[0]                                               # (d_model,)


def init_params(key, ntoken, ninp, nhead, nhid, nlayers, n_labels, lane_pad=128):
    bf16 = jnp.bfloat16
    keys = jax.random.split(key, 2 + nlayers)
    initrange = 0.1
    emb = jax.random.uniform(keys[0], (ntoken, ninp), jnp.float32, -initrange, initrange)

    dec_w = jax.random.uniform(keys[1], (n_labels, ninp), jnp.float32, -initrange, initrange)
    n_pad = ((n_labels + lane_pad - 1) // lane_pad) * lane_pad
    dec_wt_pad = (jnp.zeros((ninp, n_pad), jnp.float32)
                  .at[:, :n_labels].set(dec_w.T)).astype(bf16)
    dec_b_pad = jnp.zeros((1, n_pad), jnp.float32)          # decoder bias zero-init

    layers = []
    for l in range(nlayers):
        lk = jax.random.split(keys[2 + l], 6)
        wq = jax.random.uniform(lk[0], (ninp, ninp), jnp.float32, -0.1, 0.1)
        wk = jax.random.uniform(lk[1], (ninp, ninp), jnp.float32, -0.1, 0.1)
        wv = jax.random.uniform(lk[2], (ninp, ninp), jnp.float32, -0.1, 0.1)
        wo = jax.random.uniform(lk[3], (ninp, ninp), jnp.float32, -0.1, 0.1)
        w1 = jax.random.uniform(lk[4], (nhid, ninp), jnp.float32, -0.1, 0.1)
        w2 = jax.random.uniform(lk[5], (ninp, nhid), jnp.float32, -0.1, 0.1)
        zD = jnp.zeros((1, ninp), jnp.float32)
        # pre-transpose weights to (in, out) and store matmul weights in bf16;
        # biases / LayerNorm affines stay f32 as 2-D (1, n) rows.
        layers.append((
            wq.T.astype(bf16), wk.T.astype(bf16), wv.T.astype(bf16),
            zD, zD, zD,                                   # bq, bk, bv
            wo.T.astype(bf16), zD,                        # wo, bo
            jnp.ones((1, ninp), jnp.float32), zD,         # g1, be1
            w1.T.astype(bf16), jnp.zeros((1, nhid), jnp.float32),   # w1, b1
            w2.T.astype(bf16), zD,                        # w2, b2
            jnp.ones((1, ninp), jnp.float32), zD,         # g2, be2
        ))
    return emb, layers, dec_wt_pad, dec_b_pad


def transformer_forward(src_ids, params, ninp, nhead, n_labels):
    """src_ids: (S, B) int32 token ids  ->  (S, B, n_labels) float32 logits."""
    emb, layers, dec_wt_pad, dec_b_pad = params

    # Embedding gather directly into batch-major (B, S, D): no activation
    # transposes around the Pallas kernels.
    x = jnp.take(emb, src_ids.T, axis=0) * math.sqrt(ninp)      # (B, S, D)
    x = x + positional_encoding_row0(ninp)                      # + pe[0,:] broadcast

    for layer_params in layers:
        x = encoder_layer(x, layer_params, nhead)

    out = decoder(x, dec_wt_pad, dec_b_pad)                     # (B, S, Npad)
    out = out[:, :, :n_labels]
    return jnp.transpose(out, (1, 0, 2))                        # (S, B, n_labels)


# -----------------------------------------------------------------------------
if __name__ == "__main__":
    # Small but lane-friendly hyperparameters (module-style: ninp % nhead == 0,
    # head dim = 128, D / nhid / S multiples of 128).
    ntoken, ninp, nhead_, nhid_, nlayers_, n_labels_ = 64, 256, 2, 512, 2, 2
    S, B = 128, 2

    key = jax.random.PRNGKey(0)
    pkey, dkey = jax.random.split(key)
    params = init_params(pkey, ntoken, ninp, nhead_, nhid_, nlayers_, n_labels_)
    src = jax.random.randint(dkey, (S, B), 0, ntoken, dtype=jnp.int32)

    fwd = jax.jit(functools.partial(transformer_forward,
                                    ninp=ninp, nhead=nhead_, n_labels=n_labels_))
    out = fwd(src, params)
    out = jax.block_until_ready(out)
    assert out.shape == (S, B, n_labels_)
    assert bool(jnp.all(jnp.isfinite(out)))
    print("KERNEL_OK")
</pallas_src>

<mosaic_0001>
module attributes {stable_mosaic.version = 11 : i64} {
  func.func @_encoder_layer_kernel(%arg0: i32, %arg1: memref<1x128x256xf32, #tpu.memory_space<vmem>>, %arg2: memref<256x256xbf16, #tpu.memory_space<vmem>>, %arg3: memref<256x256xbf16, #tpu.memory_space<vmem>>, %arg4: memref<256x256xbf16, #tpu.memory_space<vmem>>, %arg5: memref<1x256xf32, #tpu.memory_space<vmem>>, %arg6: memref<1x256xf32, #tpu.memory_space<vmem>>, %arg7: memref<1x256xf32, #tpu.memory_space<vmem>>, %arg8: memref<256x256xbf16, #tpu.memory_space<vmem>>, %arg9: memref<1x256xf32, #tpu.memory_space<vmem>>, %arg10: memref<1x256xf32, #tpu.memory_space<vmem>>, %arg11: memref<1x256xf32, #tpu.memory_space<vmem>>, %arg12: memref<256x512xbf16, #tpu.memory_space<vmem>>, %arg13: memref<1x512xf32, #tpu.memory_space<vmem>>, %arg14: memref<512x256xbf16, #tpu.memory_space<vmem>>, %arg15: memref<1x256xf32, #tpu.memory_space<vmem>>, %arg16: memref<1x256xf32, #tpu.memory_space<vmem>>, %arg17: memref<1x256xf32, #tpu.memory_space<vmem>>, %arg18: memref<1x128x256xf32, #tpu.memory_space<vmem>>) attributes {dimension_semantics = [#tpu.dimension_semantics<parallel>], iteration_bounds = array<i64: 2>, scalar_prefetch = 0 : i64, scratch_operands = 0 : i64, tpu.core_type = #tpu.core_type<tc>, window_params = [{transform_indices = @transform_0, window_bounds = array<i64: 1, 128, 256>}, {pipeline_mode = #tpu.pipeline_mode<synchronous>, transform_indices = @transform_1, window_bounds = array<i64: 256, 256>}, {pipeline_mode = #tpu.pipeline_mode<synchronous>, transform_indices = @transform_2, window_bounds = array<i64: 256, 256>}, {pipeline_mode = #tpu.pipeline_mode<synchronous>, transform_indices = @transform_3, window_bounds = array<i64: 256, 256>}, {pipeline_mode = #tpu.pipeline_mode<synchronous>, transform_indices = @transform_4, window_bounds = array<i64: 1, 256>}, {pipeline_mode = #tpu.pipeline_mode<synchronous>, transform_indices = @transform_5, window_bounds = array<i64: 1, 256>}, {pipeline_mode = #tpu.pipeline_mode<synchronous>, transform_indices = @transform_6, window_bounds = array<i64: 1, 256>}, {pipeline_mode = #tpu.pipeline_mode<synchronous>, transform_indices = @transform_7, window_bounds = array<i64: 256, 256>}, {pipeline_mode = #tpu.pipeline_mode<synchronous>, transform_indices = @transform_8, window_bounds = array<i64: 1, 256>}, {pipeline_mode = #tpu.pipeline_mode<synchronous>, transform_indices = @transform_9, window_bounds = array<i64: 1, 256>}, {pipeline_mode = #tpu.pipeline_mode<synchronous>, transform_indices = @transform_10, window_bounds = array<i64: 1, 256>}, {pipeline_mode = #tpu.pipeline_mode<synchronous>, transform_indices = @transform_11, window_bounds = array<i64: 256, 512>}, {pipeline_mode = #tpu.pipeline_mode<synchronous>, transform_indices = @transform_12, window_bounds = array<i64: 1, 512>}, {pipeline_mode = #tpu.pipeline_mode<synchronous>, transform_indices = @transform_13, window_bounds = array<i64: 512, 256>}, {pipeline_mode = #tpu.pipeline_mode<synchronous>, transform_indices = @transform_14, window_bounds = array<i64: 1, 256>}, {pipeline_mode = #tpu.pipeline_mode<synchronous>, transform_indices = @transform_15, window_bounds = array<i64: 1, 256>}, {pipeline_mode = #tpu.pipeline_mode<synchronous>, transform_indices = @transform_16, window_bounds = array<i64: 1, 256>}, {transform_indices = @transform_17, window_bounds = array<i64: 1, 128, 256>}]} {
    %c0 = arith.constant 0 : index
    %c0_0 = arith.constant 0 : index
    %c0_1 = arith.constant 0 : index
    %0 = vector.load %arg1[%c0, %c0_0, %c0_1] : memref<1x128x256xf32, #tpu.memory_space<vmem>>, vector<1x128x256xf32>
    %1 = vector.shape_cast %0 : vector<1x128x256xf32> to vector<128x256xf32>
    %2 = arith.truncf %1 : vector<128x256xf32> to vector<128x256xbf16>
    %c0_2 = arith.constant 0 : index
    %c0_3 = arith.constant 0 : index
    %3 = vector.load %arg2[%c0_2, %c0_3] : memref<256x256xbf16, #tpu.memory_space<vmem>>, vector<256x256xbf16>
    %cst = arith.constant dense<0.000000e+00> : vector<128x256xf32>
    %4 = tpu.matmul %2, %3, %cst {dimension_numbers = #tpu.dot_dimension_numbers<[1], [0], [0], [1], [0, 0, 1, 1], [], []>} : vector<128x256xbf16>, vector<256x256xbf16>, vector<128x256xf32> -> vector<128x256xf32>
    %c0_4 = arith.constant 0 : index
    %c0_5 = arith.constant 0 : index
    %5 = vector.load %arg5[%c0_4, %c0_5] : memref<1x256xf32, #tpu.memory_space<vmem>>, vector<1x256xf32>
    %6 = vector.broadcast %5 : vector<1x256xf32> to vector<128x256xf32>
    %7 = arith.addf %4, %6 : vector<128x256xf32>
    %c0_6 = arith.constant 0 : index
    %c0_7 = arith.constant 0 : index
    %8 = vector.load %arg3[%c0_6, %c0_7] : memref<256x256xbf16, #tpu.memory_space<vmem>>, vector<256x256xbf16>
    %cst_8 = arith.constant dense<0.000000e+00> : vector<128x256xf32>
    %9 = tpu.matmul %2, %8, %cst_8 {dimension_numbers = #tpu.dot_dimension_numbers<[1], [0], [0], [1], [0, 0, 1, 1], [], []>} : vector<128x256xbf16>, vector<256x256xbf16>, vector<128x256xf32> -> vector<128x256xf32>
    %c0_9 = arith.constant 0 : index
    %c0_10 = arith.constant 0 : index
    %10 = vector.load %arg6[%c0_9, %c0_10] : memref<1x256xf32, #tpu.memory_space<vmem>>, vector<1x256xf32>
    %11 = vector.broadcast %10 : vector<1x256xf32> to vector<128x256xf32>
    %12 = arith.addf %9, %11 : vector<128x256xf32>
    %c0_11 = arith.constant 0 : index
    %c0_12 = arith.constant 0 : index
    %13 = vector.load %arg4[%c0_11, %c0_12] : memref<256x256xbf16, #tpu.memory_space<vmem>>, vector<256x256xbf16>
    %cst_13 = arith.constant dense<0.000000e+00> : vector<128x256xf32>
    %14 = tpu.matmul %2, %13, %cst_13 {dimension_numbers = #tpu.dot_dimension_numbers<[1], [0], [0], [1], [0, 0, 1, 1], [], []>} : vector<128x256xbf16>, vector<256x256xbf16>, vector<128x256xf32> -> vector<128x256xf32>
    %c0_14 = arith.constant 0 : index
    %c0_15 = arith.constant 0 : index
    %15 = vector.load %arg7[%c0_14, %c0_15] : memref<1x256xf32, #tpu.memory_space<vmem>>, vector<1x256xf32>
    %16 = vector.broadcast %15 : vector<1x256xf32> to vector<128x256xf32>
    %17 = arith.addf %14, %16 : vector<128x256xf32>
    %18 = arith.truncf %7 : vector<128x256xf32> to vector<128x256xbf16>
    %19 = vector.extract_strided_slice %18 {offsets = [0, 0], sizes = [128, 128], strides = [1, 1]} : vector<128x256xbf16> to vector<128x128xbf16>
    %20 = vector.extract_strided_slice %18 {offsets = [0, 128], sizes = [128, 128], strides = [1, 1]} : vector<128x256xbf16> to vector<128x128xbf16>
    %21 = vector.shape_cast %19 : vector<128x128xbf16> to vector<1x128x128xbf16>
    %22 = vector.shape_cast %20 : vector<128x128xbf16> to vector<1x128x128xbf16>
    %23 = tpu.concatenate %21, %22 in 0 : vector<1x128x128xbf16>, vector<1x128x128xbf16> -> vector<2x128x128xbf16>
    %24 = arith.truncf %12 : vector<128x256xf32> to vector<128x256xbf16>
    %25 = vector.extract_strided_slice %24 {offsets = [0, 0], sizes = [128, 128], strides = [1, 1]} : vector<128x256xbf16> to vector<128x128xbf16>
    %26 = vector.extract_strided_slice %24 {offsets = [0, 128], sizes = [128, 128], strides = [1, 1]} : vector<128x256xbf16> to vector<128x128xbf16>
    %27 = vector.shape_cast %25 : vector<128x128xbf16> to vector<1x128x128xbf16>
    %28 = vector.shape_cast %26 : vector<128x128xbf16> to vector<1x128x128xbf16>
    %29 = tpu.concatenate %27, %28 in 0 : vector<1x128x128xbf16>, vector<1x128x128xbf16> -> vector<2x128x128xbf16>
    %30 = arith.truncf %17 : vector<128x256xf32> to vector<128x256xbf16>
    %31 = vector.extract_strided_slice %30 {offsets = [0, 0], sizes = [128, 128], strides = [1, 1]} : vector<128x256xbf16> to vector<128x128xbf16>
    %32 = vector.extract_strided_slice %30 {offsets = [0, 128], sizes = [128, 128], strides = [1, 1]} : vector<128x256xbf16> to vector<128x128xbf16>
    %33 = vector.shape_cast %31 : vector<128x128xbf16> to vector<1x128x128xbf16>
    %34 = vector.shape_cast %32 : vector<128x128xbf16> to vector<1x128x128xbf16>
    %35 = tpu.concatenate %33, %34 in 0 : vector<1x128x128xbf16>, vector<1x128x128xbf16> -> vector<2x128x128xbf16>
    "tpu.trace_start"() <{level = 10 : i32, message = "hqd,hkd->hqk"}> : () -> ()
    %cst_16 = arith.constant dense<0.000000e+00> : vector<2x128x128xf32>
    %36 = tpu.matmul %23, %29, %cst_16 {dimension_numbers = #tpu.dot_dimension_numbers<[2], [2], [1], [1], [0, 0, 0, 1, 1, 1], [0], [0]>} : vector<2x128x128xbf16>, vector<2x128x128xbf16>, vector<2x128x128xf32> -> vector<2x128x128xf32>
    "tpu.trace_stop"() : () -> ()
    %cst_17 = arith.constant 0.0883883461 : f32
    %37 = vector.broadcast %cst_17 : f32 to vector<2x128x128xf32>
    %38 = arith.mulf %36, %37 : vector<2x128x128xf32>
    %39 = tpu.iota {dimensions = array<i32: 0>} : vector<128x128xi32>
    %40 = tpu.iota {dimensions = array<i32: 1>} : vector<128x128xi32>
    %41 = arith.cmpi sle, %40, %39 : vector<128x128xi32>
    %42 = vector.shape_cast %41 : vector<128x128xi1> to vector<1x128x128xi1>
    %cst_18 = arith.constant -1.000000e+30 : f32
    %43 = vector.shape_cast %42 : vector<1x128x128xi1> to vector<1x128x128xi1>
    %44 = vector.broadcast %43 : vector<1x128x128xi1> to vector<2x128x128xi1>
    %45 = vector.broadcast %cst_18 : f32 to vector<2x128x128xf32>
    %46 = arith.select %44, %38, %45 : vector<2x128x128xi1>, vector<2x128x128xf32>
    %cst_19 = arith.constant dense<0xFF800000> : vector<2x128xf32>
    %47 = vector.multi_reduction <maximumf>, %46, %cst_19 [2] : vector<2x128x128xf32> to vector<2x128xf32>
    %48 = vector.shape_cast %47 : vector<2x128xf32> to vector<2x128x1xf32>
    %49 = vector.broadcast %48 : vector<2x128x1xf32> to vector<2x128x128xf32>
    %50 = arith.subf %46, %49 : vector<2x128x128xf32>
    %51 = math.exp %50 : vector<2x128x128xf32>
    %cst_20 = arith.constant dense<0.000000e+00> : vector<2x128xf32>
    %52 = vector.multi_reduction <add>, %51, %cst_20 [2] : vector<2x128x128xf32> to vector<2x128xf32>
    %53 = vector.shape_cast %52 : vector<2x128xf32> to vector<2x128x1xf32>
    %54 = tpu.reciprocal %53 {approx = true} : vector<2x128x1xf32> -> vector<2x128x1xf32>
    %55 = vector.broadcast %54 : vector<2x128x1xf32> to vector<2x128x128xf32>
    %56 = arith.mulf %51, %55 : vector<2x128x128xf32>
    %57 = arith.truncf %56 : vector<2x128x128xf32> to vector<2x128x128xbf16>
    "tpu.trace_start"() <{level = 10 : i32, message = "hqk,hkd->hqd"}> : () -> ()
    %cst_21 = arith.constant dense<0.000000e+00> : vector<2x128x128xf32>
    %58 = tpu.matmul %57, %35, %cst_21 {dimension_numbers = #tpu.dot_dimension_numbers<[2], [1], [1], [2], [0, 0, 0, 1, 1, 2], [0], [0]>} : vector<2x128x128xbf16>, vector<2x128x128xbf16>, vector<2x128x128xf32> -> vector<2x128x128xf32>
    "tpu.trace_stop"() : () -> ()
    %59 = vector.extract_strided_slice %58 {offsets = [0, 0, 0], sizes = [1, 128, 128], strides = [1, 1, 1]} : vector<2x128x128xf32> to vector<1x128x128xf32>
    %60 = vector.shape_cast %59 : vector<1x128x128xf32> to vector<128x128xf32>
    %61 = vector.extract_strided_slice %58 {offsets = [1, 0, 0], sizes = [1, 128, 128], strides = [1, 1, 1]} : vector<2x128x128xf32> to vector<1x128x128xf32>
    %62 = vector.shape_cast %61 : vector<1x128x128xf32> to vector<128x128xf32>
    %63 = tpu.concatenate %60, %62 in 1 : vector<128x128xf32>, vector<128x128xf32> -> vector<128x256xf32>
    %64 = arith.truncf %63 : vector<128x256xf32> to vector<128x256xbf16>
    %c0_22 = arith.constant 0 : index
    %c0_23 = arith.constant 0 : index
    %65 = vector.load %arg8[%c0_22, %c0_23] : memref<256x256xbf16, #tpu.memory_space<vmem>>, vector<256x256xbf16>
    %cst_24 = arith.constant dense<0.000000e+00> : vector<128x256xf32>
    %66 = tpu.matmul %64, %65, %cst_24 {dimension_numbers = #tpu.dot_dimension_numbers<[1], [0], [0], [1], [0, 0, 1, 1], [], []>} : vector<128x256xbf16>, vector<256x256xbf16>, vector<128x256xf32> -> vector<128x256xf32>
    %c0_25 = arith.constant 0 : index
    %c0_26 = arith.constant 0 : index
    %67 = vector.load %arg9[%c0_25, %c0_26] : memref<1x256xf32, #tpu.memory_space<vmem>>, vector<1x256xf32>
    %68 = vector.broadcast %67 : vector<1x256xf32> to vector<128x256xf32>
    %69 = arith.addf %66, %68 : vector<128x256xf32>
    %70 = arith.addf %1, %69 : vector<128x256xf32>
    %c0_27 = arith.constant 0 : index
    %c0_28 = arith.constant 0 : index
    %71 = vector.load %arg10[%c0_27, %c0_28] : memref<1x256xf32, #tpu.memory_space<vmem>>, vector<1x256xf32>
    %c0_29 = arith.constant 0 : index
    %c0_30 = arith.constant 0 : index
    %72 = vector.load %arg11[%c0_29, %c0_30] : memref<1x256xf32, #tpu.memory_space<vmem>>, vector<1x256xf32>
    %cst_31 = arith.constant dense<0.000000e+00> : vector<128xf32>
    %73 = vector.multi_reduction <add>, %70, %cst_31 [1] : vector<128x256xf32> to vector<128xf32>
    %74 = vector.shape_cast %73 : vector<128xf32> to vector<128x1xf32>
    %cst_32 = arith.constant 2.560000e+02 : f32
    %75 = vector.broadcast %cst_32 : f32 to vector<128x1xf32>
    %76 = arith.divf %74, %75 : vector<128x1xf32>
    %77 = vector.broadcast %76 : vector<128x1xf32> to vector<128x256xf32>
    %78 = arith.subf %70, %77 : vector<128x256xf32>
    %79 = arith.mulf %78, %78 : vector<128x256xf32>
    %cst_33 = arith.constant dense<0.000000e+00> : vector<128xf32>
    %80 = vector.multi_reduction <add>, %79, %cst_33 [1] : vector<128x256xf32> to vector<128xf32>
    %81 = vector.shape_cast %80 : vector<128xf32> to vector<128x1xf32>
    %cst_34 = arith.constant 2.560000e+02 : f32
    %82 = vector.broadcast %cst_34 : f32 to vector<128x1xf32>
    %83 = arith.divf %81, %82 : vector<128x1xf32>
    %84 = vector.broadcast %76 : vector<128x1xf32> to vector<128x256xf32>
    %85 = arith.subf %70, %84 : vector<128x256xf32>
    %cst_35 = arith.constant 9.99999974E-6 : f32
    %86 = vector.broadcast %cst_35 : f32 to vector<128x1xf32>
    %87 = arith.addf %83, %86 : vector<128x1xf32>
    %88 = math.rsqrt %87 : vector<128x1xf32>
    %89 = vector.broadcast %88 : vector<128x1xf32> to vector<128x256xf32>
    %90 = arith.mulf %85, %89 : vector<128x256xf32>
    %91 = vector.broadcast %71 : vector<1x256xf32> to vector<128x256xf32>
    %92 = arith.mulf %90, %91 : vector<128x256xf32>
    %93 = vector.broadcast %72 : vector<1x256xf32> to vector<128x256xf32>
    %94 = arith.addf %92, %93 : vector<128x256xf32>
    %95 = arith.truncf %94 : vector<128x256xf32> to vector<128x256xbf16>
    %c0_36 = arith.constant 0 : index
    %c0_37 = arith.constant 0 : index
    %96 = vector.load %arg12[%c0_36, %c0_37] : memref<256x512xbf16, #tpu.memory_space<vmem>>, vector<256x512xbf16>
    %cst_38 = arith.constant dense<0.000000e+00> : vector<128x512xf32>
    %97 = tpu.matmul %95, %96, %cst_38 {dimension_numbers = #tpu.dot_dimension_numbers<[1], [0], [0], [1], [0, 0, 1, 1], [], []>} : vector<128x256xbf16>, vector<256x512xbf16>, vector<128x512xf32> -> vector<128x512xf32>
    %c0_39 = arith.constant 0 : index
    %c0_40 = arith.constant 0 : index
    %98 = vector.load %arg13[%c0_39, %c0_40] : memref<1x512xf32, #tpu.memory_space<vmem>>, vector<1x512xf32>
    %99 = vector.broadcast %98 : vector<1x512xf32> to vector<128x512xf32>
    %100 = arith.addf %97, %99 : vector<128x512xf32>
    %cst_41 = arith.constant 0.000000e+00 : f32
    %101 = vector.broadcast %cst_41 : f32 to vector<128x512xf32>
    %102 = arith.maximumf %100, %101 : vector<128x512xf32>
    %103 = arith.truncf %102 : vector<128x512xf32> to vector<128x512xbf16>
    %c0_42 = arith.constant 0 : index
    %c0_43 = arith.constant 0 : index
    %104 = vector.load %arg14[%c0_42, %c0_43] : memref<512x256xbf16, #tpu.memory_space<vmem>>, vector<512x256xbf16>
    %cst_44 = arith.constant dense<0.000000e+00> : vector<128x256xf32>
    %105 = tpu.matmul %103, %104, %cst_44 {dimension_numbers = #tpu.dot_dimension_numbers<[1], [0], [0], [1], [0, 0, 1, 1], [], []>} : vector<128x512xbf16>, vector<512x256xbf16>, vector<128x256xf32> -> vector<128x256xf32>
    %c0_45 = arith.constant 0 : index
    %c0_46 = arith.constant 0 : index
    %106 = vector.load %arg15[%c0_45, %c0_46] : memref<1x256xf32, #tpu.memory_space<vmem>>, vector<1x256xf32>
    %107 = vector.broadcast %106 : vector<1x256xf32> to vector<128x256xf32>
    %108 = arith.addf %105, %107 : vector<128x256xf32>
    %109 = arith.addf %94, %108 : vector<128x256xf32>
    %c0_47 = arith.constant 0 : index
    %c0_48 = arith.constant 0 : index
    %110 = vector.load %arg16[%c0_47, %c0_48] : memref<1x256xf32, #tpu.memory_space<vmem>>, vector<1x256xf32>
    %c0_49 = arith.constant 0 : index
    %c0_50 = arith.constant 0 : index
    %111 = vector.load %arg17[%c0_49, %c0_50] : memref<1x256xf32, #tpu.memory_space<vmem>>, vector<1x256xf32>
    %cst_51 = arith.constant dense<0.000000e+00> : vector<128xf32>
    %112 = vector.multi_reduction <add>, %109, %cst_51 [1] : vector<128x256xf32> to vector<128xf32>
    %113 = vector.shape_cast %112 : vector<128xf32> to vector<128x1xf32>
    %cst_52 = arith.constant 2.560000e+02 : f32
    %114 = vector.broadcast %cst_52 : f32 to vector<128x1xf32>
    %115 = arith.divf %113, %114 : vector<128x1xf32>
    %116 = vector.broadcast %115 : vector<128x1xf32> to vector<128x256xf32>
    %117 = arith.subf %109, %116 : vector<128x256xf32>
    %118 = arith.mulf %117, %117 : vector<128x256xf32>
    %cst_53 = arith.constant dense<0.000000e+00> : vector<128xf32>
    %119 = vector.multi_reduction <add>, %118, %cst_53 [1] : vector<128x256xf32> to vector<128xf32>
    %120 = vector.shape_cast %119 : vector<128xf32> to vector<128x1xf32>
    %cst_54 = arith.constant 2.560000e+02 : f32
    %121 = vector.broadcast %cst_54 : f32 to vector<128x1xf32>
    %122 = arith.divf %120, %121 : vector<128x1xf32>
    %123 = vector.broadcast %115 : vector<128x1xf32> to vector<128x256xf32>
    %124 = arith.subf %109, %123 : vector<128x256xf32>
    %cst_55 = arith.constant 9.99999974E-6 : f32
    %125 = vector.broadcast %cst_55 : f32 to vector<128x1xf32>
    %126 = arith.addf %122, %125 : vector<128x1xf32>
    %127 = math.rsqrt %126 : vector<128x1xf32>
    %128 = vector.broadcast %127 : vector<128x1xf32> to vector<128x256xf32>
    %129 = arith.mulf %124, %128 : vector<128x256xf32>
    %130 = vector.broadcast %110 : vector<1x256xf32> to vector<128x256xf32>
    %131 = arith.mulf %129, %130 : vector<128x256xf32>
    %132 = vector.broadcast %111 : vector<1x256xf32> to vector<128x256xf32>
    %133 = arith.addf %131, %132 : vector<128x256xf32>
    %c0_56 = arith.constant 0 : index
    %c0_57 = arith.constant 0 : index
    %c0_58 = arith.constant 0 : index
    %134 = vector.load %arg18[%c0_56, %c0_57, %c0_58] : memref<1x128x256xf32, #tpu.memory_space<vmem>>, vector<1x128x256xf32>
    %135 = vector.shape_cast %134 : vector<1x128x256xf32> to vector<128x256xf32>
    %136 = vector.shape_cast %133 : vector<128x256xf32> to vector<1x128x256xf32>
    tpu.vector_store %arg18[%c0_56, %c0_57, %c0_58], %136 {strides = array<i32>} : memref<1x128x256xf32, #tpu.memory_space<vmem>>, vector<1x128x256xf32>,
    return
  }
  func.func @transform_0(%arg0: i32) -> (i32, i32, i32) {
    %c0_i32 = arith.constant 0 : i32
    %c0_i32_0 = arith.constant 0 : i32
    %c0_i32_1 = arith.constant 0 : i32
    return %arg0, %c0_i32, %c0_i32_0 : i32, i32, i32
  }
  func.func @transform_1(%arg0: i32) -> (i32, i32) {
    %c0_i32 = arith.constant 0 : i32
    %c0_i32_0 = arith.constant 0 : i32
    %c0_i32_1 = arith.constant 0 : i32
    return %c0_i32, %c0_i32_0 : i32, i32
  }
  func.func @transform_2(%arg0: i32) -> (i32, i32) {
    %c0_i32 = arith.constant 0 : i32
    %c0_i32_0 = arith.constant 0 : i32
    %c0_i32_1 = arith.constant 0 : i32
    return %c0_i32, %c0_i32_0 : i32, i32
  }
  func.func @transform_3(%arg0: i32) -> (i32, i32) {
    %c0_i32 = arith.constant 0 : i32
    %c0_i32_0 = arith.constant 0 : i32
    %c0_i32_1 = arith.constant 0 : i32
    return %c0_i32, %c0_i32_0 : i32, i32
  }
  func.func @transform_4(%arg0: i32) -> (i32, i32) {
    %c0_i32 = arith.constant 0 : i32
    %c0_i32_0 = arith.constant 0 : i32
    %c0_i32_1 = arith.constant 0 : i32
    return %c0_i32, %c0_i32_0 : i32, i32
  }
  func.func @transform_5(%arg0: i32) -> (i32, i32) {
    %c0_i32 = arith.constant 0 : i32
    %c0_i32_0 = arith.constant 0 : i32
    %c0_i32_1 = arith.constant 0 : i32
    return %c0_i32, %c0_i32_0 : i32, i32
  }
  func.func @transform_6(%arg0: i32) -> (i32, i32) {
    %c0_i32 = arith.constant 0 : i32
    %c0_i32_0 = arith.constant 0 : i32
    %c0_i32_1 = arith.constant 0 : i32
    return %c0_i32, %c0_i32_0 : i32, i32
  }
  func.func @transform_7(%arg0: i32) -> (i32, i32) {
    %c0_i32 = arith.constant 0 : i32
    %c0_i32_0 = arith.constant 0 : i32
    %c0_i32_1 = arith.constant 0 : i32
    return %c0_i32, %c0_i32_0 : i32, i32
  }
  func.func @transform_8(%arg0: i32) -> (i32, i32) {
    %c0_i32 = arith.constant 0 : i32
    %c0_i32_0 = arith.constant 0 : i32
    %c0_i32_1 = arith.constant 0 : i32
    return %c0_i32, %c0_i32_0 : i32, i32
  }
  func.func @transform_9(%arg0: i32) -> (i32, i32) {
    %c0_i32 = arith.constant 0 : i32
    %c0_i32_0 = arith.constant 0 : i32
    %c0_i32_1 = arith.constant 0 : i32
    return %c0_i32, %c0_i32_0 : i32, i32
  }
  func.func @transform_10(%arg0: i32) -> (i32, i32) {
    %c0_i32 = arith.constant 0 : i32
    %c0_i32_0 = arith.constant 0 : i32
    %c0_i32_1 = arith.constant 0 : i32
    return %c0_i32, %c0_i32_0 : i32, i32
  }
  func.func @transform_11(%arg0: i32) -> (i32, i32) {
    %c0_i32 = arith.constant 0 : i32
    %c0_i32_0 = arith.constant 0 : i32
    %c0_i32_1 = arith.constant 0 : i32
    return %c0_i32, %c0_i32_0 : i32, i32
  }
  func.func @transform_12(%arg0: i32) -> (i32, i32) {
    %c0_i32 = arith.constant 0 : i32
    %c0_i32_0 = arith.constant 0 : i32
    %c0_i32_1 = arith.constant 0 : i32
    return %c0_i32, %c0_i32_0 : i32, i32
  }
  func.func @transform_13(%arg0: i32) -> (i32, i32) {
    %c0_i32 = arith.constant 0 : i32
    %c0_i32_0 = arith.constant 0 : i32
    %c0_i32_1 = arith.constant 0 : i32
    return %c0_i32, %c0_i32_0 : i32, i32
  }
  func.func @transform_14(%arg0: i32) -> (i32, i32) {
    %c0_i32 = arith.constant 0 : i32
    %c0_i32_0 = arith.constant 0 : i32
    %c0_i32_1 = arith.constant 0 : i32
    return %c0_i32, %c0_i32_0 : i32, i32
  }
  func.func @transform_15(%arg0: i32) -> (i32, i32) {
    %c0_i32 = arith.constant 0 : i32
    %c0_i32_0 = arith.constant 0 : i32
    %c0_i32_1 = arith.constant 0 : i32
    return %c0_i32, %c0_i32_0 : i32, i32
  }
  func.func @transform_16(%arg0: i32) -> (i32, i32) {
    %c0_i32 = arith.constant 0 : i32
    %c0_i32_0 = arith.constant 0 : i32
    %c0_i32_1 = arith.constant 0 : i32
    return %c0_i32, %c0_i32_0 : i32, i32
  }
  func.func @transform_17(%arg0: i32) -> (i32, i32, i32) {
    %c0_i32 = arith.constant 0 : i32
    %c0_i32_0 = arith.constant 0 : i32
    %c0_i32_1 = arith.constant 0 : i32
    return %arg0, %c0_i32, %c0_i32_0 : i32, i32, i32
  }
}

module attributes {stable_mosaic.version = 11 : i64} {
  func.func @_decoder_kernel(%arg0: i32, %arg1: memref<1x128x256xf32, #tpu.memory_space<vmem>>, %arg2: memref<256x128xbf16, #tpu.memory_space<vmem>>, %arg3: memref<1x128xf32, #tpu.memory_space<vmem>>, %arg4: memref<1x128x128xf32, #tpu.memory_space<vmem>>) attributes {dimension_semantics = [#tpu.dimension_semantics<parallel>], iteration_bounds = array<i64: 2>, scalar_prefetch = 0 : i64, scratch_operands = 0 : i64, tpu.core_type = #tpu.core_type<tc>, window_params = [{transform_indices = @transform_0, window_bounds = array<i64: 1, 128, 256>}, {pipeline_mode = #tpu.pipeline_mode<synchronous>, transform_indices = @transform_1, window_bounds = array<i64: 256, 128>}, {pipeline_mode = #tpu.pipeline_mode<synchronous>, transform_indices = @transform_2, window_bounds = array<i64: 1, 128>}, {transform_indices = @transform_3, window_bounds = array<i64: 1, 128, 128>}]} {
    %c0 = arith.constant 0 : index
    %c0_0 = arith.constant 0 : index
    %c0_1 = arith.constant 0 : index
    %0 = vector.load %arg1[%c0, %c0_0, %c0_1] : memref<1x128x256xf32, #tpu.memory_space<vmem>>, vector<1x128x256xf32>
    %1 = vector.shape_cast %0 : vector<1x128x256xf32> to vector<128x256xf32>
    %2 = arith.truncf %1 : vector<128x256xf32> to vector<128x256xbf16>
    %c0_2 = arith.constant 0 : index
    %c0_3 = arith.constant 0 : index
    %3 = vector.load %arg2[%c0_2, %c0_3] : memref<256x128xbf16, #tpu.memory_space<vmem>>, vector<256x128xbf16>
    %cst = arith.constant dense<0.000000e+00> : vector<128x128xf32>
    %4 = tpu.matmul %2, %3, %cst {dimension_numbers = #tpu.dot_dimension_numbers<[1], [0], [0], [1], [0, 0, 1, 1], [], []>} : vector<128x256xbf16>, vector<256x128xbf16>, vector<128x128xf32> -> vector<128x128xf32>
    %c0_4 = arith.constant 0 : index
    %c0_5 = arith.constant 0 : index
    %5 = vector.load %arg3[%c0_4, %c0_5] : memref<1x128xf32, #tpu.memory_space<vmem>>, vector<1x128xf32>
    %6 = vector.broadcast %5 : vector<1x128xf32> to vector<128x128xf32>
    %7 = arith.addf %4, %6 : vector<128x128xf32>
    %c0_6 = arith.constant 0 : index
    %c0_7 = arith.constant 0 : index
    %c0_8 = arith.constant 0 : index
    %8 = vector.load %arg4[%c0_6, %c0_7, %c0_8] : memref<1x128x128xf32, #tpu.memory_space<vmem>>, vector<1x128x128xf32>
    %9 = vector.shape_cast %8 : vector<1x128x128xf32> to vector<128x128xf32>
    %10 = vector.shape_cast %7 : vector<128x128xf32> to vector<1x128x128xf32>
    tpu.vector_store %arg4[%c0_6, %c0_7, %c0_8], %10 {strides = array<i32>} : memref<1x128x128xf32, #tpu.memory_space<vmem>>, vector<1x128x128xf32>,
    return
  }
  func.func @transform_0(%arg0: i32) -> (i32, i32, i32) {
    %c0_i32 = arith.constant 0 : i32
    %c0_i32_0 = arith.constant 0 : i32
    %c0_i32_1 = arith.constant 0 : i32
    return %arg0, %c0_i32, %c0_i32_0 : i32, i32, i32
  }
  func.func @transform_1(%arg0: i32) -> (i32, i32) {
    %c0_i32 = arith.constant 0 : i32
    %c0_i32_0 = arith.constant 0 : i32
    %c0_i32_1 = arith.constant 0 : i32
    return %c0_i32, %c0_i32_0 : i32, i32
  }
  func.func @transform_2(%arg0: i32) -> (i32, i32) {
    %c0_i32 = arith.constant 0 : i32
    %c0_i32_0 = arith.constant 0 : i32
    %c0_i32_1 = arith.constant 0 : i32
    return %c0_i32, %c0_i32_0 : i32, i32
  }
  func.func @transform_3(%arg0: i32) -> (i32, i32, i32) {
    %c0_i32 = arith.constant 0 : i32
    %c0_i32_0 = arith.constant 0 : i32
    %c0_i32_1 = arith.constant 0 : i32
    return %arg0, %c0_i32, %c0_i32_0 : i32, i32, i32
  }
}

</mosaic_0001>

<llo_original>
// kernel: transformer_forward.5
$region0: #{transformer_forward.5}
  #allocation0 [shape = 'u32[]', space=smem, size = 0x4, offset = 0x4, fixed_abs, tag = 'smem constant byte address 0x4 - core index']
  #allocation1 [shape = 'u32[72,128]{1,0:T(1,128)}', space=vmem, size = 0x9000, scoped, tag = 'internal scratch']
  %s0 = inlined_call_operand.vmem [shape: f32[2,128,256], index: 0, kind: input, shape index: {}]
  %s1 = inlined_call_operand.vmem [shape: bf16[256,128], index: 1, kind: input, shape index: {}]
  %s2 = inlined_call_operand.vmem [shape: f32[1,128], index: 2, kind: input, shape index: {}]
  %s3 = inlined_call_operand.vmem [shape: f32[2,128,128], index: 3, kind: output, shape index: {}]
  %s4 = sld [smem:[#allocation0]]
  $region45: #{transformer_forward.5} parent=0
    _
  %s6 = ssub.s32 1, %s4
  %s7 = scalar_select 0, %s6, %s4
  loop: start=0, step=1, limit=4
  $region2: #{transformer_forward.5} parent=0 // loop_pre_header
    _
  $region3: #{transformer_forward.5} parent=0 // loop_header
    %s9 = sphi 0, %s13
    %p10 = scmp.ge.s32.totalorder %s9, 4
    %s19 = sphi 0, %s21
    %s22 = sphi 0, %s19
    %s23 = sphi 0, %s22
    %s39 = sphi 0, %s23
    %s43 = sphi 0, %s43
    %s45 = sphi 0, %s43
    %s46 = sphi 0, %s45
    %s60 = sphi 0, %s46
    %s64 = sphi 0, %s64
    %s66 = sphi 0, %s64
    %s67 = sphi 0, %s66
    %s81 = sphi 0, %s67
    %s87 = sphi 0, %s89
    %s90 = sphi 0, %s87
    %s91 = sphi 0, %s90
    %s107 = sphi 0, %s91
  $region4: #{transformer_forward.5} parent=0 // loop_header_branch
    %12 = sbr.rel (%p10) target = $region8
  $region5: #{transformer_forward.5} parent=0 // loop_body
    %s14 = ssub.s32 %s9, 1
    %s15 = ssub.s32 %s9, 2
    %s16 = sadd.s32 %s9, 1
    %s17 = ssub.s32 %s9, %s16
    %p18 = scmp.eq.s32.totalorder %s17, 0
    %s20 = sadd.s32 %s19, 1
    %s21 = scalar_select %p18, %s19, %s20
    %p24 = pneg %p18
    %p25 = scmp.eq.s32.totalorder %s9, 1
    %p26 = por %p24, %p25
    %p27 = scmp.ne.s32.totalorder %s19, %s22
    %p28 = scmp.eq.s32.totalorder %s9, 0
    %p29 = por %p27, %p28
    %p30 = scmp.ne.s32.totalorder %s19, %s22
    %p31 = scmp.eq.s32.totalorder %s14, 1
    %p32 = por %p30, %p31
    %p33 = scmp.ne.s32.totalorder %s22, %s23
    %p34 = scmp.eq.s32.totalorder %s14, 0
    %p35 = por %p33, %p34
    %p36 = scmp.ne.s32.totalorder %s22, %s23
    %p37 = scmp.eq.s32.totalorder %s15, 1
    %p38 = por %p36, %p37
    %p40 = scmp.ne.s32.totalorder %s23, %s39
    %p41 = scmp.eq.s32.totalorder %s15, 0
    %p42 = por %p40, %p41
    %s44 = sadd.s32 %s43, 1
    %p47 = scmp.eq.s32.totalorder %s9, 1
    %p48 = scmp.ne.s32.totalorder %s43, %s45
    %p49 = scmp.eq.s32.totalorder %s9, 0
    %p50 = por %p48, %p49
    %p51 = scmp.ne.s32.totalorder %s43, %s45
    %p52 = scmp.eq.s32.totalorder %s14, 1
    %p53 = por %p51, %p52
    %p54 = scmp.ne.s32.totalorder %s45, %s46
    %p55 = scmp.eq.s32.totalorder %s14, 0
    %p56 = por %p54, %p55
    %p57 = scmp.ne.s32.totalorder %s45, %s46
    %p58 = scmp.eq.s32.totalorder %s15, 1
    %p59 = por %p57, %p58
    %p61 = scmp.ne.s32.totalorder %s46, %s60
    %p62 = scmp.eq.s32.totalorder %s15, 0
    %p63 = por %p61, %p62
    %s65 = sadd.s32 %s64, 1
    %p68 = scmp.eq.s32.totalorder %s9, 1
    %p69 = scmp.ne.s32.totalorder %s64, %s66
    %p70 = scmp.eq.s32.totalorder %s9, 0
    %p71 = por %p69, %p70
    %p72 = scmp.ne.s32.totalorder %s64, %s66
    %p73 = scmp.eq.s32.totalorder %s14, 1
    %p74 = por %p72, %p73
    %p75 = scmp.ne.s32.totalorder %s66, %s67
    %p76 = scmp.eq.s32.totalorder %s14, 0
    %p77 = por %p75, %p76
    %p78 = scmp.ne.s32.totalorder %s66, %s67
    %p79 = scmp.eq.s32.totalorder %s15, 1
    %p80 = por %p78, %p79
    %p82 = scmp.ne.s32.totalorder %s67, %s81
    %p83 = scmp.eq.s32.totalorder %s15, 0
    %p84 = por %p82, %p83
    %s85 = ssub.s32 %s9, %s16
    %p86 = scmp.eq.s32.totalorder %s85, 0
    %s88 = sadd.s32 %s87, 1
    %s89 = scalar_select %p86, %s87, %s88
    %p92 = pneg %p86
    %p93 = scmp.eq.s32.totalorder %s9, 1
    %p94 = por %p92, %p93
    %p95 = scmp.ne.s32.totalorder %s87, %s90
    %p96 = scmp.eq.s32.totalorder %s9, 0
    %p97 = por %p95, %p96
    %p98 = scmp.ne.s32.totalorder %s87, %s90
    %p99 = scmp.eq.s32.totalorder %s14, 1
    %p100 = por %p98, %p99
    %p101 = scmp.ne.s32.totalorder %s90, %s91
    %p102 = scmp.eq.s32.totalorder %s14, 0
    %p103 = por %p101, %p102
    %p104 = scmp.ne.s32.totalorder %s90, %s91
    %p105 = scmp.eq.s32.totalorder %s15, 1
    %p106 = por %p104, %p105
    %p108 = scmp.ne.s32.totalorder %s91, %s107
    %p109 = scmp.eq.s32.totalorder %s15, 0
    %p110 = por %p108, %p109
    %p111 = scmp.le.s32.totalorder 1, %s9
    %p112 = scmp.lt.s32.totalorder %s9, 3
    %p113 = pnand %p111, %p112
    %p114 = pneg %p113
    // Predicated region
    $region9: #{transformer_forward.5} parent=5 // pred_check
      _
    $region10: #{transformer_forward.5} parent=5 // pred_check_branch
      %116 = sbr.rel (%p113) target = $region12
    $region11: #{transformer_forward.5} parent=5 // pred_region
      %s117 = ssub.s32 %s9, 1
      // Predicated region
      $region13: #{transformer_forward.5} parent=11 // pred_check
        %p118 = pneg %p56
      $region14: #{transformer_forward.5} parent=11 // pred_check_branch
        %120 = sbr.rel (%p118) target = $region16
      $region15: #{transformer_forward.5} parent=11 // pred_region
        _
      $region16: #{transformer_forward.5} parent=11 // pred_fallthru
        _
      // Predicated region
      $region17: #{transformer_forward.5} parent=11 // pred_check
        %p121 = pneg %p77
      $region18: #{transformer_forward.5} parent=11 // pred_check_branch
        %123 = sbr.rel (%p121) target = $region20
      $region19: #{transformer_forward.5} parent=11 // pred_region
        _
      $region20: #{transformer_forward.5} parent=11 // pred_fallthru
        _
    $region12: #{transformer_forward.5} parent=5 // pred_fallthru
      _
    %p124 = scmp.lt.s32.totalorder %s9, 2
    // Predicated region
    $region21: #{transformer_forward.5} parent=5 // pred_check
      %p125 = pneg %p124
    $region22: #{transformer_forward.5} parent=5 // pred_check_branch
      %127 = sbr.rel (%p125) target = $region24
    $region23: #{transformer_forward.5} parent=5 // pred_region
      // Predicated region
      $region25: #{transformer_forward.5} parent=23 // pred_check
        %p128 = pneg %p29
      $region26: #{transformer_forward.5} parent=23 // pred_check_branch
        %130 = sbr.rel (%p128) target = $region28
      $region27: #{transformer_forward.5} parent=23 // pred_region
        %p131 = scmp.lt.s32.totalorder %s9, 1
        %s132 = scalar_select %p131, %s9, 1
        %s133 = smul.addr %s132, 32
        %s134 = smul.addr %s133, 8
        %s135 = scalar_lea.vmem %s0, %s134
      $region28: #{transformer_forward.5} parent=23 // pred_fallthru
        _
    $region24: #{transformer_forward.5} parent=5 // pred_fallthru
      _
    %p136 = scmp.le.s32.totalorder 1, %s9
    %p137 = scmp.lt.s32.totalorder %s9, 3
    %p138 = pnand %p136, %p137
    %p139 = pneg %p138
    // Predicated region
    $region29: #{transformer_forward.5} parent=5 // pred_check
      _
    $region30: #{transformer_forward.5} parent=5 // pred_check_branch
      %141 = sbr.rel (%p138) target = $region32
    $region31: #{transformer_forward.5} parent=5 // pred_region
      %s142 = ssub.s32 %s9, 1
      %p143 = scmp.lt.s32.totalorder %s14, 1
      %s144 = scalar_select %p143, %s14, 1
      %s145 = smul.addr %s144, 32
      %s146 = smul.addr %s145, 8
      %s147 = scalar_lea.vmem %s0, %s146
      %p148 = pneg %p35
      %p149 = pneg %p32
      %p150 = pneg %p56
      %p151 = pneg %p53
      %p152 = pneg %p77
      %p153 = pneg %p74
      %p154 = pneg %p103
      %p155 = pneg %p100
      %p156 = scmp.lt.s32.totalorder %s14, 1
      %s157 = scalar_select %p156, %s14, 1
      %s158 = smul.addr %s157, 16
      %s159 = smul.addr %s158, 8
      %s160 = scalar_lea.vmem %s3, %s159
      %p161 = scmp.lt.s32.totalorder %s14, 1
      %s162 = scalar_select %p161, %s14, 1
      %s163 = smul.addr %s162, 32
      %s164 = smul.addr %s163, 8
      %s165 = scalar_lea.vmem %s0, %s164
      %p166 = scmp.lt.s32.totalorder %s14, 1
      %s167 = scalar_select %p166, %s14, 1
      %s168 = smul.addr %s167, 16
      %s169 = smul.addr %s168, 8
      %s170 = scalar_lea.vmem %s3, %s169
      %v171 = vld [vmem:[%s165] sm:$0xff]
      %v172 = vld [vmem:[%s165 + $0x8] sm:$0xff]
      %v173 = vld [vmem:[%s165 + $0x10] sm:$0xff]
      %v174 = vld [vmem:[%s165 + $0x18] sm:$0xff]
      %v175 = vld [vmem:[%s165 + $0x20] sm:$0xff]
      %v176 = vld [vmem:[%s165 + $0x28] sm:$0xff]
      %v177 = vld [vmem:[%s165 + $0x30] sm:$0xff]
      %v178 = vld [vmem:[%s165 + $0x38] sm:$0xff]
      %v179 = vld [vmem:[%s165 + $0x40] sm:$0xff]
      %v180 = vld [vmem:[%s165 + $0x48] sm:$0xff]
      %v181 = vld [vmem:[%s165 + $0x50] sm:$0xff]
      %v182 = vld [vmem:[%s165 + $0x58] sm:$0xff]
      %v183 = vld [vmem:[%s165 + $0x60] sm:$0xff]
      %v184 = vld [vmem:[%s165 + $0x68] sm:$0xff]
      %v185 = vld [vmem:[%s165 + $0x70] sm:$0xff]
      %v186 = vld [vmem:[%s165 + $0x78] sm:$0xff]
      %v187 = vld [vmem:[%s165 + $0x80] sm:$0xff]
      %v188 = vld [vmem:[%s165 + $0x88] sm:$0xff]
      %v189 = vld [vmem:[%s165 + $0x90] sm:$0xff]
      %v190 = vld [vmem:[%s165 + $0x98] sm:$0xff]
      %v191 = vld [vmem:[%s165 + $0xa0] sm:$0xff]
      %v192 = vld [vmem:[%s165 + $0xa8] sm:$0xff]
      %v193 = vld [vmem:[%s165 + $0xb0] sm:$0xff]
      %v194 = vld [vmem:[%s165 + $0xb8] sm:$0xff]
      %v195 = vld [vmem:[%s165 + $0xc0] sm:$0xff]
      %v196 = vld [vmem:[%s165 + $0xc8] sm:$0xff]
      %v197 = vld [vmem:[%s165 + $0xd0] sm:$0xff]
      %v198 = vld [vmem:[%s165 + $0xd8] sm:$0xff]
      %v199 = vld [vmem:[%s165 + $0xe0] sm:$0xff]
      %v200 = vld [vmem:[%s165 + $0xe8] sm:$0xff]
      %v201 = vld [vmem:[%s165 + $0xf0] sm:$0xff]
      %v202 = vld [vmem:[%s165 + $0xf8] sm:$0xff]
      %v203 = vpack.c.bf16 %v173, %v171
      %v204 = vpack.c.bf16 %v174, %v172
      %v205 = vpack.c.bf16 %v177, %v175
      %v206 = vpack.c.bf16 %v178, %v176
      %v207 = vpack.c.bf16 %v181, %v179
      %v208 = vpack.c.bf16 %v182, %v180
      %v209 = vpack.c.bf16 %v185, %v183
      %v210 = vpack.c.bf16 %v186, %v184
      %v211 = vpack.c.bf16 %v189, %v187
      %v212 = vpack.c.bf16 %v190, %v188
      %v213 = vpack.c.bf16 %v193, %v191
      %v214 = vpack.c.bf16 %v194, %v192
      %v215 = vpack.c.bf16 %v197, %v195
      %v216 = vpack.c.bf16 %v198, %v196
      %v217 = vpack.c.bf16 %v201, %v199
      %v218 = vpack.c.bf16 %v202, %v200
      %v219 = vld [vmem:[%s1] sm:$0xf]
      %v220 = vld [vmem:[%s1 + $0x4] sm:$0xf]
      %v221 = vld [vmem:[%s1 + $0x8] sm:$0xf]
      %v222 = vld [vmem:[%s1 + $0xc] sm:$0xf]
      %v223 = vld [vmem:[%s1 + $0x10] sm:$0xf]
      %v224 = vld [vmem:[%s1 + $0x14] sm:$0xf]
      %v225 = vld [vmem:[%s1 + $0x18] sm:$0xf]
      %v226 = vld [vmem:[%s1 + $0x1c] sm:$0xf]
      %v227 = vld [vmem:[%s1 + $0x20] sm:$0xf]
      %v228 = vld [vmem:[%s1 + $0x24] sm:$0xf]
      %v229 = vld [vmem:[%s1 + $0x28] sm:$0xf]
      %v230 = vld [vmem:[%s1 + $0x2c] sm:$0xf]
      %v231 = vld [vmem:[%s1 + $0x30] sm:$0xf]
      %v232 = vld [vmem:[%s1 + $0x34] sm:$0xf]
      %v233 = vld [vmem:[%s1 + $0x38] sm:$0xf]
      %v234 = vld [vmem:[%s1 + $0x3c] sm:$0xf]
      %v235 = vld [vmem:[%s1 + $0x40] sm:$0xf]
      %v236 = vld [vmem:[%s1 + $0x44] sm:$0xf]
      %v237 = vld [vmem:[%s1 + $0x48] sm:$0xf]
      %v238 = vld [vmem:[%s1 + $0x4c] sm:$0xf]
      %v239 = vld [vmem:[%s1 + $0x50] sm:$0xf]
      %v240 = vld [vmem:[%s1 + $0x54] sm:$0xf]
      %v241 = vld [vmem:[%s1 + $0x58] sm:$0xf]
      %v242 = vld [vmem:[%s1 + $0x5c] sm:$0xf]
      %v243 = vld [vmem:[%s1 + $0x60] sm:$0xf]
      %v244 = vld [vmem:[%s1 + $0x64] sm:$0xf]
      %v245 = vld [vmem:[%s1 + $0x68] sm:$0xf]
      %v246 = vld [vmem:[%s1 + $0x6c] sm:$0xf]
      %v247 = vld [vmem:[%s1 + $0x70] sm:$0xf]
      %v248 = vld [vmem:[%s1 + $0x74] sm:$0xf]
      %v249 = vld [vmem:[%s1 + $0x78] sm:$0xf]
      %v250 = vld [vmem:[%s1 + $0x7c] sm:$0xf]
      %v251 = vld [vmem:[%s2] sm:$0x1]
      %v253 = vperm.slane %v251, 0
      %v287 = vunpack.c.l.b16 %v219
      %v288 = vunpack.c.l.b16 %v220
      %v289 = vunpack.c.l.b16 %v221
      %v290 = vunpack.c.l.b16 %v222
      %v291 = vunpack.c.l.b16 %v223
      %v292 = vunpack.c.l.b16 %v224
      %v293 = vunpack.c.l.b16 %v225
      %v294 = vunpack.c.l.b16 %v226
      %v295 = vunpack.c.l.b16 %v227
      %v296 = vunpack.c.l.b16 %v228
      %v297 = vunpack.c.l.b16 %v229
      %v298 = vunpack.c.l.b16 %v230
      %v299 = vunpack.c.l.b16 %v231
      %v300 = vunpack.c.l.b16 %v232
      %v301 = vunpack.c.l.b16 %v233
      %v302 = vunpack.c.l.b16 %v234
      %v303 = vunpack.c.l.b16 %v235
      %v304 = vunpack.c.l.b16 %v236
      %v305 = vunpack.c.l.b16 %v237
      %v306 = vunpack.c.l.b16 %v238
      %v307 = vunpack.c.l.b16 %v239
      %v308 = vunpack.c.l.b16 %v240
      %v309 = vunpack.c.l.b16 %v241
      %v310 = vunpack.c.l.b16 %v242
      %v311 = vunpack.c.l.b16 %v243
      %v312 = vunpack.c.l.b16 %v244
      %v313 = vunpack.c.l.b16 %v245
      %v314 = vunpack.c.l.b16 %v246
      %v315 = vunpack.c.l.b16 %v247
      %v316 = vunpack.c.l.b16 %v248
      %v317 = vunpack.c.l.b16 %v249
      %v318 = vunpack.c.l.b16 %v250
      %v319 = vpack.c.b16 %v288, %v287
      %v320 = vpack.c.b16 %v290, %v289
      %v321 = vpack.c.b16 %v292, %v291
      %v322 = vpack.c.b16 %v294, %v293
      %v323 = vpack.c.b16 %v296, %v295
      %v324 = vpack.c.b16 %v298, %v297
      %v325 = vpack.c.b16 %v300, %v299
      %v326 = vpack.c.b16 %v302, %v301
      %v327 = vpack.c.b16 %v304, %v303
      %v328 = vpack.c.b16 %v306, %v305
      %v329 = vpack.c.b16 %v308, %v307
      %v330 = vpack.c.b16 %v310, %v309
      %v331 = vpack.c.b16 %v312, %v311
      %v332 = vpack.c.b16 %v314, %v313
      %v333 = vpack.c.b16 %v316, %v315
      %v334 = vpack.c.b16 %v318, %v317
      %351 = vmatpush.bf16.msra.mxu0 %v326
      %352 = vmatpush.bf16.msra.mxu0 %v325
      %353 = vmatpush.bf16.msra.mxu0 %v324
      %354 = vmatpush.bf16.msra.mxu0 %v323
      %355 = vmatpush.bf16.msra.mxu0 %v322
      %356 = vmatpush.bf16.msra.mxu0 %v321
      %357 = vmatpush.bf16.msra.mxu0 %v320
      %358 = vmatpush.bf16.msra.mxu0 %v319
      %359 = vmatmul.bf16.gmra.mxu0 %v203
      %v360 = vpop.f32.mrf.mxu0
      %v361 = vadd.f32 %v253, %v360
      %v362 = vpop.f32.mrf.mxu0
      %v363 = vadd.f32 %v253, %v362
      %364 = vmatmul.bf16.gmra.mxu0 %v205
      %v365 = vpop.f32.mrf.mxu0
      %v366 = vadd.f32 %v253, %v365
      %v367 = vpop.f32.mrf.mxu0
      %v368 = vadd.f32 %v253, %v367
      %369 = vmatmul.bf16.gmra.mxu0 %v207
      %v370 = vpop.f32.mrf.mxu0
      %v371 = vadd.f32 %v253, %v370
      %v372 = vpop.f32.mrf.mxu0
      %v373 = vadd.f32 %v253, %v372
      %374 = vmatmul.bf16.gmra.mxu0 %v209
      %v375 = vpop.f32.mrf.mxu0
      %v376 = vadd.f32 %v253, %v375
      %v377 = vpop.f32.mrf.mxu0
      %v378 = vadd.f32 %v253, %v377
      %379 = vmatmul.bf16.gmra.mxu0 %v211
      %v380 = vpop.f32.mrf.mxu0
      %v381 = vadd.f32 %v253, %v380
      %v382 = vpop.f32.mrf.mxu0
      %v383 = vadd.f32 %v253, %v382
      %384 = vmatmul.bf16.gmra.mxu0 %v213
      %v385 = vpop.f32.mrf.mxu0
      %v386 = vadd.f32 %v253, %v385
      %v387 = vpop.f32.mrf.mxu0
      %v388 = vadd.f32 %v253, %v387
      %389 = vmatmul.bf16.gmra.mxu0 %v215
      %v390 = vpop.f32.mrf.mxu0
      %v391 = vadd.f32 %v253, %v390
      %v392 = vpop.f32.mrf.mxu0
      %v393 = vadd.f32 %v253, %v392
      %394 = vmatmul.bf16.gmra.mxu0 %v217
      %v395 = vpop.f32.mrf.mxu0
      %v396 = vadd.f32 %v253, %v395
      %v397 = vpop.f32.mrf.mxu0
      %v398 = vadd.f32 %v253, %v397
      %399 = vdwg.mxu0
      %400 = vmatpush.bf16.msra.mxu0 %v334
      %401 = vmatpush.bf16.msra.mxu0 %v333
      %402 = vmatpush.bf16.msra.mxu0 %v332
      %403 = vmatpush.bf16.msra.mxu0 %v331
      %404 = vmatpush.bf16.msra.mxu0 %v330
      %405 = vmatpush.bf16.msra.mxu0 %v329
      %406 = vmatpush.bf16.msra.mxu0 %v328
      %407 = vmatpush.bf16.msra.mxu0 %v327
      %408 = vmatmul.bf16.gmra.mxu0 %v204
      %v409 = vpop.f32.mrf.mxu0
      %v410 = vadd.f32 %v361, %v409
      %v411 = vpop.f32.mrf.mxu0
      %v412 = vadd.f32 %v363, %v411
      %413 = vmatmul.bf16.gmra.mxu0 %v206
      %v414 = vpop.f32.mrf.mxu0
      %v415 = vadd.f32 %v366, %v414
      %v416 = vpop.f32.mrf.mxu0
      %v417 = vadd.f32 %v368, %v416
      %418 = vmatmul.bf16.gmra.mxu0 %v208
      %v419 = vpop.f32.mrf.mxu0
      %v420 = vadd.f32 %v371, %v419
      %v421 = vpop.f32.mrf.mxu0
      %v422 = vadd.f32 %v373, %v421
      %423 = vmatmul.bf16.gmra.mxu0 %v210
      %v424 = vpop.f32.mrf.mxu0
      %v425 = vadd.f32 %v376, %v424
      %v426 = vpop.f32.mrf.mxu0
      %v427 = vadd.f32 %v378, %v426
      %428 = vmatmul.bf16.gmra.mxu0 %v212
      %v429 = vpop.f32.mrf.mxu0
      %v430 = vadd.f32 %v381, %v429
      %v431 = vpop.f32.mrf.mxu0
      %v432 = vadd.f32 %v383, %v431
      %433 = vmatmul.bf16.gmra.mxu0 %v214
      %v434 = vpop.f32.mrf.mxu0
      %v435 = vadd.f32 %v386, %v434
      %v436 = vpop.f32.mrf.mxu0
      %v437 = vadd.f32 %v388, %v436
      %438 = vmatmul.bf16.gmra.mxu0 %v216
      %v439 = vpop.f32.mrf.mxu0
      %v440 = vadd.f32 %v391, %v439
      %v441 = vpop.f32.mrf.mxu0
      %v442 = vadd.f32 %v393, %v441
      %443 = vmatmul.bf16.gmra.mxu0 %v218
      %v444 = vpop.f32.mrf.mxu0
      %v445 = vadd.f32 %v396, %v444
      %v446 = vpop.f32.mrf.mxu0
      %v447 = vadd.f32 %v398, %v446
      %448 = vdwg.mxu0
      %449 = vst [vmem:[%s170] sm:$0xff] %v410
      %450 = vst [vmem:[%s170 + $0x8] sm:$0xff] %v412
      %451 = vst [vmem:[%s170 + $0x10] sm:$0xff] %v415
      %452 = vst [vmem:[%s170 + $0x18] sm:$0xff] %v417
      %453 = vst [vmem:[%s170 + $0x20] sm:$0xff] %v420
      %454 = vst [vmem:[%s170 + $0x28] sm:$0xff] %v422
      %455 = vst [vmem:[%s170 + $0x30] sm:$0xff] %v425
      %456 = vst [vmem:[%s170 + $0x38] sm:$0xff] %v427
      %457 = vst [vmem:[%s170 + $0x40] sm:$0xff] %v430
      %458 = vst [vmem:[%s170 + $0x48] sm:$0xff] %v432
      %459 = vst [vmem:[%s170 + $0x50] sm:$0xff] %v435
      %460 = vst [vmem:[%s170 + $0x58] sm:$0xff] %v437
      %461 = vst [vmem:[%s170 + $0x60] sm:$0xff] %v440
      %462 = vst [vmem:[%s170 + $0x68] sm:$0xff] %v442
      %463 = vst [vmem:[%s170 + $0x70] sm:$0xff] %v445
      %464 = vst [vmem:[%s170 + $0x78] sm:$0xff] %v447
      %p465 = scmp.lt.s32.totalorder %s14, 1
      %s466 = scalar_select %p465, %s14, 1
      %s467 = smul.addr %s466, 16
      %s468 = smul.addr %s467, 8
      %s469 = scalar_lea.vmem %s3, %s468
      // Predicated region
      $region33: #{transformer_forward.5} parent=31 // pred_check
        %p470 = pneg %p100
      $region34: #{transformer_forward.5} parent=31 // pred_check_branch
        %472 = sbr.rel (%p470) target = $region36
      $region35: #{transformer_forward.5} parent=31 // pred_region
        _
      $region36: #{transformer_forward.5} parent=31 // pred_fallthru
        _
    $region32: #{transformer_forward.5} parent=5 // pred_fallthru
      _
    %p473 = scmp.le.s32.totalorder 2, %s9
    // Predicated region
    $region37: #{transformer_forward.5} parent=5 // pred_check
      %p474 = pneg %p473
    $region38: #{transformer_forward.5} parent=5 // pred_check_branch
      %476 = sbr.rel (%p474) target = $region40
    $region39: #{transformer_forward.5} parent=5 // pred_region
      %s477 = ssub.s32 %s9, 2
      // Predicated region
      $region41: #{transformer_forward.5} parent=39 // pred_check
        %p478 = pneg %p106
      $region42: #{transformer_forward.5} parent=39 // pred_check_branch
        %480 = sbr.rel (%p478) target = $region44
      $region43: #{transformer_forward.5} parent=39 // pred_region
        %p481 = scmp.lt.s32.totalorder %s15, 1
        %s482 = scalar_select %p481, %s15, 1
        %s483 = smul.addr %s482, 16
        %s484 = smul.addr %s483, 8
        %s485 = scalar_lea.vmem %s3, %s484
      $region44: #{transformer_forward.5} parent=39 // pred_fallthru
        _
    $region40: #{transformer_forward.5} parent=5 // pred_fallthru
      _
  $region6: #{transformer_forward.5} parent=0 // loop_footer
    %s13 = sadd.s32 1, %s9
  $region7: #{transformer_forward.5} parent=0 // loop_footer_branch
    %8 = sbr.rel target = $region3
  $region8: #{transformer_forward.5} parent=0 // loop_exit
    _

// kernel: transformer_forward.3
$region0: #{transformer_forward.3}
  #allocation0 [shape = 'u32[]', space=smem, size = 0x4, offset = 0x4, fixed_abs, tag = 'smem constant byte address 0x4 - core index']
  #allocation1 [shape = 'u32[72,128]{1,0:T(1,128)}', space=vmem, size = 0x9000, scoped, tag = 'internal scratch']
  %s0 = inlined_call_operand.vmem [shape: f32[2,128,256], index: 0, kind: input, shape index: {}]
  %s1 = inlined_call_operand.vmem [shape: bf16[256,256], index: 1, kind: input, shape index: {}]
  %s2 = inlined_call_operand.vmem [shape: bf16[256,256], index: 2, kind: input, shape index: {}]
  %s3 = inlined_call_operand.vmem [shape: bf16[256,256], index: 3, kind: input, shape index: {}]
  %s4 = inlined_call_operand.vmem [shape: f32[1,256], index: 4, kind: input, shape index: {}]
  %s5 = inlined_call_operand.vmem [shape: f32[1,256], index: 5, kind: input, shape index: {}]
  %s6 = inlined_call_operand.vmem [shape: f32[1,256], index: 6, kind: input, shape index: {}]
  %s7 = inlined_call_operand.vmem [shape: bf16[256,256], index: 7, kind: input, shape index: {}]
  %s8 = inlined_call_operand.vmem [shape: f32[1,256], index: 8, kind: input, shape index: {}]
  %s9 = inlined_call_operand.vmem [shape: f32[1,256], index: 9, kind: input, shape index: {}]
  %s10 = inlined_call_operand.vmem [shape: f32[1,256], index: 10, kind: input, shape index: {}]
  %s11 = inlined_call_operand.vmem [shape: bf16[256,512], index: 11, kind: input, shape index: {}]
  %s12 = inlined_call_operand.vmem [shape: f32[1,512], index: 12, kind: input, shape index: {}]
  %s13 = inlined_call_operand.vmem [shape: bf16[512,256], index: 13, kind: input, shape index: {}]
  %s14 = inlined_call_operand.vmem [shape: f32[1,256], index: 14, kind: input, shape index: {}]
  %s15 = inlined_call_operand.vmem [shape: f32[1,256], index: 15, kind: input, shape index: {}]
  %s16 = inlined_call_operand.vmem [shape: f32[1,256], index: 16, kind: input, shape index: {}]
  %s17 = inlined_call_operand.vmem [shape: f32[2,128,256], index: 17, kind: output, shape index: {}]
  %s18 = sld [smem:[#allocation0]]
  $region101: #{transformer_forward.3} parent=0
    _
  %s20 = ssub.s32 1, %s18
  %s21 = scalar_select 0, %s20, %s18
  loop: start=0, step=1, limit=4
  $region2: #{transformer_forward.3} parent=0 // loop_pre_header
    _
  $region3: #{transformer_forward.3} parent=0 // loop_header
    %s23 = sphi 0, %s27
    %p24 = scmp.ge.s32.totalorder %s23, 4
    %s33 = sphi 0, %s35
    %s36 = sphi 0, %s33
    %s37 = sphi 0, %s36
    %s53 = sphi 0, %s37
    %s57 = sphi 0, %s57
    %s59 = sphi 0, %s57
    %s60 = sphi 0, %s59
    %s74 = sphi 0, %s60
    %s78 = sphi 0, %s78
    %s80 = sphi 0, %s78
    %s81 = sphi 0, %s80
    %s95 = sphi 0, %s81
    %s99 = sphi 0, %s99
    %s101 = sphi 0, %s99
    %s102 = sphi 0, %s101
    %s116 = sphi 0, %s102
    %s120 = sphi 0, %s120
    %s122 = sphi 0, %s120
    %s123 = sphi 0, %s122
    %s137 = sphi 0, %s123
    %s141 = sphi 0, %s141
    %s143 = sphi 0, %s141
    %s144 = sphi 0, %s143
    %s158 = sphi 0, %s144
    %s162 = sphi 0, %s162
    %s164 = sphi 0, %s162
    %s165 = sphi 0, %s164
    %s179 = sphi 0, %s165
    %s183 = sphi 0, %s183
    %s185 = sphi 0, %s183
    %s186 = sphi 0, %s185
    %s200 = sphi 0, %s186
    %s204 = sphi 0, %s204
    %s206 = sphi 0, %s204
    %s207 = sphi 0, %s206
    %s221 = sphi 0, %s207
    %s225 = sphi 0, %s225
    %s227 = sphi 0, %s225
    %s228 = sphi 0, %s227
    %s242 = sphi 0, %s228
    %s246 = sphi 0, %s246
    %s248 = sphi 0, %s246
    %s249 = sphi 0, %s248
    %s263 = sphi 0, %s249
    %s267 = sphi 0, %s267
    %s269 = sphi 0, %s267
    %s270 = sphi 0, %s269
    %s284 = sphi 0, %s270
    %s288 = sphi 0, %s288
    %s290 = sphi 0, %s288
    %s291 = sphi 0, %s290
    %s305 = sphi 0, %s291
    %s309 = sphi 0, %s309
    %s311 = sphi 0, %s309
    %s312 = sphi 0, %s311
    %s326 = sphi 0, %s312
    %s330 = sphi 0, %s330
    %s332 = sphi 0, %s330
    %s333 = sphi 0, %s332
    %s347 = sphi 0, %s333
    %s351 = sphi 0, %s351
    %s353 = sphi 0, %s351
    %s354 = sphi 0, %s353
    %s368 = sphi 0, %s354
    %s372 = sphi 0, %s372
    %s374 = sphi 0, %s372
    %s375 = sphi 0, %s374
    %s389 = sphi 0, %s375
    %s395 = sphi 0, %s397
    %s398 = sphi 0, %s395
    %s399 = sphi 0, %s398
    %s415 = sphi 0, %s399
  $region4: #{transformer_forward.3} parent=0 // loop_header_branch
    %26 = sbr.rel (%p24) target = $region8
  $region5: #{transformer_forward.3} parent=0 // loop_body
    %s28 = ssub.s32 %s23, 1
    %s29 = ssub.s32 %s23, 2
    %s30 = sadd.s32 %s23, 1
    %s31 = ssub.s32 %s23, %s30
    %p32 = scmp.eq.s32.totalorder %s31, 0
    %s34 = sadd.s32 %s33, 1
    %s35 = scalar_select %p32, %s33, %s34
    %p38 = pneg %p32
    %p39 = scmp.eq.s32.totalorder %s23, 1
    %p40 = por %p38, %p39
    %p41 = scmp.ne.s32.totalorder %s33, %s36
    %p42 = scmp.eq.s32.totalorder %s23, 0
    %p43 = por %p41, %p42
    %p44 = scmp.ne.s32.totalorder %s33, %s36
    %p45 = scmp.eq.s32.totalorder %s28, 1
    %p46 = por %p44, %p45
    %p47 = scmp.ne.s32.totalorder %s36, %s37
    %p48 = scmp.eq.s32.totalorder %s28, 0
    %p49 = por %p47, %p48
    %p50 = scmp.ne.s32.totalorder %s36, %s37
    %p51 = scmp.eq.s32.totalorder %s29, 1
    %p52 = por %p50, %p51
    %p54 = scmp.ne.s32.totalorder %s37, %s53
    %p55 = scmp.eq.s32.totalorder %s29, 0
    %p56 = por %p54, %p55
    %s58 = sadd.s32 %s57, 1
    %p61 = scmp.eq.s32.totalorder %s23, 1
    %p62 = scmp.ne.s32.totalorder %s57, %s59
    %p63 = scmp.eq.s32.totalorder %s23, 0
    %p64 = por %p62, %p63
    %p65 = scmp.ne.s32.totalorder %s57, %s59
    %p66 = scmp.eq.s32.totalorder %s28, 1
    %p67 = por %p65, %p66
    %p68 = scmp.ne.s32.totalorder %s59, %s60
    %p69 = scmp.eq.s32.totalorder %s28, 0
    %p70 = por %p68, %p69
    %p71 = scmp.ne.s32.totalorder %s59, %s60
    %p72 = scmp.eq.s32.totalorder %s29, 1
    %p73 = por %p71, %p72
    %p75 = scmp.ne.s32.totalorder %s60, %s74
    %p76 = scmp.eq.s32.totalorder %s29, 0
    %p77 = por %p75, %p76
    %s79 = sadd.s32 %s78, 1
    %p82 = scmp.eq.s32.totalorder %s23, 1
    %p83 = scmp.ne.s32.totalorder %s78, %s80
    %p84 = scmp.eq.s32.totalorder %s23, 0
    %p85 = por %p83, %p84
    %p86 = scmp.ne.s32.totalorder %s78, %s80
    %p87 = scmp.eq.s32.totalorder %s28, 1
    %p88 = por %p86, %p87
    %p89 = scmp.ne.s32.totalorder %s80, %s81
    %p90 = scmp.eq.s32.totalorder %s28, 0
    %p91 = por %p89, %p90
    %p92 = scmp.ne.s32.totalorder %s80, %s81
    %p93 = scmp.eq.s32.totalorder %s29, 1
    %p94 = por %p92, %p93
    %p96 = scmp.ne.s32.totalorder %s81, %s95
    %p97 = scmp.eq.s32.totalorder %s29, 0
    %p98 = por %p96, %p97
    %s100 = sadd.s32 %s99, 1
    %p103 = scmp.eq.s32.totalorder %s23, 1
    %p104 = scmp.ne.s32.totalorder %s99, %s101
    %p105 = scmp.eq.s32.totalorder %s23, 0
    %p106 = por %p104, %p105
    %p107 = scmp.ne.s32.totalorder %s99, %s101
    %p108 = scmp.eq.s32.totalorder %s28, 1
    %p109 = por %p107, %p108
    %p110 = scmp.ne.s32.totalorder %s101, %s102
    %p111 = scmp.eq.s32.totalorder %s28, 0
    %p112 = por %p110, %p111
    %p113 = scmp.ne.s32.totalorder %s101, %s102
    %p114 = scmp.eq.s32.totalorder %s29, 1
    %p115 = por %p113, %p114
    %p117 = scmp.ne.s32.totalorder %s102, %s116
    %p118 = scmp.eq.s32.totalorder %s29, 0
    %p119 = por %p117, %p118
    %s121 = sadd.s32 %s120, 1
    %p124 = scmp.eq.s32.totalorder %s23, 1
    %p125 = scmp.ne.s32.totalorder %s120, %s122
    %p126 = scmp.eq.s32.totalorder %s23, 0
    %p127 = por %p125, %p126
    %p128 = scmp.ne.s32.totalorder %s120, %s122
    %p129 = scmp.eq.s32.totalorder %s28, 1
    %p130 = por %p128, %p129
    %p131 = scmp.ne.s32.totalorder %s122, %s123
    %p132 = scmp.eq.s32.totalorder %s28, 0
    %p133 = por %p131, %p132
    %p134 = scmp.ne.s32.totalorder %s122, %s123
    %p135 = scmp.eq.s32.totalorder %s29, 1
    %p136 = por %p134, %p135
    %p138 = scmp.ne.s32.totalorder %s123, %s137
    %p139 = scmp.eq.s32.totalorder %s29, 0
    %p140 = por %p138, %p139
    %s142 = sadd.s32 %s141, 1
    %p145 = scmp.eq.s32.totalorder %s23, 1
    %p146 = scmp.ne.s32.totalorder %s141, %s143
    %p147 = scmp.eq.s32.totalorder %s23, 0
    %p148 = por %p146, %p147
    %p149 = scmp.ne.s32.totalorder %s141, %s143
    %p150 = scmp.eq.s32.totalorder %s28, 1
    %p151 = por %p149, %p150
    %p152 = scmp.ne.s32.totalorder %s143, %s144
    %p153 = scmp.eq.s32.totalorder %s28, 0
    %p154 = por %p152, %p153
    %p155 = scmp.ne.s32.totalorder %s143, %s144
    %p156 = scmp.eq.s32.totalorder %s29, 1
    %p157 = por %p155, %p156
    %p159 = scmp.ne.s32.totalorder %s144, %s158
    %p160 = scmp.eq.s32.totalorder %s29, 0
    %p161 = por %p159, %p160
    %s163 = sadd.s32 %s162, 1
    %p166 = scmp.eq.s32.totalorder %s23, 1
    %p167 = scmp.ne.s32.totalorder %s162, %s164
    %p168 = scmp.eq.s32.totalorder %s23, 0
    %p169 = por %p167, %p168
    %p170 = scmp.ne.s32.totalorder %s162, %s164
    %p171 = scmp.eq.s32.totalorder %s28, 1
    %p172 = por %p170, %p171
    %p173 = scmp.ne.s32.totalorder %s164, %s165
    %p174 = scmp.eq.s32.totalorder %s28, 0
    %p175 = por %p173, %p174
    %p176 = scmp.ne.s32.totalorder %s164, %s165
    %p177 = scmp.eq.s32.totalorder %s29, 1
    %p178 = por %p176, %p177
    %p180 = scmp.ne.s32.totalorder %s165, %s179
    %p181 = scmp.eq.s32.totalorder %s29, 0
    %p182 = por %p180, %p181
    %s184 = sadd.s32 %s183, 1
    %p187 = scmp.eq.s32.totalorder %s23, 1
    %p188 = scmp.ne.s32.totalorder %s183, %s185
    %p189 = scmp.eq.s32.totalorder %s23, 0
    %p190 = por %p188, %p189
    %p191 = scmp.ne.s32.totalorder %s183, %s185
    %p192 = scmp.eq.s32.totalorder %s28, 1
    %p193 = por %p191, %p192
    %p194 = scmp.ne.s32.totalorder %s185, %s186
    %p195 = scmp.eq.s32.totalorder %s28, 0
    %p196 = por %p194, %p195
    %p197 = scmp.ne.s32.totalorder %s185, %s186
    %p198 = scmp.eq.s32.totalorder %s29, 1
    %p199 = por %p197, %p198
    %p201 = scmp.ne.s32.totalorder %s186, %s200
    %p202 = scmp.eq.s32.totalorder %s29, 0
    %p203 = por %p201, %p202
    %s205 = sadd.s32 %s204, 1
    %p208 = scmp.eq.s32.totalorder %s23, 1
    %p209 = scmp.ne.s32.totalorder %s204, %s206
    %p210 = scmp.eq.s32.totalorder %s23, 0
    %p211 = por %p209, %p210
    %p212 = scmp.ne.s32.totalorder %s204, %s206
    %p213 = scmp.eq.s32.totalorder %s28, 1
    %p214 = por %p212, %p213
    %p215 = scmp.ne.s32.totalorder %s206, %s207
    %p216 = scmp.eq.s32.totalorder %s28, 0
    %p217 = por %p215, %p216
    %p218 = scmp.ne.s32.totalorder %s206, %s207
    %p219 = scmp.eq.s32.totalorder %s29, 1
    %p220 = por %p218, %p219
    %p222 = scmp.ne.s32.totalorder %s207, %s221
    %p223 = scmp.eq.s32.totalorder %s29, 0
    %p224 = por %p222, %p223
    %s226 = sadd.s32 %s225, 1
    %p229 = scmp.eq.s32.totalorder %s23, 1
    %p230 = scmp.ne.s32.totalorder %s225, %s227
    %p231 = scmp.eq.s32.totalorder %s23, 0
    %p232 = por %p230, %p231
    %p233 = scmp.ne.s32.totalorder %s225, %s227
    %p234 = scmp.eq.s32.totalorder %s28, 1
    %p235 = por %p233, %p234
    %p236 = scmp.ne.s32.totalorder %s227, %s228
    %p237 = scmp.eq.s32.totalorder %s28, 0
    %p238 = por %p236, %p237
    %p239 = scmp.ne.s32.totalorder %s227, %s228
    %p240 = scmp.eq.s32.totalorder %s29, 1
    %p241 = por %p239, %p240
    %p243 = scmp.ne.s32.totalorder %s228, %s242
    %p244 = scmp.eq.s32.totalorder %s29, 0
    %p245 = por %p243, %p244
    %s247 = sadd.s32 %s246, 1
    %p250 = scmp.eq.s32.totalorder %s23, 1
    %p251 = scmp.ne.s32.totalorder %s246, %s248
    %p252 = scmp.eq.s32.totalorder %s23, 0
    %p253 = por %p251, %p252
    %p254 = scmp.ne.s32.totalorder %s246, %s248
    %p255 = scmp.eq.s32.totalorder %s28, 1
    %p256 = por %p254, %p255
    %p257 = scmp.ne.s32.totalorder %s248, %s249
    %p258 = scmp.eq.s32.totalorder %s28, 0
    %p259 = por %p257, %p258
    %p260 = scmp.ne.s32.totalorder %s248, %s249
    %p261 = scmp.eq.s32.totalorder %s29, 1
    %p262 = por %p260, %p261
    %p264 = scmp.ne.s32.totalorder %s249, %s263
    %p265 = scmp.eq.s32.totalorder %s29, 0
    %p266 = por %p264, %p265
    %s268 = sadd.s32 %s267, 1
    %p271 = scmp.eq.s32.totalorder %s23, 1
    %p272 = scmp.ne.s32.totalorder %s267, %s269
    %p273 = scmp.eq.s32.totalorder %s23, 0
    %p274 = por %p272, %p273
    %p275 = scmp.ne.s32.totalorder %s267, %s269
    %p276 = scmp.eq.s32.totalorder %s28, 1
    %p277 = por %p275, %p276
    %p278 = scmp.ne.s32.totalorder %s269, %s270
    %p279 = scmp.eq.s32.totalorder %s28, 0
    %p280 = por %p278, %p279
    %p281 = scmp.ne.s32.totalorder %s269, %s270
    %p282 = scmp.eq.s32.totalorder %s29, 1
    %p283 = por %p281, %p282
    %p285 = scmp.ne.s32.totalorder %s270, %s284
    %p286 = scmp.eq.s32.totalorder %s29, 0
    %p287 = por %p285, %p286
    %s289 = sadd.s32 %s288, 1
    %p292 = scmp.eq.s32.totalorder %s23, 1
    %p293 = scmp.ne.s32.totalorder %s288, %s290
    %p294 = scmp.eq.s32.totalorder %s23, 0
    %p295 = por %p293, %p294
    %p296 = scmp.ne.s32.totalorder %s288, %s290
    %p297 = scmp.eq.s32.totalorder %s28, 1
    %p298 = por %p296, %p297
    %p299 = scmp.ne.s32.totalorder %s290, %s291
    %p300 = scmp.eq.s32.totalorder %s28, 0
    %p301 = por %p299, %p300
    %p302 = scmp.ne.s32.totalorder %s290, %s291
    %p303 = scmp.eq.s32.totalorder %s29, 1
    %p304 = por %p302, %p303
    %p306 = scmp.ne.s32.totalorder %s291, %s305
    %p307 = scmp.eq.s32.totalorder %s29, 0
    %p308 = por %p306, %p307
    %s310 = sadd.s32 %s309, 1
    %p313 = scmp.eq.s32.totalorder %s23, 1
    %p314 = scmp.ne.s32.totalorder %s309, %s311
    %p315 = scmp.eq.s32.totalorder %s23, 0
    %p316 = por %p314, %p315
    %p317 = scmp.ne.s32.totalorder %s309, %s311
    %p318 = scmp.eq.s32.totalorder %s28, 1
    %p319 = por %p317, %p318
    %p320 = scmp.ne.s32.totalorder %s311, %s312
    %p321 = scmp.eq.s32.totalorder %s28, 0
    %p322 = por %p320, %p321
    %p323 = scmp.ne.s32.totalorder %s311, %s312
    %p324 = scmp.eq.s32.totalorder %s29, 1
    %p325 = por %p323, %p324
    %p327 = scmp.ne.s32.totalorder %s312, %s326
    %p328 = scmp.eq.s32.totalorder %s29, 0
    %p329 = por %p327, %p328
    %s331 = sadd.s32 %s330, 1
    %p334 = scmp.eq.s32.totalorder %s23, 1
    %p335 = scmp.ne.s32.totalorder %s330, %s332
    %p336 = scmp.eq.s32.totalorder %s23, 0
    %p337 = por %p335, %p336
    %p338 = scmp.ne.s32.totalorder %s330, %s332
    %p339 = scmp.eq.s32.totalorder %s28, 1
    %p340 = por %p338, %p339
    %p341 = scmp.ne.s32.totalorder %s332, %s333
    %p342 = scmp.eq.s32.totalorder %s28, 0
    %p343 = por %p341, %p342
    %p344 = scmp.ne.s32.totalorder %s332, %s333
    %p345 = scmp.eq.s32.totalorder %s29, 1
    %p346 = por %p344, %p345
    %p348 = scmp.ne.s32.totalorder %s333, %s347
    %p349 = scmp.eq.s32.totalorder %s29, 0
    %p350 = por %p348, %p349
    %s352 = sadd.s32 %s351, 1
    %p355 = scmp.eq.s32.totalorder %s23, 1
    %p356 = scmp.ne.s32.totalorder %s351, %s353
    %p357 = scmp.eq.s32.totalorder %s23, 0
    %p358 = por %p356, %p357
    %p359 = scmp.ne.s32.totalorder %s351, %s353
    %p360 = scmp.eq.s32.totalorder %s28, 1
    %p361 = por %p359, %p360
    %p362 = scmp.ne.s32.totalorder %s353, %s354
    %p363 = scmp.eq.s32.totalorder %s28, 0
    %p364 = por %p362, %p363
    %p365 = scmp.ne.s32.totalorder %s353, %s354
    %p366 = scmp.eq.s32.totalorder %s29, 1
    %p367 = por %p365, %p366
    %p369 = scmp.ne.s32.totalorder %s354, %s368
    %p370 = scmp.eq.s32.totalorder %s29, 0
    %p371 = por %p369, %p370
    %s373 = sadd.s32 %s372, 1
    %p376 = scmp.eq.s32.totalorder %s23, 1
    %p377 = scmp.ne.s32.totalorder %s372, %s374
    %p378 = scmp.eq.s32.totalorder %s23, 0
    %p379 = por %p377, %p378
    %p380 = scmp.ne.s32.totalorder %s372, %s374
    %p381 = scmp.eq.s32.totalorder %s28, 1
    %p382 = por %p380, %p381
    %p383 = scmp.ne.s32.totalorder %s374, %s375
    %p384 = scmp.eq.s32.totalorder %s28, 0
    %p385 = por %p383, %p384
    %p386 = scmp.ne.s32.totalorder %s374, %s375
    %p387 = scmp.eq.s32.totalorder %s29, 1
    %p388 = por %p386, %p387
    %p390 = scmp.ne.s32.totalorder %s375, %s389
    %p391 = scmp.eq.s32.totalorder %s29, 0
    %p392 = por %p390, %p391
    %s393 = ssub.s32 %s23, %s30
    %p394 = scmp.eq.s32.totalorder %s393, 0
    %s396 = sadd.s32 %s395, 1
    %s397 = scalar_select %p394, %s395, %s396
    %p400 = pneg %p394
    %p401 = scmp.eq.s32.totalorder %s23, 1
    %p402 = por %p400, %p401
    %p403 = scmp.ne.s32.totalorder %s395, %s398
    %p404 = scmp.eq.s32.totalorder %s23, 0
    %p405 = por %p403, %p404
    %p406 = scmp.ne.s32.totalorder %s395, %s398
    %p407 = scmp.eq.s32.totalorder %s28, 1
    %p408 = por %p406, %p407
    %p409 = scmp.ne.s32.totalorder %s398, %s399
    %p410 = scmp.eq.s32.totalorder %s28, 0
    %p411 = por %p409, %p410
    %p412 = scmp.ne.s32.totalorder %s398, %s399
    %p413 = scmp.eq.s32.totalorder %s29, 1
    %p414 = por %p412, %p413
    %p416 = scmp.ne.s32.totalorder %s399, %s415
    %p417 = scmp.eq.s32.totalorder %s29, 0
    %p418 = por %p416, %p417
    %p419 = scmp.le.s32.totalorder 1, %s23
    %p420 = scmp.lt.s32.totalorder %s23, 3
    %p421 = pnand %p419, %p420
    %p422 = pneg %p421
    // Predicated region
    $region9: #{transformer_forward.3} parent=5 // pred_check
      _
    $region10: #{transformer_forward.3} parent=5 // pred_check_branch
      %424 = sbr.rel (%p421) target = $region12
    $region11: #{transformer_forward.3} parent=5 // pred_region
      %s425 = ssub.s32 %s23, 1
      // Predicated region
      $region13: #{transformer_forward.3} parent=11 // pred_check
        %p426 = pneg %p70
      $region14: #{transformer_forward.3} parent=11 // pred_check_branch
        %428 = sbr.rel (%p426) target = $region16
      $region15: #{transformer_forward.3} parent=11 // pred_region
        _
      $region16: #{transformer_forward.3} parent=11 // pred_fallthru
        _
      // Predicated region
      $region17: #{transformer_forward.3} parent=11 // pred_check
        %p429 = pneg %p91
      $region18: #{transformer_forward.3} parent=11 // pred_check_branch
        %431 = sbr.rel (%p429) target = $region20
      $region19: #{transformer_forward.3} parent=11 // pred_region
        _
      $region20: #{transformer_forward.3} parent=11 // pred_fallthru
        _
      // Predicated region
      $region21: #{transformer_forward.3} parent=11 // pred_check
        %p432 = pneg %p112
      $region22: #{transformer_forward.3} parent=11 // pred_check_branch
        %434 = sbr.rel (%p432) target = $region24
      $region23: #{transformer_forward.3} parent=11 // pred_region
        _
      $region24: #{transformer_forward.3} parent=11 // pred_fallthru
        _
      // Predicated region
      $region25: #{transformer_forward.3} parent=11 // pred_check
        %p435 = pneg %p133
      $region26: #{transformer_forward.3} parent=11 // pred_check_branch
        %437 = sbr.rel (%p435) target = $region28
      $region27: #{transformer_forward.3} parent=11 // pred_region
        _
      $region28: #{transformer_forward.3} parent=11 // pred_fallthru
        _
      // Predicated region
      $region29: #{transformer_forward.3} parent=11 // pred_check
        %p438 = pneg %p154
      $region30: #{transformer_forward.3} parent=11 // pred_check_branch
        %440 = sbr.rel (%p438) target = $region32
      $region31: #{transformer_forward.3} parent=11 // pred_region
        _
      $region32: #{transformer_forward.3} parent=11 // pred_fallthru
        _
      // Predicated region
      $region33: #{transformer_forward.3} parent=11 // pred_check
        %p441 = pneg %p175
      $region34: #{transformer_forward.3} parent=11 // pred_check_branch
        %443 = sbr.rel (%p441) target = $region36
      $region35: #{transformer_forward.3} parent=11 // pred_region
        _
      $region36: #{transformer_forward.3} parent=11 // pred_fallthru
        _
      // Predicated region
      $region37: #{transformer_forward.3} parent=11 // pred_check
        %p444 = pneg %p196
      $region38: #{transformer_forward.3} parent=11 // pred_check_branch
        %446 = sbr.rel (%p444) target = $region40
      $region39: #{transformer_forward.3} parent=11 // pred_region
        _
      $region40: #{transformer_forward.3} parent=11 // pred_fallthru
        _
      // Predicated region
      $region41: #{transformer_forward.3} parent=11 // pred_check
        %p447 = pneg %p217
      $region42: #{transformer_forward.3} parent=11 // pred_check_branch
        %449 = sbr.rel (%p447) target = $region44
      $region43: #{transformer_forward.3} parent=11 // pred_region
        _
      $region44: #{transformer_forward.3} parent=11 // pred_fallthru
        _
      // Predicated region
      $region45: #{transformer_forward.3} parent=11 // pred_check
        %p450 = pneg %p238
      $region46: #{transformer_forward.3} parent=11 // pred_check_branch
        %452 = sbr.rel (%p450) target = $region48
      $region47: #{transformer_forward.3} parent=11 // pred_region
        _
      $region48: #{transformer_forward.3} parent=11 // pred_fallthru
        _
      // Predicated region
      $region49: #{transformer_forward.3} parent=11 // pred_check
        %p453 = pneg %p259
      $region50: #{transformer_forward.3} parent=11 // pred_check_branch
        %455 = sbr.rel (%p453) target = $region52
      $region51: #{transformer_forward.3} parent=11 // pred_region
        _
      $region52: #{transformer_forward.3} parent=11 // pred_fallthru
        _
      // Predicated region
      $region53: #{transformer_forward.3} parent=11 // pred_check
        %p456 = pneg %p280
      $region54: #{transformer_forward.3} parent=11 // pred_check_branch
        %458 = sbr.rel (%p456) target = $region56
      $region55: #{transformer_forward.3} parent=11 // pred_region
        _
      $region56: #{transformer_forward.3} parent=11 // pred_fallthru
        _
      // Predicated region
      $region57: #{transformer_forward.3} parent=11 // pred_check
        %p459 = pneg %p301
      $region58: #{transformer_forward.3} parent=11 // pred_check_branch
        %461 = sbr.rel (%p459) target = $region60
      $region59: #{transformer_forward.3} parent=11 // pred_region
        _
      $region60: #{transformer_forward.3} parent=11 // pred_fallthru
        _
      // Predicated region
      $region61: #{transformer_forward.3} parent=11 // pred_check
        %p462 = pneg %p322
      $region62: #{transformer_forward.3} parent=11 // pred_check_branch
        %464 = sbr.rel (%p462) target = $region64
      $region63: #{transformer_forward.3} parent=11 // pred_region
        _
      $region64: #{transformer_forward.3} parent=11 // pred_fallthru
        _
      // Predicated region
      $region65: #{transformer_forward.3} parent=11 // pred_check
        %p465 = pneg %p343
      $region66: #{transformer_forward.3} parent=11 // pred_check_branch
        %467 = sbr.rel (%p465) target = $region68
      $region67: #{transformer_forward.3} parent=11 // pred_region
        _
      $region68: #{transformer_forward.3} parent=11 // pred_fallthru
        _
      // Predicated region
      $region69: #{transformer_forward.3} parent=11 // pred_check
        %p468 = pneg %p364
      $region70: #{transformer_forward.3} parent=11 // pred_check_branch
        %470 = sbr.rel (%p468) target = $region72
      $region71: #{transformer_forward.3} parent=11 // pred_region
        _
      $region72: #{transformer_forward.3} parent=11 // pred_fallthru
        _
      // Predicated region
      $region73: #{transformer_forward.3} parent=11 // pred_check
        %p471 = pneg %p385
      $region74: #{transformer_forward.3} parent=11 // pred_check_branch
        %473 = sbr.rel (%p471) target = $region76
      $region75: #{transformer_forward.3} parent=11 // pred_region
        _
      $region76: #{transformer_forward.3} parent=11 // pred_fallthru
        _
    $region12: #{transformer_forward.3} parent=5 // pred_fallthru
      _
    %p474 = scmp.lt.s32.totalorder %s23, 2
    // Predicated region
    $region77: #{transformer_forward.3} parent=5 // pred_check
      %p475 = pneg %p474
    $region78: #{transformer_forward.3} parent=5 // pred_check_branch
      %477 = sbr.rel (%p475) target = $region80
    $region79: #{transformer_forward.3} parent=5 // pred_region
      // Predicated region
      $region81: #{transformer_forward.3} parent=79 // pred_check
        %p478 = pneg %p43
      $region82: #{transformer_forward.3} parent=79 // pred_check_branch
        %480 = sbr.rel (%p478) target = $region84
      $region83: #{transformer_forward.3} parent=79 // pred_region
        %p481 = scmp.lt.s32.totalorder %s23, 1
        %s482 = scalar_select %p481, %s23, 1
        %s483 = smul.addr %s482, 32
        %s484 = smul.addr %s483, 8
        %s485 = scalar_lea.vmem %s0, %s484
      $region84: #{transformer_forward.3} parent=79 // pred_fallthru
        _
    $region80: #{transformer_forward.3} parent=5 // pred_fallthru
      _
    %p486 = scmp.le.s32.totalorder 1, %s23
    %p487 = scmp.lt.s32.totalorder %s23, 3
    %p488 = pnand %p486, %p487
    %p489 = pneg %p488
    // Predicated region
    $region85: #{transformer_forward.3} parent=5 // pred_check
      _
    $region86: #{transformer_forward.3} parent=5 // pred_check_branch
      %491 = sbr.rel (%p488) target = $region88
    $region87: #{transformer_forward.3} parent=5 // pred_region
      %s492 = ssub.s32 %s23, 1
      %p493 = scmp.lt.s32.totalorder %s28, 1
      %s494 = scalar_select %p493, %s28, 1
      %s495 = smul.addr %s494, 32
      %s496 = smul.addr %s495, 8
      %s497 = scalar_lea.vmem %s0, %s496
      %p498 = pneg %p49
      %p499 = pneg %p46
      %p500 = pneg %p70
      %p501 = pneg %p67
      %p502 = pneg %p91
      %p503 = pneg %p88
      %p504 = pneg %p112
      %p505 = pneg %p109
      %p506 = pneg %p133
      %p507 = pneg %p130
      %p508 = pneg %p154
      %p509 = pneg %p151
      %p510 = pneg %p175
      %p511 = pneg %p172
      %p512 = pneg %p196
      %p513 = pneg %p193
      %p514 = pneg %p217
      %p515 = pneg %p214
      %p516 = pneg %p238
      %p517 = pneg %p235
      %p518 = pneg %p259
      %p519 = pneg %p256
      %p520 = pneg %p280
      %p521 = pneg %p277
      %p522 = pneg %p301
      %p523 = pneg %p298
      %p524 = pneg %p322
      %p525 = pneg %p319
      %p526 = pneg %p343
      %p527 = pneg %p340
      %p528 = pneg %p364
      %p529 = pneg %p361
      %p530 = pneg %p385
      %p531 = pneg %p382
      %p532 = pneg %p411
      %p533 = pneg %p408
      %p534 = scmp.lt.s32.totalorder %s28, 1
      %s535 = scalar_select %p534, %s28, 1
      %s536 = smul.addr %s535, 32
      %s537 = smul.addr %s536, 8
      %s538 = scalar_lea.vmem %s17, %s537
      %p539 = scmp.lt.s32.totalorder %s28, 1
      %s540 = scalar_select %p539, %s28, 1
      %s541 = smul.addr %s540, 32
      %s542 = smul.addr %s541, 8
      %s543 = scalar_lea.vmem %s0, %s542
      %p544 = scmp.lt.s32.totalorder %s28, 1
      %s545 = scalar_select %p544, %s28, 1
      %s546 = smul.addr %s545, 32
      %s547 = smul.addr %s546, 8
      %s548 = scalar_lea.vmem %s17, %s547
      %v549 = vld [vmem:[%s543] sm:$0xff]
      %v550 = vld [vmem:[%s543 + $0x8] sm:$0xff]
      %v551 = vld [vmem:[%s543 + $0x10] sm:$0xff]
      %v552 = vld [vmem:[%s543 + $0x18] sm:$0xff]
      %v553 = vld [vmem:[%s543 + $0x20] sm:$0xff]
      %v554 = vld [vmem:[%s543 + $0x28] sm:$0xff]
      %v555 = vld [vmem:[%s543 + $0x30] sm:$0xff]
      %v556 = vld [vmem:[%s543 + $0x38] sm:$0xff]
      %v557 = vld [vmem:[%s543 + $0x40] sm:$0xff]
      %v558 = vld [vmem:[%s543 + $0x48] sm:$0xff]
      %v559 = vld [vmem:[%s543 + $0x50] sm:$0xff]
      %v560 = vld [vmem:[%s543 + $0x58] sm:$0xff]
      %v561 = vld [vmem:[%s543 + $0x60] sm:$0xff]
      %v562 = vld [vmem:[%s543 + $0x68] sm:$0xff]
      %v563 = vld [vmem:[%s543 + $0x70] sm:$0xff]
      %v564 = vld [vmem:[%s543 + $0x78] sm:$0xff]
      %v565 = vld [vmem:[%s543 + $0x80] sm:$0xff]
      %v566 = vld [vmem:[%s543 + $0x88] sm:$0xff]
      %v567 = vld [vmem:[%s543 + $0x90] sm:$0xff]
      %v568 = vld [vmem:[%s543 + $0x98] sm:$0xff]
      %v569 = vld [vmem:[%s543 + $0xa0] sm:$0xff]
      %v570 = vld [vmem:[%s543 + $0xa8] sm:$0xff]
      %v571 = vld [vmem:[%s543 + $0xb0] sm:$0xff]
      %v572 = vld [vmem:[%s543 + $0xb8] sm:$0xff]
      %v573 = vld [vmem:[%s543 + $0xc0] sm:$0xff]
      %v574 = vld [vmem:[%s543 + $0xc8] sm:$0xff]
      %v575 = vld [vmem:[%s543 + $0xd0] sm:$0xff]
      %v576 = vld [vmem:[%s543 + $0xd8] sm:$0xff]
      %v577 = vld [vmem:[%s543 + $0xe0] sm:$0xff]
      %v578 = vld [vmem:[%s543 + $0xe8] sm:$0xff]
      %v579 = vld [vmem:[%s543 + $0xf0] sm:$0xff]
      %v580 = vld [vmem:[%s543 + $0xf8] sm:$0xff]
      %v581 = vpack.c.bf16 %v551, %v549
      %v582 = vpack.c.bf16 %v552, %v550
      %v583 = vpack.c.bf16 %v555, %v553
      %v584 = vpack.c.bf16 %v556, %v554
      %v585 = vpack.c.bf16 %v559, %v557
      %v586 = vpack.c.bf16 %v560, %v558
      %v587 = vpack.c.bf16 %v563, %v561
      %v588 = vpack.c.bf16 %v564, %v562
      %v589 = vpack.c.bf16 %v567, %v565
      %v590 = vpack.c.bf16 %v568, %v566
      %v591 = vpack.c.bf16 %v571, %v569
      %v592 = vpack.c.bf16 %v572, %v570
      %v593 = vpack.c.bf16 %v575, %v573
      %v594 = vpack.c.bf16 %v576, %v574
      %v595 = vpack.c.bf16 %v579, %v577
      %v596 = vpack.c.bf16 %v580, %v578
      %v597 = vld [vmem:[%s1] sm:$0xff]
      %v598 = vld [vmem:[%s1 + $0x8] sm:$0xff]
      %v599 = vld [vmem:[%s1 + $0x10] sm:$0xff]
      %v600 = vld [vmem:[%s1 + $0x18] sm:$0xff]
      %v601 = vld [vmem:[%s1 + $0x20] sm:$0xff]
      %v602 = vld [vmem:[%s1 + $0x28] sm:$0xff]
      %v603 = vld [vmem:[%s1 + $0x30] sm:$0xff]
      %v604 = vld [vmem:[%s1 + $0x38] sm:$0xff]
      %v605 = vld [vmem:[%s1 + $0x40] sm:$0xff]
      %v606 = vld [vmem:[%s1 + $0x48] sm:$0xff]
      %v607 = vld [vmem:[%s1 + $0x50] sm:$0xff]
      %v608 = vld [vmem:[%s1 + $0x58] sm:$0xff]
      %v609 = vld [vmem:[%s1 + $0x60] sm:$0xff]
      %v610 = vld [vmem:[%s1 + $0x68] sm:$0xff]
      %v611 = vld [vmem:[%s1 + $0x70] sm:$0xff]
      %v612 = vld [vmem:[%s1 + $0x78] sm:$0xff]
      %v613 = vld [vmem:[%s1 + $0x80] sm:$0xff]
      %v614 = vld [vmem:[%s1 + $0x88] sm:$0xff]
      %v615 = vld [vmem:[%s1 + $0x90] sm:$0xff]
      %v616 = vld [vmem:[%s1 + $0x98] sm:$0xff]
      %v617 = vld [vmem:[%s1 + $0xa0] sm:$0xff]
      %v618 = vld [vmem:[%s1 + $0xa8] sm:$0xff]
      %v619 = vld [vmem:[%s1 + $0xb0] sm:$0xff]
      %v620 = vld [vmem:[%s1 + $0xb8] sm:$0xff]
      %v621 = vld [vmem:[%s1 + $0xc0] sm:$0xff]
      %v622 = vld [vmem:[%s1 + $0xc8] sm:$0xff]
      %v623 = vld [vmem:[%s1 + $0xd0] sm:$0xff]
      %v624 = vld [vmem:[%s1 + $0xd8] sm:$0xff]
      %v625 = vld [vmem:[%s1 + $0xe0] sm:$0xff]
      %v626 = vld [vmem:[%s1 + $0xe8] sm:$0xff]
      %v627 = vld [vmem:[%s1 + $0xf0] sm:$0xff]
      %v628 = vld [vmem:[%s1 + $0xf8] sm:$0xff]
      %v629 = vld [vmem:[%s4] sm:$0x3]
      %v631 = vperm.slane %v629, 0
      %v632 = vperm.slane %v629, 1
      %v667 = vunpack.c.l.b16 %v597
      %v668 = vunpack.c.h.b16 %v597
      %v669 = vunpack.c.l.b16 %v598
      %v670 = vunpack.c.h.b16 %v598
      %v671 = vunpack.c.l.b16 %v599
      %v672 = vunpack.c.h.b16 %v599
      %v673 = vunpack.c.l.b16 %v600
      %v674 = vunpack.c.h.b16 %v600
      %v675 = vunpack.c.l.b16 %v601
      %v676 = vunpack.c.h.b16 %v601
      %v677 = vunpack.c.l.b16 %v602
      %v678 = vunpack.c.h.b16 %v602
      %v679 = vunpack.c.l.b16 %v603
      %v680 = vunpack.c.h.b16 %v603
      %v681 = vunpack.c.l.b16 %v604
      %v682 = vunpack.c.h.b16 %v604
      %v683 = vunpack.c.l.b16 %v605
      %v684 = vunpack.c.h.b16 %v605
      %v685 = vunpack.c.l.b16 %v606
      %v686 = vunpack.c.h.b16 %v606
      %v687 = vunpack.c.l.b16 %v607
      %v688 = vunpack.c.h.b16 %v607
      %v689 = vunpack.c.l.b16 %v608
      %v690 = vunpack.c.h.b16 %v608
      %v691 = vunpack.c.l.b16 %v609
      %v692 = vunpack.c.h.b16 %v609
      %v693 = vunpack.c.l.b16 %v610
      %v694 = vunpack.c.h.b16 %v610
      %v695 = vunpack.c.l.b16 %v611
      %v696 = vunpack.c.h.b16 %v611
      %v697 = vunpack.c.l.b16 %v612
      %v698 = vunpack.c.h.b16 %v612
      %v699 = vunpack.c.l.b16 %v613
      %v700 = vunpack.c.h.b16 %v613
      %v701 = vunpack.c.l.b16 %v614
      %v702 = vunpack.c.h.b16 %v614
      %v703 = vunpack.c.l.b16 %v615
      %v704 = vunpack.c.h.b16 %v615
      %v705 = vunpack.c.l.b16 %v616
      %v706 = vunpack.c.h.b16 %v616
      %v707 = vunpack.c.l.b16 %v617
      %v708 = vunpack.c.h.b16 %v617
      %v709 = vunpack.c.l.b16 %v618
      %v710 = vunpack.c.h.b16 %v618
      %v711 = vunpack.c.l.b16 %v619
      %v712 = vunpack.c.h.b16 %v619
      %v713 = vunpack.c.l.b16 %v620
      %v714 = vunpack.c.h.b16 %v620
      %v715 = vunpack.c.l.b16 %v621
      %v716 = vunpack.c.h.b16 %v621
      %v717 = vunpack.c.l.b16 %v622
      %v718 = vunpack.c.h.b16 %v622
      %v719 = vunpack.c.l.b16 %v623
      %v720 = vunpack.c.h.b16 %v623
      %v721 = vunpack.c.l.b16 %v624
      %v722 = vunpack.c.h.b16 %v624
      %v723 = vunpack.c.l.b16 %v625
      %v724 = vunpack.c.h.b16 %v625
      %v725 = vunpack.c.l.b16 %v626
      %v726 = vunpack.c.h.b16 %v626
      %v727 = vunpack.c.l.b16 %v627
      %v728 = vunpack.c.h.b16 %v627
      %v729 = vunpack.c.l.b16 %v628
      %v730 = vunpack.c.h.b16 %v628
      %v731 = vpack.c.b16 %v669, %v667
      %v732 = vpack.c.b16 %v670, %v668
      %v733 = vpack.c.b16 %v673, %v671
      %v734 = vpack.c.b16 %v674, %v672
      %v735 = vpack.c.b16 %v677, %v675
      %v736 = vpack.c.b16 %v678, %v676
      %v737 = vpack.c.b16 %v681, %v679
      %v738 = vpack.c.b16 %v682, %v680
      %v739 = vpack.c.b16 %v685, %v683
      %v740 = vpack.c.b16 %v686, %v684
      %v741 = vpack.c.b16 %v689, %v687
      %v742 = vpack.c.b16 %v690, %v688
      %v743 = vpack.c.b16 %v693, %v691
      %v744 = vpack.c.b16 %v694, %v692
      %v745 = vpack.c.b16 %v697, %v695
      %v746 = vpack.c.b16 %v698, %v696
      %v747 = vpack.c.b16 %v701, %v699
      %v748 = vpack.c.b16 %v702, %v700
      %v749 = vpack.c.b16 %v705, %v703
      %v750 = vpack.c.b16 %v706, %v704
      %v751 = vpack.c.b16 %v709, %v707
      %v752 = vpack.c.b16 %v710, %v708
      %v753 = vpack.c.b16 %v713, %v711
      %v754 = vpack.c.b16 %v714, %v712
      %v755 = vpack.c.b16 %v717, %v715
      %v756 = vpack.c.b16 %v718, %v716
      %v757 = vpack.c.b16 %v721, %v719
      %v758 = vpack.c.b16 %v722, %v720
      %v759 = vpack.c.b16 %v725, %v723
      %v760 = vpack.c.b16 %v726, %v724
      %v761 = vpack.c.b16 %v729, %v727
      %v762 = vpack.c.b16 %v730, %v728
      %795 = vmatpush.bf16.msra.mxu0 %v745
      %796 = vmatpush.bf16.msra.mxu0 %v743
      %797 = vmatpush.bf16.msra.mxu0 %v741
      %798 = vmatpush.bf16.msra.mxu0 %v739
      %799 = vmatpush.bf16.msra.mxu0 %v737
      %800 = vmatpush.bf16.msra.mxu0 %v735
      %801 = vmatpush.bf16.msra.mxu0 %v733
      %802 = vmatpush.bf16.msra.mxu0 %v731
      %803 = vmatmul.bf16.gmra.mxu0 %v581
      %v804 = vpop.f32.mrf.mxu0
      %v805 = vadd.f32 %v631, %v804
      %v806 = vpop.f32.mrf.mxu0
      %v807 = vadd.f32 %v631, %v806
      %808 = vmatmul.bf16.gmra.mxu0 %v583
      %v809 = vpop.f32.mrf.mxu0
      %v810 = vadd.f32 %v631, %v809
      %v811 = vpop.f32.mrf.mxu0
      %v812 = vadd.f32 %v631, %v811
      %813 = vmatmul.bf16.gmra.mxu0 %v585
      %v814 = vpop.f32.mrf.mxu0
      %v815 = vadd.f32 %v631, %v814
      %v816 = vpop.f32.mrf.mxu0
      %v817 = vadd.f32 %v631, %v816
      %818 = vmatmul.bf16.gmra.mxu0 %v587
      %v819 = vpop.f32.mrf.mxu0
      %v820 = vadd.f32 %v631, %v819
      %v821 = vpop.f32.mrf.mxu0
      %v822 = vadd.f32 %v631, %v821
      %823 = vmatmul.bf16.gmra.mxu0 %v589
      %v824 = vpop.f32.mrf.mxu0
      %v825 = vadd.f32 %v631, %v824
      %v826 = vpop.f32.mrf.mxu0
      %v827 = vadd.f32 %v631, %v826
      %828 = vmatmul.bf16.gmra.mxu0 %v591
      %v829 = vpop.f32.mrf.mxu0
      %v830 = vadd.f32 %v631, %v829
      %v831 = vpop.f32.mrf.mxu0
      %v832 = vadd.f32 %v631, %v831
      %833 = vmatmul.bf16.gmra.mxu0 %v593
      %v834 = vpop.f32.mrf.mxu0
      %v835 = vadd.f32 %v631, %v834
      %v836 = vpop.f32.mrf.mxu0
      %v837 = vadd.f32 %v631, %v836
      %838 = vmatmul.bf16.gmra.mxu0 %v595
      %v839 = vpop.f32.mrf.mxu0
      %v840 = vadd.f32 %v631, %v839
      %v841 = vpop.f32.mrf.mxu0
      %v842 = vadd.f32 %v631, %v841
      %843 = vdwg.mxu0
      %844 = vmatpush.bf16.msra.mxu0 %v761
      %845 = vmatpush.bf16.msra.mxu0 %v759
      %846 = vmatpush.bf16.msra.mxu0 %v757
      %847 = vmatpush.bf16.msra.mxu0 %v755
      %848 = vmatpush.bf16.msra.mxu0 %v753
      %849 = vmatpush.bf16.msra.mxu0 %v751
      %850 = vmatpush.bf16.msra.mxu0 %v749
      %851 = vmatpush.bf16.msra.mxu0 %v747
      %852 = vmatmul.bf16.gmra.mxu0 %v582
      %v853 = vpop.f32.mrf.mxu0
      %v854 = vadd.f32 %v805, %v853
      %v855 = vpop.f32.mrf.mxu0
      %v856 = vadd.f32 %v807, %v855
      %857 = vmatmul.bf16.gmra.mxu0 %v584
      %v858 = vpop.f32.mrf.mxu0
      %v859 = vadd.f32 %v810, %v858
      %v860 = vpop.f32.mrf.mxu0
      %v861 = vadd.f32 %v812, %v860
      %862 = vmatmul.bf16.gmra.mxu0 %v586
      %v863 = vpop.f32.mrf.mxu0
      %v864 = vadd.f32 %v815, %v863
      %v865 = vpop.f32.mrf.mxu0
      %v866 = vadd.f32 %v817, %v865
      %867 = vmatmul.bf16.gmra.mxu0 %v588
      %v868 = vpop.f32.mrf.mxu0
      %v869 = vadd.f32 %v820, %v868
      %v870 = vpop.f32.mrf.mxu0
      %v871 = vadd.f32 %v822, %v870
      %872 = vmatmul.bf16.gmra.mxu0 %v590
      %v873 = vpop.f32.mrf.mxu0
      %v874 = vadd.f32 %v825, %v873
      %v875 = vpop.f32.mrf.mxu0
      %v876 = vadd.f32 %v827, %v875
      %877 = vmatmul.bf16.gmra.mxu0 %v592
      %v878 = vpop.f32.mrf.mxu0
      %v879 = vadd.f32 %v830, %v878
      %v880 = vpop.f32.mrf.mxu0
      %v881 = vadd.f32 %v832, %v880
      %882 = vmatmul.bf16.gmra.mxu0 %v594
      %v883 = vpop.f32.mrf.mxu0
      %v884 = vadd.f32 %v835, %v883
      %v885 = vpop.f32.mrf.mxu0
      %v886 = vadd.f32 %v837, %v885
      %887 = vmatmul.bf16.gmra.mxu0 %v596
      %v888 = vpop.f32.mrf.mxu0
      %v889 = vadd.f32 %v840, %v888
      %v890 = vpop.f32.mrf.mxu0
      %v891 = vadd.f32 %v842, %v890
      %892 = vdwg.mxu0
      %893 = vmatpush.bf16.msra.mxu0 %v746
      %894 = vmatpush.bf16.msra.mxu0 %v744
      %895 = vmatpush.bf16.msra.mxu0 %v742
      %896 = vmatpush.bf16.msra.mxu0 %v740
      %897 = vmatpush.bf16.msra.mxu0 %v738
      %898 = vmatpush.bf16.msra.mxu0 %v736
      %899 = vmatpush.bf16.msra.mxu0 %v734
      %900 = vmatpush.bf16.msra.mxu0 %v732
      %901 = vmatmul.bf16.gmra.mxu0 %v581
      %v902 = vpop.f32.mrf.mxu0
      %v903 = vadd.f32 %v632, %v902
      %v904 = vpop.f32.mrf.mxu0
      %v905 = vadd.f32 %v632, %v904
      %906 = vmatmul.bf16.gmra.mxu0 %v583
      %v907 = vpop.f32.mrf.mxu0
      %v908 = vadd.f32 %v632, %v907
      %v909 = vpop.f32.mrf.mxu0
      %v910 = vadd.f32 %v632, %v909
      %911 = vmatmul.bf16.gmra.mxu0 %v585
      %v912 = vpop.f32.mrf.mxu0
      %v913 = vadd.f32 %v632, %v912
      %v914 = vpop.f32.mrf.mxu0
      %v915 = vadd.f32 %v632, %v914
      %916 = vmatmul.bf16.gmra.mxu0 %v587
      %v917 = vpop.f32.mrf.mxu0
      %v918 = vadd.f32 %v632, %v917
      %v919 = vpop.f32.mrf.mxu0
      %v920 = vadd.f32 %v632, %v919
      %921 = vmatmul.bf16.gmra.mxu0 %v589
      %v922 = vpop.f32.mrf.mxu0
      %v923 = vadd.f32 %v632, %v922
      %v924 = vpop.f32.mrf.mxu0
      %v925 = vadd.f32 %v632, %v924
      %926 = vmatmul.bf16.gmra.mxu0 %v591
      %v927 = vpop.f32.mrf.mxu0
      %v928 = vadd.f32 %v632, %v927
      %v929 = vpop.f32.mrf.mxu0
      %v930 = vadd.f32 %v632, %v929
      %931 = vmatmul.bf16.gmra.mxu0 %v593
      %v932 = vpop.f32.mrf.mxu0
      %v933 = vadd.f32 %v632, %v932
      %v934 = vpop.f32.mrf.mxu0
      %v935 = vadd.f32 %v632, %v934
      %936 = vmatmul.bf16.gmra.mxu0 %v595
      %v937 = vpop.f32.mrf.mxu0
      %v938 = vadd.f32 %v632, %v937
      %v939 = vpop.f32.mrf.mxu0
      %v940 = vadd.f32 %v632, %v939
      %941 = vdwg.mxu0
      %942 = vmatpush.bf16.msra.mxu0 %v762
      %943 = vmatpush.bf16.msra.mxu0 %v760
      %944 = vmatpush.bf16.msra.mxu0 %v758
      %945 = vmatpush.bf16.msra.mxu0 %v756
      %946 = vmatpush.bf16.msra.mxu0 %v754
      %947 = vmatpush.bf16.msra.mxu0 %v752
      %948 = vmatpush.bf16.msra.mxu0 %v750
      %949 = vmatpush.bf16.msra.mxu0 %v748
      %950 = vmatmul.bf16.gmra.mxu0 %v582
      %v951 = vpop.f32.mrf.mxu0
      %v952 = vadd.f32 %v903, %v951
      %v953 = vpop.f32.mrf.mxu0
      %v954 = vadd.f32 %v905, %v953
      %955 = vmatmul.bf16.gmra.mxu0 %v584
      %v956 = vpop.f32.mrf.mxu0
      %v957 = vadd.f32 %v908, %v956
      %v958 = vpop.f32.mrf.mxu0
      %v959 = vadd.f32 %v910, %v958
      %960 = vmatmul.bf16.gmra.mxu0 %v586
      %v961 = vpop.f32.mrf.mxu0
      %v962 = vadd.f32 %v913, %v961
      %v963 = vpop.f32.mrf.mxu0
      %v964 = vadd.f32 %v915, %v963
      %965 = vmatmul.bf16.gmra.mxu0 %v588
      %v966 = vpop.f32.mrf.mxu0
      %v967 = vadd.f32 %v918, %v966
      %v968 = vpop.f32.mrf.mxu0
      %v969 = vadd.f32 %v920, %v968
      %970 = vmatmul.bf16.gmra.mxu0 %v590
      %v971 = vpop.f32.mrf.mxu0
      %v972 = vadd.f32 %v923, %v971
      %v973 = vpop.f32.mrf.mxu0
      %v974 = vadd.f32 %v925, %v973
      %975 = vmatmul.bf16.gmra.mxu0 %v592
      %v976 = vpop.f32.mrf.mxu0
      %v977 = vadd.f32 %v928, %v976
      %v978 = vpop.f32.mrf.mxu0
      %v979 = vadd.f32 %v930, %v978
      %980 = vmatmul.bf16.gmra.mxu0 %v594
      %v981 = vpop.f32.mrf.mxu0
      %v982 = vadd.f32 %v933, %v981
      %v983 = vpop.f32.mrf.mxu0
      %v984 = vadd.f32 %v935, %v983
      %985 = vmatmul.bf16.gmra.mxu0 %v596
      %v986 = vpop.f32.mrf.mxu0
      %v987 = vadd.f32 %v938, %v986
      %v988 = vpop.f32.mrf.mxu0
      %v989 = vadd.f32 %v940, %v988
      %990 = vdwg.mxu0
      %v991 = vld [vmem:[%s2] sm:$0xff]
      %v992 = vld [vmem:[%s2 + $0x8] sm:$0xff]
      %v993 = vld [vmem:[%s2 + $0x10] sm:$0xff]
      %v994 = vld [vmem:[%s2 + $0x18] sm:$0xff]
      %v995 = vld [vmem:[%s2 + $0x20] sm:$0xff]
      %v996 = vld [vmem:[%s2 + $0x28] sm:$0xff]
      %v997 = vld [vmem:[%s2 + $0x30] sm:$0xff]
      %v998 = vld [vmem:[%s2 + $0x38] sm:$0xff]
      %v999 = vld [vmem:[%s2 + $0x40] sm:$0xff]
      %v1000 = vld [vmem:[%s2 + $0x48] sm:$0xff]
      %v1001 = vld [vmem:[%s2 + $0x50] sm:$0xff]
      %v1002 = vld [vmem:[%s2 + $0x58] sm:$0xff]
      %v1003 = vld [vmem:[%s2 + $0x60] sm:$0xff]
      %v1004 = vld [vmem:[%s2 + $0x68] sm:$0xff]
      %v1005 = vld [vmem:[%s2 + $0x70] sm:$0xff]
      %v1006 = vld [vmem:[%s2 + $0x78] sm:$0xff]
      %v1007 = vld [vmem:[%s2 + $0x80] sm:$0xff]
      %v1008 = vld [vmem:[%s2 + $0x88] sm:$0xff]
      %v1009 = vld [vmem:[%s2 + $0x90] sm:$0xff]
      %v1010 = vld [vmem:[%s2 + $0x98] sm:$0xff]
      %v1011 = vld [vmem:[%s2 + $0xa0] sm:$0xff]
      %v1012 = vld [vmem:[%s2 + $0xa8] sm:$0xff]
      %v1013 = vld [vmem:[%s2 + $0xb0] sm:$0xff]
      %v1014 = vld [vmem:[%s2 + $0xb8] sm:$0xff]
      %v1015 = vld [vmem:[%s2 + $0xc0] sm:$0xff]
      %v1016 = vld [vmem:[%s2 + $0xc8] sm:$0xff]
      %v1017 = vld [vmem:[%s2 + $0xd0] sm:$0xff]
      %v1018 = vld [vmem:[%s2 + $0xd8] sm:$0xff]
      %v1019 = vld [vmem:[%s2 + $0xe0] sm:$0xff]
      %v1020 = vld [vmem:[%s2 + $0xe8] sm:$0xff]
      %v1021 = vld [vmem:[%s2 + $0xf0] sm:$0xff]
      %v1022 = vld [vmem:[%s2 + $0xf8] sm:$0xff]
      %v1023 = vld [vmem:[%s5] sm:$0x3]
      %v1025 = vperm.slane %v1023, 0
      %v1026 = vperm.slane %v1023, 1
      %v1061 = vunpack.c.l.b16 %v991
      %v1062 = vunpack.c.h.b16 %v991
      %v1063 = vunpack.c.l.b16 %v992
      %v1064 = vunpack.c.h.b16 %v992
      %v1065 = vunpack.c.l.b16 %v993
      %v1066 = vunpack.c.h.b16 %v993
      %v1067 = vunpack.c.l.b16 %v994
      %v1068 = vunpack.c.h.b16 %v994
      %v1069 = vunpack.c.l.b16 %v995
      %v1070 = vunpack.c.h.b16 %v995
      %v1071 = vunpack.c.l.b16 %v996
      %v1072 = vunpack.c.h.b16 %v996
      %v1073 = vunpack.c.l.b16 %v997
      %v1074 = vunpack.c.h.b16 %v997
      %v1075 = vunpack.c.l.b16 %v998
      %v1076 = vunpack.c.h.b16 %v998
      %v1077 = vunpack.c.l.b16 %v999
      %v1078 = vunpack.c.h.b16 %v999
      %v1079 = vunpack.c.l.b16 %v1000
      %v1080 = vunpack.c.h.b16 %v1000
      %v1081 = vunpack.c.l.b16 %v1001
      %v1082 = vunpack.c.h.b16 %v1001
      %v1083 = vunpack.c.l.b16 %v1002
      %v1084 = vunpack.c.h.b16 %v1002
      %v1085 = vunpack.c.l.b16 %v1003
      %v1086 = vunpack.c.h.b16 %v1003
      %v1087 = vunpack.c.l.b16 %v1004
      %v1088 = vunpack.c.h.b16 %v1004
      %v1089 = vunpack.c.l.b16 %v1005
      %v1090 = vunpack.c.h.b16 %v1005
      %v1091 = vunpack.c.l.b16 %v1006
      %v1092 = vunpack.c.h.b16 %v1006
      %v1093 = vunpack.c.l.b16 %v1007
      %v1094 = vunpack.c.h.b16 %v1007
      %v1095 = vunpack.c.l.b16 %v1008
      %v1096 = vunpack.c.h.b16 %v1008
      %v1097 = vunpack.c.l.b16 %v1009
      %v1098 = vunpack.c.h.b16 %v1009
      %v1099 = vunpack.c.l.b16 %v1010
      %v1100 = vunpack.c.h.b16 %v1010
      %v1101 = vunpack.c.l.b16 %v1011
      %v1102 = vunpack.c.h.b16 %v1011
      %v1103 = vunpack.c.l.b16 %v1012
      %v1104 = vunpack.c.h.b16 %v1012
      %v1105 = vunpack.c.l.b16 %v1013
      %v1106 = vunpack.c.h.b16 %v1013
      %v1107 = vunpack.c.l.b16 %v1014
      %v1108 = vunpack.c.h.b16 %v1014
      %v1109 = vunpack.c.l.b16 %v1015
      %v1110 = vunpack.c.h.b16 %v1015
      %v1111 = vunpack.c.l.b16 %v1016
      %v1112 = vunpack.c.h.b16 %v1016
      %v1113 = vunpack.c.l.b16 %v1017
      %v1114 = vunpack.c.h.b16 %v1017
      %v1115 = vunpack.c.l.b16 %v1018
      %v1116 = vunpack.c.h.b16 %v1018
      %v1117 = vunpack.c.l.b16 %v1019
      %v1118 = vunpack.c.h.b16 %v1019
      %v1119 = vunpack.c.l.b16 %v1020
      %v1120 = vunpack.c.h.b16 %v1020
      %v1121 = vunpack.c.l.b16 %v1021
      %v1122 = vunpack.c.h.b16 %v1021
      %v1123 = vunpack.c.l.b16 %v1022
      %v1124 = vunpack.c.h.b16 %v1022
      %v1125 = vpack.c.b16 %v1063, %v1061
      %v1126 = vpack.c.b16 %v1064, %v1062
      %v1127 = vpack.c.b16 %v1067, %v1065
      %v1128 = vpack.c.b16 %v1068, %v1066
      %v1129 = vpack.c.b16 %v1071, %v1069
      %v1130 = vpack.c.b16 %v1072, %v1070
      %v1131 = vpack.c.b16 %v1075, %v1073
      %v1132 = vpack.c.b16 %v1076, %v1074
      %v1133 = vpack.c.b16 %v1079, %v1077
      %v1134 = vpack.c.b16 %v1080, %v1078
      %v1135 = vpack.c.b16 %v1083, %v1081
      %v1136 = vpack.c.b16 %v1084, %v1082
      %v1137 = vpack.c.b16 %v1087, %v1085
      %v1138 = vpack.c.b16 %v1088, %v1086
      %v1139 = vpack.c.b16 %v1091, %v1089
      %v1140 = vpack.c.b16 %v1092, %v1090
      %v1141 = vpack.c.b16 %v1095, %v1093
      %v1142 = vpack.c.b16 %v1096, %v1094
      %v1143 = vpack.c.b16 %v1099, %v1097
      %v1144 = vpack.c.b16 %v1100, %v1098
      %v1145 = vpack.c.b16 %v1103, %v1101
      %v1146 = vpack.c.b16 %v1104, %v1102
      %v1147 = vpack.c.b16 %v1107, %v1105
      %v1148 = vpack.c.b16 %v1108, %v1106
      %v1149 = vpack.c.b16 %v1111, %v1109
      %v1150 = vpack.c.b16 %v1112, %v1110
      %v1151 = vpack.c.b16 %v1115, %v1113
      %v1152 = vpack.c.b16 %v1116, %v1114
      %v1153 = vpack.c.b16 %v1119, %v1117
      %v1154 = vpack.c.b16 %v1120, %v1118
      %v1155 = vpack.c.b16 %v1123, %v1121
      %v1156 = vpack.c.b16 %v1124, %v1122
      %1189 = vmatpush.bf16.msra.mxu0 %v1139
      %1190 = vmatpush.bf16.msra.mxu0 %v1137
      %1191 = vmatpush.bf16.msra.mxu0 %v1135
      %1192 = vmatpush.bf16.msra.mxu0 %v1133
      %1193 = vmatpush.bf16.msra.mxu0 %v1131
      %1194 = vmatpush.bf16.msra.mxu0 %v1129
      %1195 = vmatpush.bf16.msra.mxu0 %v1127
      %1196 = vmatpush.bf16.msra.mxu0 %v1125
      %1197 = vmatmul.bf16.gmra.mxu0 %v581
      %v1198 = vpop.f32.mrf.mxu0
      %v1199 = vadd.f32 %v1025, %v1198
      %v1200 = vpop.f32.mrf.mxu0
      %v1201 = vadd.f32 %v1025, %v1200
      %1202 = vmatmul.bf16.gmra.mxu0 %v583
      %v1203 = vpop.f32.mrf.mxu0
      %v1204 = vadd.f32 %v1025, %v1203
      %v1205 = vpop.f32.mrf.mxu0
      %v1206 = vadd.f32 %v1025, %v1205
      %1207 = vmatmul.bf16.gmra.mxu0 %v585
      %v1208 = vpop.f32.mrf.mxu0
      %v1209 = vadd.f32 %v1025, %v1208
      %v1210 = vpop.f32.mrf.mxu0
      %v1211 = vadd.f32 %v1025, %v1210
      %1212 = vmatmul.bf16.gmra.mxu0 %v587
      %v1213 = vpop.f32.mrf.mxu0
      %v1214 = vadd.f32 %v1025, %v1213
      %v1215 = vpop.f32.mrf.mxu0
      %v1216 = vadd.f32 %v1025, %v1215
      %1217 = vmatmul.bf16.gmra.mxu0 %v589
      %v1218 = vpop.f32.mrf.mxu0
      %v1219 = vadd.f32 %v1025, %v1218
      %v1220 = vpop.f32.mrf.mxu0
      %v1221 = vadd.f32 %v1025, %v1220
      %1222 = vmatmul.bf16.gmra.mxu0 %v591
      %v1223 = vpop.f32.mrf.mxu0
      %v1224 = vadd.f32 %v1025, %v1223
      %v1225 = vpop.f32.mrf.mxu0
      %v1226 = vadd.f32 %v1025, %v1225
      %1227 = vmatmul.bf16.gmra.mxu0 %v593
      %v1228 = vpop.f32.mrf.mxu0
      %v1229 = vadd.f32 %v1025, %v1228
      %v1230 = vpop.f32.mrf.mxu0
      %v1231 = vadd.f32 %v1025, %v1230
      %1232 = vmatmul.bf16.gmra.mxu0 %v595
      %v1233 = vpop.f32.mrf.mxu0
      %v1234 = vadd.f32 %v1025, %v1233
      %v1235 = vpop.f32.mrf.mxu0
      %v1236 = vadd.f32 %v1025, %v1235
      %1237 = vdwg.mxu0
      %1238 = vmatpush.bf16.msra.mxu0 %v1155
      %1239 = vmatpush.bf16.msra.mxu0 %v1153
      %1240 = vmatpush.bf16.msra.mxu0 %v1151
      %1241 = vmatpush.bf16.msra.mxu0 %v1149
      %1242 = vmatpush.bf16.msra.mxu0 %v1147
      %1243 = vmatpush.bf16.msra.mxu0 %v1145
      %1244 = vmatpush.bf16.msra.mxu0 %v1143
      %1245 = vmatpush.bf16.msra.mxu0 %v1141
      %1246 = vmatmul.bf16.gmra.mxu0 %v582
      %v1247 = vpop.f32.mrf.mxu0
      %v1248 = vadd.f32 %v1199, %v1247
      %v1249 = vpop.f32.mrf.mxu0
      %v1250 = vadd.f32 %v1201, %v1249
      %1251 = vmatmul.bf16.gmra.mxu0 %v584
      %v1252 = vpop.f32.mrf.mxu0
      %v1253 = vadd.f32 %v1204, %v1252
      %v1254 = vpop.f32.mrf.mxu0
      %v1255 = vadd.f32 %v1206, %v1254
      %1256 = vmatmul.bf16.gmra.mxu0 %v586
      %v1257 = vpop.f32.mrf.mxu0
      %v1258 = vadd.f32 %v1209, %v1257
      %v1259 = vpop.f32.mrf.mxu0
      %v1260 = vadd.f32 %v1211, %v1259
      %1261 = vmatmul.bf16.gmra.mxu0 %v588
      %v1262 = vpop.f32.mrf.mxu0
      %v1263 = vadd.f32 %v1214, %v1262
      %v1264 = vpop.f32.mrf.mxu0
      %v1265 = vadd.f32 %v1216, %v1264
      %1266 = vmatmul.bf16.gmra.mxu0 %v590
      %v1267 = vpop.f32.mrf.mxu0
      %v1268 = vadd.f32 %v1219, %v1267
      %v1269 = vpop.f32.mrf.mxu0
      %v1270 = vadd.f32 %v1221, %v1269
      %1271 = vmatmul.bf16.gmra.mxu0 %v592
      %v1272 = vpop.f32.mrf.mxu0
      %v1273 = vadd.f32 %v1224, %v1272
      %v1274 = vpop.f32.mrf.mxu0
      %v1275 = vadd.f32 %v1226, %v1274
      %1276 = vmatmul.bf16.gmra.mxu0 %v594
      %v1277 = vpop.f32.mrf.mxu0
      %v1278 = vadd.f32 %v1229, %v1277
      %v1279 = vpop.f32.mrf.mxu0
      %v1280 = vadd.f32 %v1231, %v1279
      %1281 = vmatmul.bf16.gmra.mxu0 %v596
      %v1282 = vpop.f32.mrf.mxu0
      %v1283 = vadd.f32 %v1234, %v1282
      %v1284 = vpop.f32.mrf.mxu0
      %v1285 = vadd.f32 %v1236, %v1284
      %1286 = vdwg.mxu0
      %1287 = vmatpush.bf16.msra.mxu0 %v1140
      %1288 = vmatpush.bf16.msra.mxu0 %v1138
      %1289 = vmatpush.bf16.msra.mxu0 %v1136
      %1290 = vmatpush.bf16.msra.mxu0 %v1134
      %1291 = vmatpush.bf16.msra.mxu0 %v1132
      %1292 = vmatpush.bf16.msra.mxu0 %v1130
      %1293 = vmatpush.bf16.msra.mxu0 %v1128
      %1294 = vmatpush.bf16.msra.mxu0 %v1126
      %1295 = vmatmul.bf16.gmra.mxu0 %v581
      %v1296 = vpop.f32.mrf.mxu0
      %v1297 = vadd.f32 %v1026, %v1296
      %v1298 = vpop.f32.mrf.mxu0
      %v1299 = vadd.f32 %v1026, %v1298
      %1300 = vmatmul.bf16.gmra.mxu0 %v583
      %v1301 = vpop.f32.mrf.mxu0
      %v1302 = vadd.f32 %v1026, %v1301
      %v1303 = vpop.f32.mrf.mxu0
      %v1304 = vadd.f32 %v1026, %v1303
      %1305 = vmatmul.bf16.gmra.mxu0 %v585
      %v1306 = vpop.f32.mrf.mxu0
      %v1307 = vadd.f32 %v1026, %v1306
      %v1308 = vpop.f32.mrf.mxu0
      %v1309 = vadd.f32 %v1026, %v1308
      %1310 = vmatmul.bf16.gmra.mxu0 %v587
      %v1311 = vpop.f32.mrf.mxu0
      %v1312 = vadd.f32 %v1026, %v1311
      %v1313 = vpop.f32.mrf.mxu0
      %v1314 = vadd.f32 %v1026, %v1313
      %1315 = vmatmul.bf16.gmra.mxu0 %v589
      %v1316 = vpop.f32.mrf.mxu0
      %v1317 = vadd.f32 %v1026, %v1316
      %v1318 = vpop.f32.mrf.mxu0
      %v1319 = vadd.f32 %v1026, %v1318
      %1320 = vmatmul.bf16.gmra.mxu0 %v591
      %v1321 = vpop.f32.mrf.mxu0
      %v1322 = vadd.f32 %v1026, %v1321
      %v1323 = vpop.f32.mrf.mxu0
      %v1324 = vadd.f32 %v1026, %v1323
      %1325 = vmatmul.bf16.gmra.mxu0 %v593
      %v1326 = vpop.f32.mrf.mxu0
      %v1327 = vadd.f32 %v1026, %v1326
      %v1328 = vpop.f32.mrf.mxu0
      %v1329 = vadd.f32 %v1026, %v1328
      %1330 = vmatmul.bf16.gmra.mxu0 %v595
      %v1331 = vpop.f32.mrf.mxu0
      %v1332 = vadd.f32 %v1026, %v1331
      %v1333 = vpop.f32.mrf.mxu0
      %v1334 = vadd.f32 %v1026, %v1333
      %1335 = vdwg.mxu0
      %1336 = vmatpush.bf16.msra.mxu0 %v1156
      %1337 = vmatpush.bf16.msra.mxu0 %v1154
      %1338 = vmatpush.bf16.msra.mxu0 %v1152
      %1339 = vmatpush.bf16.msra.mxu0 %v1150
      %1340 = vmatpush.bf16.msra.mxu0 %v1148
      %1341 = vmatpush.bf16.msra.mxu0 %v1146
      %1342 = vmatpush.bf16.msra.mxu0 %v1144
      %1343 = vmatpush.bf16.msra.mxu0 %v1142
      %1344 = vmatmul.bf16.gmra.mxu0 %v582
      %v1345 = vpop.f32.mrf.mxu0
      %v1346 = vadd.f32 %v1297, %v1345
      %v1347 = vpop.f32.mrf.mxu0
      %v1348 = vadd.f32 %v1299, %v1347
      %1349 = vmatmul.bf16.gmra.mxu0 %v584
      %v1350 = vpop.f32.mrf.mxu0
      %v1351 = vadd.f32 %v1302, %v1350
      %v1352 = vpop.f32.mrf.mxu0
      %v1353 = vadd.f32 %v1304, %v1352
      %1354 = vmatmul.bf16.gmra.mxu0 %v586
      %v1355 = vpop.f32.mrf.mxu0
      %v1356 = vadd.f32 %v1307, %v1355
      %v1357 = vpop.f32.mrf.mxu0
      %v1358 = vadd.f32 %v1309, %v1357
      %1359 = vmatmul.bf16.gmra.mxu0 %v588
      %v1360 = vpop.f32.mrf.mxu0
      %v1361 = vadd.f32 %v1312, %v1360
      %v1362 = vpop.f32.mrf.mxu0
      %v1363 = vadd.f32 %v1314, %v1362
      %1364 = vmatmul.bf16.gmra.mxu0 %v590
      %v1365 = vpop.f32.mrf.mxu0
      %v1366 = vadd.f32 %v1317, %v1365
      %v1367 = vpop.f32.mrf.mxu0
      %v1368 = vadd.f32 %v1319, %v1367
      %1369 = vmatmul.bf16.gmra.mxu0 %v592
      %v1370 = vpop.f32.mrf.mxu0
      %v1371 = vadd.f32 %v1322, %v1370
      %v1372 = vpop.f32.mrf.mxu0
      %v1373 = vadd.f32 %v1324, %v1372
      %1374 = vmatmul.bf16.gmra.mxu0 %v594
      %v1375 = vpop.f32.mrf.mxu0
      %v1376 = vadd.f32 %v1327, %v1375
      %v1377 = vpop.f32.mrf.mxu0
      %v1378 = vadd.f32 %v1329, %v1377
      %1379 = vmatmul.bf16.gmra.mxu0 %v596
      %v1380 = vpop.f32.mrf.mxu0
      %v1381 = vadd.f32 %v1332, %v1380
      %v1382 = vpop.f32.mrf.mxu0
      %v1383 = vadd.f32 %v1334, %v1382
      %1384 = vdwg.mxu0
      %v1385 = vld [vmem:[%s3] sm:$0xff]
      %v1386 = vld [vmem:[%s3 + $0x8] sm:$0xff]
      %v1387 = vld [vmem:[%s3 + $0x10] sm:$0xff]
      %v1388 = vld [vmem:[%s3 + $0x18] sm:$0xff]
      %v1389 = vld [vmem:[%s3 + $0x20] sm:$0xff]
      %v1390 = vld [vmem:[%s3 + $0x28] sm:$0xff]
      %v1391 = vld [vmem:[%s3 + $0x30] sm:$0xff]
      %v1392 = vld [vmem:[%s3 + $0x38] sm:$0xff]
      %v1393 = vld [vmem:[%s3 + $0x40] sm:$0xff]
      %v1394 = vld [vmem:[%s3 + $0x48] sm:$0xff]
      %v1395 = vld [vmem:[%s3 + $0x50] sm:$0xff]
      %v1396 = vld [vmem:[%s3 + $0x58] sm:$0xff]
      %v1397 = vld [vmem:[%s3 + $0x60] sm:$0xff]
      %v1398 = vld [vmem:[%s3 + $0x68] sm:$0xff]
      %v1399 = vld [vmem:[%s3 + $0x70] sm:$0xff]
      %v1400 = vld [vmem:[%s3 + $0x78] sm:$0xff]
      %v1401 = vld [vmem:[%s3 + $0x80] sm:$0xff]
      %v1402 = vld [vmem:[%s3 + $0x88] sm:$0xff]
      %v1403 = vld [vmem:[%s3 + $0x90] sm:$0xff]
      %v1404 = vld [vmem:[%s3 + $0x98] sm:$0xff]
      %v1405 = vld [vmem:[%s3 + $0xa0] sm:$0xff]
      %v1406 = vld [vmem:[%s3 + $0xa8] sm:$0xff]
      %v1407 = vld [vmem:[%s3 + $0xb0] sm:$0xff]
      %v1408 = vld [vmem:[%s3 + $0xb8] sm:$0xff]
      %v1409 = vld [vmem:[%s3 + $0xc0] sm:$0xff]
      %v1410 = vld [vmem:[%s3 + $0xc8] sm:$0xff]
      %v1411 = vld [vmem:[%s3 + $0xd0] sm:$0xff]
      %v1412 = vld [vmem:[%s3 + $0xd8] sm:$0xff]
      %v1413 = vld [vmem:[%s3 + $0xe0] sm:$0xff]
      %v1414 = vld [vmem:[%s3 + $0xe8] sm:$0xff]
      %v1415 = vld [vmem:[%s3 + $0xf0] sm:$0xff]
      %v1416 = vld [vmem:[%s3 + $0xf8] sm:$0xff]
      %v1417 = vld [vmem:[%s6] sm:$0x3]
      %v1419 = vperm.slane %v1417, 0
      %v1420 = vperm.slane %v1417, 1
      %v1455 = vunpack.c.l.b16 %v1385
      %v1456 = vunpack.c.h.b16 %v1385
      %v1457 = vunpack.c.l.b16 %v1386
      %v1458 = vunpack.c.h.b16 %v1386
      %v1459 = vunpack.c.l.b16 %v1387
      %v1460 = vunpack.c.h.b16 %v1387
      %v1461 = vunpack.c.l.b16 %v1388
      %v1462 = vunpack.c.h.b16 %v1388
      %v1463 = vunpack.c.l.b16 %v1389
      %v1464 = vunpack.c.h.b16 %v1389
      %v1465 = vunpack.c.l.b16 %v1390
      %v1466 = vunpack.c.h.b16 %v1390
      %v1467 = vunpack.c.l.b16 %v1391
      %v1468 = vunpack.c.h.b16 %v1391
      %v1469 = vunpack.c.l.b16 %v1392
      %v1470 = vunpack.c.h.b16 %v1392
      %v1471 = vunpack.c.l.b16 %v1393
      %v1472 = vunpack.c.h.b16 %v1393
      %v1473 = vunpack.c.l.b16 %v1394
      %v1474 = vunpack.c.h.b16 %v1394
      %v1475 = vunpack.c.l.b16 %v1395
      %v1476 = vunpack.c.h.b16 %v1395
      %v1477 = vunpack.c.l.b16 %v1396
      %v1478 = vunpack.c.h.b16 %v1396
      %v1479 = vunpack.c.l.b16 %v1397
      %v1480 = vunpack.c.h.b16 %v1397
      %v1481 = vunpack.c.l.b16 %v1398
      %v1482 = vunpack.c.h.b16 %v1398
      %v1483 = vunpack.c.l.b16 %v1399
      %v1484 = vunpack.c.h.b16 %v1399
      %v1485 = vunpack.c.l.b16 %v1400
      %v1486 = vunpack.c.h.b16 %v1400
      %v1487 = vunpack.c.l.b16 %v1401
      %v1488 = vunpack.c.h.b16 %v1401
      %v1489 = vunpack.c.l.b16 %v1402
      %v1490 = vunpack.c.h.b16 %v1402
      %v1491 = vunpack.c.l.b16 %v1403
      %v1492 = vunpack.c.h.b16 %v1403
      %v1493 = vunpack.c.l.b16 %v1404
      %v1494 = vunpack.c.h.b16 %v1404
      %v1495 = vunpack.c.l.b16 %v1405
      %v1496 = vunpack.c.h.b16 %v1405
      %v1497 = vunpack.c.l.b16 %v1406
      %v1498 = vunpack.c.h.b16 %v1406
      %v1499 = vunpack.c.l.b16 %v1407
      %v1500 = vunpack.c.h.b16 %v1407
      %v1501 = vunpack.c.l.b16 %v1408
      %v1502 = vunpack.c.h.b16 %v1408
      %v1503 = vunpack.c.l.b16 %v1409
      %v1504 = vunpack.c.h.b16 %v1409
      %v1505 = vunpack.c.l.b16 %v1410
      %v1506 = vunpack.c.h.b16 %v1410
      %v1507 = vunpack.c.l.b16 %v1411
      %v1508 = vunpack.c.h.b16 %v1411
      %v1509 = vunpack.c.l.b16 %v1412
      %v1510 = vunpack.c.h.b16 %v1412
      %v1511 = vunpack.c.l.b16 %v1413
      %v1512 = vunpack.c.h.b16 %v1413
      %v1513 = vunpack.c.l.b16 %v1414
      %v1514 = vunpack.c.h.b16 %v1414
      %v1515 = vunpack.c.l.b16 %v1415
      %v1516 = vunpack.c.h.b16 %v1415
      %v1517 = vunpack.c.l.b16 %v1416
      %v1518 = vunpack.c.h.b16 %v1416
      %v1519 = vpack.c.b16 %v1457, %v1455
      %v1520 = vpack.c.b16 %v1458, %v1456
      %v1521 = vpack.c.b16 %v1461, %v1459
      %v1522 = vpack.c.b16 %v1462, %v1460
      %v1523 = vpack.c.b16 %v1465, %v1463
      %v1524 = vpack.c.b16 %v1466, %v1464
      %v1525 = vpack.c.b16 %v1469, %v1467
      %v1526 = vpack.c.b16 %v1470, %v1468
      %v1527 = vpack.c.b16 %v1473, %v1471
      %v1528 = vpack.c.b16 %v1474, %v1472
      %v1529 = vpack.c.b16 %v1477, %v1475
      %v1530 = vpack.c.b16 %v1478, %v1476
      %v1531 = vpack.c.b16 %v1481, %v1479
      %v1532 = vpack.c.b16 %v1482, %v1480
      %v1533 = vpack.c.b16 %v1485, %v1483
      %v1534 = vpack.c.b16 %v1486, %v1484
      %v1535 = vpack.c.b16 %v1489, %v1487
      %v1536 = vpack.c.b16 %v1490, %v1488
      %v1537 = vpack.c.b16 %v1493, %v1491
      %v1538 = vpack.c.b16 %v1494, %v1492
      %v1539 = vpack.c.b16 %v1497, %v1495
      %v1540 = vpack.c.b16 %v1498, %v1496
      %v1541 = vpack.c.b16 %v1501, %v1499
      %v1542 = vpack.c.b16 %v1502, %v1500
      %v1543 = vpack.c.b16 %v1505, %v1503
      %v1544 = vpack.c.b16 %v1506, %v1504
      %v1545 = vpack.c.b16 %v1509, %v1507
      %v1546 = vpack.c.b16 %v1510, %v1508
      %v1547 = vpack.c.b16 %v1513, %v1511
      %v1548 = vpack.c.b16 %v1514, %v1512
      %v1549 = vpack.c.b16 %v1517, %v1515
      %v1550 = vpack.c.b16 %v1518, %v1516
      %1583 = vmatpush.bf16.msra.mxu0 %v1533
      %1584 = vmatpush.bf16.msra.mxu0 %v1531
      %1585 = vmatpush.bf16.msra.mxu0 %v1529
      %1586 = vmatpush.bf16.msra.mxu0 %v1527
      %1587 = vmatpush.bf16.msra.mxu0 %v1525
      %1588 = vmatpush.bf16.msra.mxu0 %v1523
      %1589 = vmatpush.bf16.msra.mxu0 %v1521
      %1590 = vmatpush.bf16.msra.mxu0 %v1519
      %1591 = vmatmul.bf16.gmra.mxu0 %v581
      %v1592 = vpop.f32.mrf.mxu0
      %v1593 = vadd.f32 %v1419, %v1592
      %v1594 = vpop.f32.mrf.mxu0
      %v1595 = vadd.f32 %v1419, %v1594
      %1596 = vmatmul.bf16.gmra.mxu0 %v583
      %v1597 = vpop.f32.mrf.mxu0
      %v1598 = vadd.f32 %v1419, %v1597
      %v1599 = vpop.f32.mrf.mxu0
      %v1600 = vadd.f32 %v1419, %v1599
      %1601 = vmatmul.bf16.gmra.mxu0 %v585
      %v1602 = vpop.f32.mrf.mxu0
      %v1603 = vadd.f32 %v1419, %v1602
      %v1604 = vpop.f32.mrf.mxu0
      %v1605 = vadd.f32 %v1419, %v1604
      %1606 = vmatmul.bf16.gmra.mxu0 %v587
      %v1607 = vpop.f32.mrf.mxu0
      %v1608 = vadd.f32 %v1419, %v1607
      %v1609 = vpop.f32.mrf.mxu0
      %v1610 = vadd.f32 %v1419, %v1609
      %1611 = vmatmul.bf16.gmra.mxu0 %v589
      %v1612 = vpop.f32.mrf.mxu0
      %v1613 = vadd.f32 %v1419, %v1612
      %v1614 = vpop.f32.mrf.mxu0
      %v1615 = vadd.f32 %v1419, %v1614
      %1616 = vmatmul.bf16.gmra.mxu0 %v591
      %v1617 = vpop.f32.mrf.mxu0
      %v1618 = vadd.f32 %v1419, %v1617
      %v1619 = vpop.f32.mrf.mxu0
      %v1620 = vadd.f32 %v1419, %v1619
      %1621 = vmatmul.bf16.gmra.mxu0 %v593
      %v1622 = vpop.f32.mrf.mxu0
      %v1623 = vadd.f32 %v1419, %v1622
      %v1624 = vpop.f32.mrf.mxu0
      %v1625 = vadd.f32 %v1419, %v1624
      %1626 = vmatmul.bf16.gmra.mxu0 %v595
      %v1627 = vpop.f32.mrf.mxu0
      %v1628 = vadd.f32 %v1419, %v1627
      %v1629 = vpop.f32.mrf.mxu0
      %v1630 = vadd.f32 %v1419, %v1629
      %1631 = vdwg.mxu0
      %1632 = vmatpush.bf16.msra.mxu0 %v1549
      %1633 = vmatpush.bf16.msra.mxu0 %v1547
      %1634 = vmatpush.bf16.msra.mxu0 %v1545
      %1635 = vmatpush.bf16.msra.mxu0 %v1543
      %1636 = vmatpush.bf16.msra.mxu0 %v1541
      %1637 = vmatpush.bf16.msra.mxu0 %v1539
      %1638 = vmatpush.bf16.msra.mxu0 %v1537
      %1639 = vmatpush.bf16.msra.mxu0 %v1535
      %1640 = vmatmul.bf16.gmra.mxu0 %v582
      %v1641 = vpop.f32.mrf.mxu0
      %v1642 = vadd.f32 %v1593, %v1641
      %v1643 = vpop.f32.mrf.mxu0
      %v1644 = vadd.f32 %v1595, %v1643
      %1645 = vmatmul.bf16.gmra.mxu0 %v584
      %v1646 = vpop.f32.mrf.mxu0
      %v1647 = vadd.f32 %v1598, %v1646
      %v1648 = vpop.f32.mrf.mxu0
      %v1649 = vadd.f32 %v1600, %v1648
      %1650 = vmatmul.bf16.gmra.mxu0 %v586
      %v1651 = vpop.f32.mrf.mxu0
      %v1652 = vadd.f32 %v1603, %v1651
      %v1653 = vpop.f32.mrf.mxu0
      %v1654 = vadd.f32 %v1605, %v1653
      %1655 = vmatmul.bf16.gmra.mxu0 %v588
      %v1656 = vpop.f32.mrf.mxu0
      %v1657 = vadd.f32 %v1608, %v1656
      %v1658 = vpop.f32.mrf.mxu0
      %v1659 = vadd.f32 %v1610, %v1658
      %1660 = vmatmul.bf16.gmra.mxu0 %v590
      %v1661 = vpop.f32.mrf.mxu0
      %v1662 = vadd.f32 %v1613, %v1661
      %v1663 = vpop.f32.mrf.mxu0
      %v1664 = vadd.f32 %v1615, %v1663
      %1665 = vmatmul.bf16.gmra.mxu0 %v592
      %v1666 = vpop.f32.mrf.mxu0
      %v1667 = vadd.f32 %v1618, %v1666
      %v1668 = vpop.f32.mrf.mxu0
      %v1669 = vadd.f32 %v1620, %v1668
      %1670 = vmatmul.bf16.gmra.mxu0 %v594
      %v1671 = vpop.f32.mrf.mxu0
      %v1672 = vadd.f32 %v1623, %v1671
      %v1673 = vpop.f32.mrf.mxu0
      %v1674 = vadd.f32 %v1625, %v1673
      %1675 = vmatmul.bf16.gmra.mxu0 %v596
      %v1676 = vpop.f32.mrf.mxu0
      %v1677 = vadd.f32 %v1628, %v1676
      %v1678 = vpop.f32.mrf.mxu0
      %v1679 = vadd.f32 %v1630, %v1678
      %1680 = vdwg.mxu0
      %1681 = vmatpush.bf16.msra.mxu0 %v1534
      %1682 = vmatpush.bf16.msra.mxu0 %v1532
      %1683 = vmatpush.bf16.msra.mxu0 %v1530
      %1684 = vmatpush.bf16.msra.mxu0 %v1528
      %1685 = vmatpush.bf16.msra.mxu0 %v1526
      %1686 = vmatpush.bf16.msra.mxu0 %v1524
      %1687 = vmatpush.bf16.msra.mxu0 %v1522
      %1688 = vmatpush.bf16.msra.mxu0 %v1520
      %1689 = vmatmul.bf16.gmra.mxu0 %v581
      %v1690 = vpop.f32.mrf.mxu0
      %v1691 = vadd.f32 %v1420, %v1690
      %v1692 = vpop.f32.mrf.mxu0
      %v1693 = vadd.f32 %v1420, %v1692
      %1694 = vmatmul.bf16.gmra.mxu0 %v583
      %v1695 = vpop.f32.mrf.mxu0
      %v1696 = vadd.f32 %v1420, %v1695
      %v1697 = vpop.f32.mrf.mxu0
      %v1698 = vadd.f32 %v1420, %v1697
      %1699 = vmatmul.bf16.gmra.mxu0 %v585
      %v1700 = vpop.f32.mrf.mxu0
      %v1701 = vadd.f32 %v1420, %v1700
      %v1702 = vpop.f32.mrf.mxu0
      %v1703 = vadd.f32 %v1420, %v1702
      %1704 = vmatmul.bf16.gmra.mxu0 %v587
      %v1705 = vpop.f32.mrf.mxu0
      %v1706 = vadd.f32 %v1420, %v1705
      %v1707 = vpop.f32.mrf.mxu0
      %v1708 = vadd.f32 %v1420, %v1707
      %1709 = vmatmul.bf16.gmra.mxu0 %v589
      %v1710 = vpop.f32.mrf.mxu0
      %v1711 = vadd.f32 %v1420, %v1710
      %v1712 = vpop.f32.mrf.mxu0
      %v1713 = vadd.f32 %v1420, %v1712
      %1714 = vmatmul.bf16.gmra.mxu0 %v591
      %v1715 = vpop.f32.mrf.mxu0
      %v1716 = vadd.f32 %v1420, %v1715
      %v1717 = vpop.f32.mrf.mxu0
      %v1718 = vadd.f32 %v1420, %v1717
      %1719 = vmatmul.bf16.gmra.mxu0 %v593
      %v1720 = vpop.f32.mrf.mxu0
      %v1721 = vadd.f32 %v1420, %v1720
      %v1722 = vpop.f32.mrf.mxu0
      %v1723 = vadd.f32 %v1420, %v1722
      %1724 = vmatmul.bf16.gmra.mxu0 %v595
      %v1725 = vpop.f32.mrf.mxu0
      %v1726 = vadd.f32 %v1420, %v1725
      %v1727 = vpop.f32.mrf.mxu0
      %v1728 = vadd.f32 %v1420, %v1727
      %1729 = vdwg.mxu0
      %1730 = vmatpush.bf16.msra.mxu0 %v1550
      %1731 = vmatpush.bf16.msra.mxu0 %v1548
      %1732 = vmatpush.bf16.msra.mxu0 %v1546
      %1733 = vmatpush.bf16.msra.mxu0 %v1544
      %1734 = vmatpush.bf16.msra.mxu0 %v1542
      %1735 = vmatpush.bf16.msra.mxu0 %v1540
      %1736 = vmatpush.bf16.msra.mxu0 %v1538
      %1737 = vmatpush.bf16.msra.mxu0 %v1536
      %1738 = vmatmul.bf16.gmra.mxu0 %v582
      %v1739 = vpop.f32.mrf.mxu0
      %v1740 = vadd.f32 %v1691, %v1739
      %v1741 = vpop.f32.mrf.mxu0
      %v1742 = vadd.f32 %v1693, %v1741
      %1743 = vmatmul.bf16.gmra.mxu0 %v584
      %v1744 = vpop.f32.mrf.mxu0
      %v1745 = vadd.f32 %v1696, %v1744
      %v1746 = vpop.f32.mrf.mxu0
      %v1747 = vadd.f32 %v1698, %v1746
      %1748 = vmatmul.bf16.gmra.mxu0 %v586
      %v1749 = vpop.f32.mrf.mxu0
      %v1750 = vadd.f32 %v1701, %v1749
      %v1751 = vpop.f32.mrf.mxu0
      %v1752 = vadd.f32 %v1703, %v1751
      %1753 = vmatmul.bf16.gmra.mxu0 %v588
      %v1754 = vpop.f32.mrf.mxu0
      %v1755 = vadd.f32 %v1706, %v1754
      %v1756 = vpop.f32.mrf.mxu0
      %v1757 = vadd.f32 %v1708, %v1756
      %1758 = vmatmul.bf16.gmra.mxu0 %v590
      %v1759 = vpop.f32.mrf.mxu0
      %v1760 = vadd.f32 %v1711, %v1759
      %v1761 = vpop.f32.mrf.mxu0
      %v1762 = vadd.f32 %v1713, %v1761
      %1763 = vmatmul.bf16.gmra.mxu0 %v592
      %v1764 = vpop.f32.mrf.mxu0
      %v1765 = vadd.f32 %v1716, %v1764
      %v1766 = vpop.f32.mrf.mxu0
      %v1767 = vadd.f32 %v1718, %v1766
      %1768 = vmatmul.bf16.gmra.mxu0 %v594
      %v1769 = vpop.f32.mrf.mxu0
      %v1770 = vadd.f32 %v1721, %v1769
      %v1771 = vpop.f32.mrf.mxu0
      %v1772 = vadd.f32 %v1723, %v1771
      %1773 = vmatmul.bf16.gmra.mxu0 %v596
      %v1774 = vpop.f32.mrf.mxu0
      %v1775 = vadd.f32 %v1726, %v1774
      %v1776 = vpop.f32.mrf.mxu0
      %v1777 = vadd.f32 %v1728, %v1776
      %1778 = vdwg.mxu0
      %v1779 = vpack.c.bf16 %v952, %v854
      %v1780 = vpack.c.bf16 %v954, %v856
      %v1781 = vpack.c.bf16 %v957, %v859
      %v1782 = vpack.c.bf16 %v959, %v861
      %v1783 = vpack.c.bf16 %v962, %v864
      %v1784 = vpack.c.bf16 %v964, %v866
      %v1785 = vpack.c.bf16 %v967, %v869
      %v1786 = vpack.c.bf16 %v969, %v871
      %v1787 = vpack.c.bf16 %v972, %v874
      %v1788 = vpack.c.bf16 %v974, %v876
      %v1789 = vpack.c.bf16 %v977, %v879
      %v1790 = vpack.c.bf16 %v979, %v881
      %v1791 = vpack.c.bf16 %v982, %v884
      %v1792 = vpack.c.bf16 %v984, %v886
      %v1793 = vpack.c.bf16 %v987, %v889
      %v1794 = vpack.c.bf16 %v989, %v891
      %v1811 = vrot.slane %v1779, 4
      %v1812 = vrot.slane %v1780, 4
      %v1813 = vrot.slane %v1781, 4
      %v1814 = vrot.slane %v1782, 4
      %v1815 = vrot.slane %v1783, 4
      %v1816 = vrot.slane %v1784, 4
      %v1817 = vrot.slane %v1785, 4
      %v1818 = vrot.slane %v1786, 4
      %v1819 = vrot.slane %v1787, 4
      %v1820 = vrot.slane %v1788, 4
      %v1821 = vrot.slane %v1789, 4
      %v1822 = vrot.slane %v1790, 4
      %v1823 = vrot.slane %v1791, 4
      %v1824 = vrot.slane %v1792, 4
      %v1825 = vrot.slane %v1793, 4
      %v1826 = vrot.slane %v1794, 4
      %v1827 = vpack.c.bf16 %v1346, %v1248
      %v1828 = vpack.c.bf16 %v1348, %v1250
      %v1829 = vpack.c.bf16 %v1351, %v1253
      %v1830 = vpack.c.bf16 %v1353, %v1255
      %v1831 = vpack.c.bf16 %v1356, %v1258
      %v1832 = vpack.c.bf16 %v1358, %v1260
      %v1833 = vpack.c.bf16 %v1361, %v1263
      %v1834 = vpack.c.bf16 %v1363, %v1265
      %v1835 = vpack.c.bf16 %v1366, %v1268
      %v1836 = vpack.c.bf16 %v1368, %v1270
      %v1837 = vpack.c.bf16 %v1371, %v1273
      %v1838 = vpack.c.bf16 %v1373, %v1275
      %v1839 = vpack.c.bf16 %v1376, %v1278
      %v1840 = vpack.c.bf16 %v1378, %v1280
      %v1841 = vpack.c.bf16 %v1381, %v1283
      %v1842 = vpack.c.bf16 %v1383, %v1285
      %v1859 = vrot.slane %v1827, 4
      %v1860 = vrot.slane %v1828, 4
      %v1861 = vrot.slane %v1829, 4
      %v1862 = vrot.slane %v1830, 4
      %v1863 = vrot.slane %v1831, 4
      %v1864 = vrot.slane %v1832, 4
      %v1865 = vrot.slane %v1833, 4
      %v1866 = vrot.slane %v1834, 4
      %v1867 = vrot.slane %v1835, 4
      %v1868 = vrot.slane %v1836, 4
      %v1869 = vrot.slane %v1837, 4
      %v1870 = vrot.slane %v1838, 4
      %v1871 = vrot.slane %v1839, 4
      %v1872 = vrot.slane %v1840, 4
      %v1873 = vrot.slane %v1841, 4
      %v1874 = vrot.slane %v1842, 4
      %v1875 = vpack.c.bf16 %v1740, %v1642
      %v1876 = vpack.c.bf16 %v1742, %v1644
      %v1877 = vpack.c.bf16 %v1745, %v1647
      %v1878 = vpack.c.bf16 %v1747, %v1649
      %v1879 = vpack.c.bf16 %v1750, %v1652
      %v1880 = vpack.c.bf16 %v1752, %v1654
      %v1881 = vpack.c.bf16 %v1755, %v1657
      %v1882 = vpack.c.bf16 %v1757, %v1659
      %v1883 = vpack.c.bf16 %v1760, %v1662
      %v1884 = vpack.c.bf16 %v1762, %v1664
      %v1885 = vpack.c.bf16 %v1765, %v1667
      %v1886 = vpack.c.bf16 %v1767, %v1669
      %v1887 = vpack.c.bf16 %v1770, %v1672
      %v1888 = vpack.c.bf16 %v1772, %v1674
      %v1889 = vpack.c.bf16 %v1775, %v1677
      %v1890 = vpack.c.bf16 %v1777, %v1679
      %v1907 = vrot.slane %v1875, 4
      %v1908 = vrot.slane %v1876, 4
      %v1909 = vrot.slane %v1877, 4
      %v1910 = vrot.slane %v1878, 4
      %v1911 = vrot.slane %v1879, 4
      %v1912 = vrot.slane %v1880, 4
      %v1913 = vrot.slane %v1881, 4
      %v1914 = vrot.slane %v1882, 4
      %v1915 = vrot.slane %v1883, 4
      %v1916 = vrot.slane %v1884, 4
      %v1917 = vrot.slane %v1885, 4
      %v1918 = vrot.slane %v1886, 4
      %v1919 = vrot.slane %v1887, 4
      %v1920 = vrot.slane %v1888, 4
      %v1921 = vrot.slane %v1889, 4
      %v1922 = vrot.slane %v1890, 4
      %v1923 = vunpack.c.l.b16 %v1779
      %v1924 = vunpack.c.l.b16 %v1780
      %v1925 = vunpack.c.l.b16 %v1781
      %v1926 = vunpack.c.l.b16 %v1782
      %v1927 = vunpack.c.l.b16 %v1783
      %v1928 = vunpack.c.l.b16 %v1784
      %v1929 = vunpack.c.l.b16 %v1785
      %v1930 = vunpack.c.l.b16 %v1786
      %v1931 = vunpack.c.l.b16 %v1787
      %v1932 = vunpack.c.l.b16 %v1788
      %v1933 = vunpack.c.l.b16 %v1789
      %v1934 = vunpack.c.l.b16 %v1790
      %v1935 = vunpack.c.l.b16 %v1791
      %v1936 = vunpack.c.l.b16 %v1792
      %v1937 = vunpack.c.l.b16 %v1793
      %v1938 = vunpack.c.l.b16 %v1794
      %v1939 = vpack.c.b16 %v1924, %v1923
      %v1940 = vpack.c.b16 %v1926, %v1925
      %v1941 = vpack.c.b16 %v1928, %v1927
      %v1942 = vpack.c.b16 %v1930, %v1929
      %v1943 = vpack.c.b16 %v1932, %v1931
      %v1944 = vpack.c.b16 %v1934, %v1933
      %v1945 = vpack.c.b16 %v1936, %v1935
      %v1946 = vpack.c.b16 %v1938, %v1937
      %v1955 = vunpack.c.l.b16 %v1827
      %v1956 = vunpack.c.l.b16 %v1828
      %v1957 = vunpack.c.l.b16 %v1829
      %v1958 = vunpack.c.l.b16 %v1830
      %v1959 = vunpack.c.l.b16 %v1831
      %v1960 = vunpack.c.l.b16 %v1832
      %v1961 = vunpack.c.l.b16 %v1833
      %v1962 = vunpack.c.l.b16 %v1834
      %v1963 = vunpack.c.l.b16 %v1835
      %v1964 = vunpack.c.l.b16 %v1836
      %v1965 = vunpack.c.l.b16 %v1837
      %v1966 = vunpack.c.l.b16 %v1838
      %v1967 = vunpack.c.l.b16 %v1839
      %v1968 = vunpack.c.l.b16 %v1840
      %v1969 = vunpack.c.l.b16 %v1841
      %v1970 = vunpack.c.l.b16 %v1842
      %v1971 = vpack.c.b16 %v1956, %v1955
      %v1972 = vpack.c.b16 %v1958, %v1957
      %v1973 = vpack.c.b16 %v1960, %v1959
      %v1974 = vpack.c.b16 %v1962, %v1961
      %v1975 = vpack.c.b16 %v1964, %v1963
      %v1976 = vpack.c.b16 %v1966, %v1965
      %v1977 = vpack.c.b16 %v1968, %v1967
      %v1978 = vpack.c.b16 %v1970, %v1969
      %1987 = vmatpush.bf16.xpose.msra.mxu0 %v1978
      %1988 = vmatpush.bf16.xpose.msra.mxu0 %v1977
      %1989 = vmatpush.bf16.xpose.msra.mxu0 %v1976
      %1990 = vmatpush.bf16.xpose.msra.mxu0 %v1975
      %1991 = vmatpush.bf16.xpose.msra.mxu0 %v1974
      %1992 = vmatpush.bf16.xpose.msra.mxu0 %v1973
      %1993 = vmatpush.bf16.xpose.msra.mxu0 %v1972
      %1994 = vmatpush.bf16.xpose.msra.mxu0 %v1971
      %1995 = vmatmul.bf16.gmra.mxu0 %v1939
      %v1996 = vpop.f32.mrf.mxu0
      %v1997 = vadd.f32 0.0, %v1996
      %v1998 = vpop.f32.mrf.mxu0
      %v1999 = vadd.f32 0.0, %v1998
      %2000 = vmatmul.bf16.gmra.mxu0 %v1940
      %v2001 = vpop.f32.mrf.mxu0
      %v2002 = vadd.f32 0.0, %v2001
      %v2003 = vpop.f32.mrf.mxu0
      %v2004 = vadd.f32 0.0, %v2003
      %2005 = vmatmul.bf16.gmra.mxu0 %v1941
      %v2006 = vpop.f32.mrf.mxu0
      %v2007 = vadd.f32 0.0, %v2006
      %v2008 = vpop.f32.mrf.mxu0
      %v2009 = vadd.f32 0.0, %v2008
      %2010 = vmatmul.bf16.gmra.mxu0 %v1942
      %v2011 = vpop.f32.mrf.mxu0
      %v2012 = vadd.f32 0.0, %v2011
      %v2013 = vpop.f32.mrf.mxu0
      %v2014 = vadd.f32 0.0, %v2013
      %2015 = vmatmul.bf16.gmra.mxu0 %v1943
      %v2016 = vpop.f32.mrf.mxu0
      %v2017 = vadd.f32 0.0, %v2016
      %v2018 = vpop.f32.mrf.mxu0
      %v2019 = vadd.f32 0.0, %v2018
      %2020 = vmatmul.bf16.gmra.mxu0 %v1944
      %v2021 = vpop.f32.mrf.mxu0
      %v2022 = vadd.f32 0.0, %v2021
      %v2023 = vpop.f32.mrf.mxu0
      %v2024 = vadd.f32 0.0, %v2023
      %2025 = vmatmul.bf16.gmra.mxu0 %v1945
      %v2026 = vpop.f32.mrf.mxu0
      %v2027 = vadd.f32 0.0, %v2026
      %v2028 = vpop.f32.mrf.mxu0
      %v2029 = vadd.f32 0.0, %v2028
      %2030 = vmatmul.bf16.gmra.mxu0 %v1946
      %v2031 = vpop.f32.mrf.mxu0
      %v2032 = vadd.f32 0.0, %v2031
      %v2033 = vpop.f32.mrf.mxu0
      %v2034 = vadd.f32 0.0, %v2033
      %2035 = vdwg.mxu0
      %v2036 = vunpack.c.l.b16 %v1811
      %v2037 = vunpack.c.l.b16 %v1812
      %v2038 = vunpack.c.l.b16 %v1813
      %v2039 = vunpack.c.l.b16 %v1814
      %v2040 = vunpack.c.l.b16 %v1815
      %v2041 = vunpack.c.l.b16 %v1816
      %v2042 = vunpack.c.l.b16 %v1817
      %v2043 = vunpack.c.l.b16 %v1818
      %v2044 = vunpack.c.l.b16 %v1819
      %v2045 = vunpack.c.l.b16 %v1820
      %v2046 = vunpack.c.l.b16 %v1821
      %v2047 = vunpack.c.l.b16 %v1822
      %v2048 = vunpack.c.l.b16 %v1823
      %v2049 = vunpack.c.l.b16 %v1824
      %v2050 = vunpack.c.l.b16 %v1825
      %v2051 = vunpack.c.l.b16 %v1826
      %v2052 = vpack.c.b16 %v2037, %v2036
      %v2053 = vpack.c.b16 %v2039, %v2038
      %v2054 = vpack.c.b16 %v2041, %v2040
      %v2055 = vpack.c.b16 %v2043, %v2042
      %v2056 = vpack.c.b16 %v2045, %v2044
      %v2057 = vpack.c.b16 %v2047, %v2046
      %v2058 = vpack.c.b16 %v2049, %v2048
      %v2059 = vpack.c.b16 %v2051, %v2050
      %v2068 = vunpack.c.l.b16 %v1859
      %v2069 = vunpack.c.l.b16 %v1860
      %v2070 = vunpack.c.l.b16 %v1861
      %v2071 = vunpack.c.l.b16 %v1862
      %v2072 = vunpack.c.l.b16 %v1863
      %v2073 = vunpack.c.l.b16 %v1864
      %v2074 = vunpack.c.l.b16 %v1865
      %v2075 = vunpack.c.l.b16 %v1866
      %v2076 = vunpack.c.l.b16 %v1867
      %v2077 = vunpack.c.l.b16 %v1868
      %v2078 = vunpack.c.l.b16 %v1869
      %v2079 = vunpack.c.l.b16 %v1870
      %v2080 = vunpack.c.l.b16 %v1871
      %v2081 = vunpack.c.l.b16 %v1872
      %v2082 = vunpack.c.l.b16 %v1873
      %v2083 = vunpack.c.l.b16 %v1874
      %v2084 = vpack.c.b16 %v2069, %v2068
      %v2085 = vpack.c.b16 %v2071, %v2070
      %v2086 = vpack.c.b16 %v2073, %v2072
      %v2087 = vpack.c.b16 %v2075, %v2074
      %v2088 = vpack.c.b16 %v2077, %v2076
      %v2089 = vpack.c.b16 %v2079, %v2078
      %v2090 = vpack.c.b16 %v2081, %v2080
      %v2091 = vpack.c.b16 %v2083, %v2082
      %2100 = vmatpush.bf16.xpose.msra.mxu0 %v2091
      %2101 = vmatpush.bf16.xpose.msra.mxu0 %v2090
      %2102 = vmatpush.bf16.xpose.msra.mxu0 %v2089
      %2103 = vmatpush.bf16.xpose.msra.mxu0 %v2088
      %2104 = vmatpush.bf16.xpose.msra.mxu0 %v2087
      %2105 = vmatpush.bf16.xpose.msra.mxu0 %v2086
      %2106 = vmatpush.bf16.xpose.msra.mxu0 %v2085
      %2107 = vmatpush.bf16.xpose.msra.mxu0 %v2084
      %2108 = vmatmul.bf16.gmra.mxu0 %v2052
      %v2109 = vpop.f32.mrf.mxu0
      %v2110 = vadd.f32 0.0, %v2109
      %v2111 = vpop.f32.mrf.mxu0
      %v2112 = vadd.f32 0.0, %v2111
      %2113 = vmatmul.bf16.gmra.mxu0 %v2053
      %v2114 = vpop.f32.mrf.mxu0
      %v2115 = vadd.f32 0.0, %v2114
      %v2116 = vpop.f32.mrf.mxu0
      %v2117 = vadd.f32 0.0, %v2116
      %2118 = vmatmul.bf16.gmra.mxu0 %v2054
      %v2119 = vpop.f32.mrf.mxu0
      %v2120 = vadd.f32 0.0, %v2119
      %v2121 = vpop.f32.mrf.mxu0
      %v2122 = vadd.f32 0.0, %v2121
      %2123 = vmatmul.bf16.gmra.mxu0 %v2055
      %v2124 = vpop.f32.mrf.mxu0
      %v2125 = vadd.f32 0.0, %v2124
      %v2126 = vpop.f32.mrf.mxu0
      %v2127 = vadd.f32 0.0, %v2126
      %2128 = vmatmul.bf16.gmra.mxu0 %v2056
      %v2129 = vpop.f32.mrf.mxu0
      %v2130 = vadd.f32 0.0, %v2129
      %v2131 = vpop.f32.mrf.mxu0
      %v2132 = vadd.f32 0.0, %v2131
      %2133 = vmatmul.bf16.gmra.mxu0 %v2057
      %v2134 = vpop.f32.mrf.mxu0
      %v2135 = vadd.f32 0.0, %v2134
      %v2136 = vpop.f32.mrf.mxu0
      %v2137 = vadd.f32 0.0, %v2136
      %2138 = vmatmul.bf16.gmra.mxu0 %v2058
      %v2139 = vpop.f32.mrf.mxu0
      %v2140 = vadd.f32 0.0, %v2139
      %v2141 = vpop.f32.mrf.mxu0
      %v2142 = vadd.f32 0.0, %v2141
      %2143 = vmatmul.bf16.gmra.mxu0 %v2059
      %v2144 = vpop.f32.mrf.mxu0
      %v2145 = vadd.f32 0.0, %v2144
      %v2146 = vpop.f32.mrf.mxu0
      %v2147 = vadd.f32 0.0, %v2146
      %2148 = vdwg.mxu0
      %v2149 = vmul.f32 %v1997, 0.088388346
      %v2150 = vmul.f32 %v1999, 0.088388346
      %v2151 = vmul.f32 %v2002, 0.088388346
      %v2152 = vmul.f32 %v2004, 0.088388346
      %v2153 = vmul.f32 %v2007, 0.088388346
      %v2154 = vmul.f32 %v2009, 0.088388346
      %v2155 = vmul.f32 %v2012, 0.088388346
      %v2156 = vmul.f32 %v2014, 0.088388346
      %v2157 = vmul.f32 %v2017, 0.088388346
      %v2158 = vmul.f32 %v2019, 0.088388346
      %v2159 = vmul.f32 %v2022, 0.088388346
      %v2160 = vmul.f32 %v2024, 0.088388346
      %v2161 = vmul.f32 %v2027, 0.088388346
      %v2162 = vmul.f32 %v2029, 0.088388346
      %v2163 = vmul.f32 %v2032, 0.088388346
      %v2164 = vmul.f32 %v2034, 0.088388346
      %v2165 = vmul.f32 %v2110, 0.088388346
      %v2166 = vmul.f32 %v2112, 0.088388346
      %v2167 = vmul.f32 %v2115, 0.088388346
      %v2168 = vmul.f32 %v2117, 0.088388346
      %v2169 = vmul.f32 %v2120, 0.088388346
      %v2170 = vmul.f32 %v2122, 0.088388346
      %v2171 = vmul.f32 %v2125, 0.088388346
      %v2172 = vmul.f32 %v2127, 0.088388346
      %v2173 = vmul.f32 %v2130, 0.088388346
      %v2174 = vmul.f32 %v2132, 0.088388346
      %v2175 = vmul.f32 %v2135, 0.088388346
      %v2176 = vmul.f32 %v2137, 0.088388346
      %v2177 = vmul.f32 %v2140, 0.088388346
      %v2178 = vmul.f32 %v2142, 0.088388346
      %v2179 = vmul.f32 %v2145, 0.088388346
      %v2180 = vmul.f32 %v2147, 0.088388346
      %v2181 = vlaneseq
      %v2182 = vshrl.u32 %v2181, 7
      %v2183 = vadd.s32 %v2182, 8
      %v2184 = vadd.s32 %v2182, 16
      %v2185 = vadd.s32 %v2182, 24
      %v2186 = vadd.s32 %v2182, 32
      %v2187 = vadd.s32 %v2182, 40
      %v2188 = vadd.s32 %v2182, 48
      %v2189 = vadd.s32 %v2182, 56
      %v2190 = vadd.s32 %v2182, 64
      %v2191 = vadd.s32 %v2182, 72
      %v2192 = vadd.s32 %v2182, 80
      %v2193 = vadd.s32 %v2182, 88
      %v2194 = vadd.s32 %v2182, 96
      %v2195 = vadd.s32 %v2182, 104
      %v2196 = vadd.s32 %v2182, 112
      %v2197 = vadd.s32 %v2182, 120
      %v2198 = vlaneseq
      %v2199 = vand.u32 %v2198, 127
      %vm2200 = vcmp.le.s32.totalorder %v2199, %v2182
      %vm2201 = vcmp.le.s32.totalorder %v2199, %v2183
      %vm2202 = vcmp.le.s32.totalorder %v2199, %v2184
      %vm2203 = vcmp.le.s32.totalorder %v2199, %v2185
      %vm2204 = vcmp.le.s32.totalorder %v2199, %v2186
      %vm2205 = vcmp.le.s32.totalorder %v2199, %v2187
      %vm2206 = vcmp.le.s32.totalorder %v2199, %v2188
      %vm2207 = vcmp.le.s32.totalorder %v2199, %v2189
      %vm2208 = vcmp.le.s32.totalorder %v2199, %v2190
      %vm2209 = vcmp.le.s32.totalorder %v2199, %v2191
      %vm2210 = vcmp.le.s32.totalorder %v2199, %v2192
      %vm2211 = vcmp.le.s32.totalorder %v2199, %v2193
      %vm2212 = vcmp.le.s32.totalorder %v2199, %v2194
      %vm2213 = vcmp.le.s32.totalorder %v2199, %v2195
      %vm2214 = vcmp.le.s32.totalorder %v2199, %v2196
      %vm2215 = vcmp.le.s32.totalorder %v2199, %v2197
      %v2216 = vsel %vm2200, 1, 0
      %v2217 = vsel %vm2201, 1, 0
      %v2218 = vsel %vm2202, 1, 0
      %v2219 = vsel %vm2203, 1, 0
      %v2220 = vsel %vm2204, 1, 0
      %v2221 = vsel %vm2205, 1, 0
      %v2222 = vsel %vm2206, 1, 0
      %v2223 = vsel %vm2207, 1, 0
      %v2224 = vsel %vm2208, 1, 0
      %v2225 = vsel %vm2209, 1, 0
      %v2226 = vsel %vm2210, 1, 0
      %v2227 = vsel %vm2211, 1, 0
      %v2228 = vsel %vm2212, 1, 0
      %v2229 = vsel %vm2213, 1, 0
      %v2230 = vsel %vm2214, 1, 0
      %v2231 = vsel %vm2215, 1, 0
      %vm2232 = vcmp.eq.s32.totalorder %v2216, 1
      %vm2233 = vcmp.eq.s32.totalorder %v2217, 1
      %vm2234 = vcmp.eq.s32.totalorder %v2218, 1
      %vm2235 = vcmp.eq.s32.totalorder %v2219, 1
      %vm2236 = vcmp.eq.s32.totalorder %v2220, 1
      %vm2237 = vcmp.eq.s32.totalorder %v2221, 1
      %vm2238 = vcmp.eq.s32.totalorder %v2222, 1
      %vm2239 = vcmp.eq.s32.totalorder %v2223, 1
      %vm2240 = vcmp.eq.s32.totalorder %v2224, 1
      %vm2241 = vcmp.eq.s32.totalorder %v2225, 1
      %vm2242 = vcmp.eq.s32.totalorder %v2226, 1
      %vm2243 = vcmp.eq.s32.totalorder %v2227, 1
      %vm2244 = vcmp.eq.s32.totalorder %v2228, 1
      %vm2245 = vcmp.eq.s32.totalorder %v2229, 1
      %vm2246 = vcmp.eq.s32.totalorder %v2230, 1
      %vm2247 = vcmp.eq.s32.totalorder %v2231, 1
      %v2248 = vsel %vm2232, %v2149, -1e+30
      %v2249 = vsel %vm2233, %v2150, -1e+30
      %v2250 = vsel %vm2234, %v2151, -1e+30
      %v2251 = vsel %vm2235, %v2152, -1e+30
      %v2252 = vsel %vm2236, %v2153, -1e+30
      %v2253 = vsel %vm2237, %v2154, -1e+30
      %v2254 = vsel %vm2238, %v2155, -1e+30
      %v2255 = vsel %vm2239, %v2156, -1e+30
      %v2256 = vsel %vm2240, %v2157, -1e+30
      %v2257 = vsel %vm2241, %v2158, -1e+30
      %v2258 = vsel %vm2242, %v2159, -1e+30
      %v2259 = vsel %vm2243, %v2160, -1e+30
      %v2260 = vsel %vm2244, %v2161, -1e+30
      %v2261 = vsel %vm2245, %v2162, -1e+30
      %v2262 = vsel %vm2246, %v2163, -1e+30
      %v2263 = vsel %vm2247, %v2164, -1e+30
      %v2264 = vsel %vm2232, %v2165, -1e+30
      %v2265 = vsel %vm2233, %v2166, -1e+30
      %v2266 = vsel %vm2234, %v2167, -1e+30
      %v2267 = vsel %vm2235, %v2168, -1e+30
      %v2268 = vsel %vm2236, %v2169, -1e+30
      %v2269 = vsel %vm2237, %v2170, -1e+30
      %v2270 = vsel %vm2238, %v2171, -1e+30
      %v2271 = vsel %vm2239, %v2172, -1e+30
      %v2272 = vsel %vm2240, %v2173, -1e+30
      %v2273 = vsel %vm2241, %v2174, -1e+30
      %v2274 = vsel %vm2242, %v2175, -1e+30
      %v2275 = vsel %vm2243, %v2176, -1e+30
      %v2276 = vsel %vm2244, %v2177, -1e+30
      %v2277 = vsel %vm2245, %v2178, -1e+30
      %v2278 = vsel %vm2246, %v2179, -1e+30
      %v2279 = vsel %vm2247, %v2180, -1e+30
      %2280 = vmax.xlane.f32.xlu0 %v2248
      %v2281 = vpop.xlane.xlu0 %2280
      %2282 = vmax.xlane.f32.xlu0 %v2249
      %v2283 = vpop.xlane.xlu0 %2282
      %2284 = vmax.xlane.f32.xlu0 %v2250
      %v2285 = vpop.xlane.xlu0 %2284
      %2286 = vmax.xlane.f32.xlu0 %v2251
      %v2287 = vpop.xlane.xlu0 %2286
      %2288 = vmax.xlane.f32.xlu0 %v2252
      %v2289 = vpop.xlane.xlu0 %2288
      %2290 = vmax.xlane.f32.xlu0 %v2253
      %v2291 = vpop.xlane.xlu0 %2290
      %2292 = vmax.xlane.f32.xlu0 %v2254
      %v2293 = vpop.xlane.xlu0 %2292
      %2294 = vmax.xlane.f32.xlu0 %v2255
      %v2295 = vpop.xlane.xlu0 %2294
      %2296 = vmax.xlane.f32.xlu0 %v2256
      %v2297 = vpop.xlane.xlu0 %2296
      %2298 = vmax.xlane.f32.xlu0 %v2257
      %v2299 = vpop.xlane.xlu0 %2298
      %2300 = vmax.xlane.f32.xlu0 %v2258
      %v2301 = vpop.xlane.xlu0 %2300
      %2302 = vmax.xlane.f32.xlu0 %v2259
      %v2303 = vpop.xlane.xlu0 %2302
      %2304 = vmax.xlane.f32.xlu0 %v2260
      %v2305 = vpop.xlane.xlu0 %2304
      %2306 = vmax.xlane.f32.xlu0 %v2261
      %v2307 = vpop.xlane.xlu0 %2306
      %2308 = vmax.xlane.f32.xlu0 %v2262
      %v2309 = vpop.xlane.xlu0 %2308
      %2310 = vmax.xlane.f32.xlu0 %v2263
      %v2311 = vpop.xlane.xlu0 %2310
      %2312 = vmax.xlane.f32.xlu0 %v2264
      %v2313 = vpop.xlane.xlu0 %2312
      %2314 = vmax.xlane.f32.xlu0 %v2265
      %v2315 = vpop.xlane.xlu0 %2314
      %2316 = vmax.xlane.f32.xlu0 %v2266
      %v2317 = vpop.xlane.xlu0 %2316
      %2318 = vmax.xlane.f32.xlu0 %v2267
      %v2319 = vpop.xlane.xlu0 %2318
      %2320 = vmax.xlane.f32.xlu0 %v2268
      %v2321 = vpop.xlane.xlu0 %2320
      %2322 = vmax.xlane.f32.xlu0 %v2269
      %v2323 = vpop.xlane.xlu0 %2322
      %2324 = vmax.xlane.f32.xlu0 %v2270
      %v2325 = vpop.xlane.xlu0 %2324
      %2326 = vmax.xlane.f32.xlu0 %v2271
      %v2327 = vpop.xlane.xlu0 %2326
      %2328 = vmax.xlane.f32.xlu0 %v2272
      %v2329 = vpop.xlane.xlu0 %2328
      %2330 = vmax.xlane.f32.xlu0 %v2273
      %v2331 = vpop.xlane.xlu0 %2330
      %2332 = vmax.xlane.f32.xlu0 %v2274
      %v2333 = vpop.xlane.xlu0 %2332
      %2334 = vmax.xlane.f32.xlu0 %v2275
      %v2335 = vpop.xlane.xlu0 %2334
      %2336 = vmax.xlane.f32.xlu0 %v2276
      %v2337 = vpop.xlane.xlu0 %2336
      %2338 = vmax.xlane.f32.xlu0 %v2277
      %v2339 = vpop.xlane.xlu0 %2338
      %2340 = vmax.xlane.f32.xlu0 %v2278
      %v2341 = vpop.xlane.xlu0 %2340
      %2342 = vmax.xlane.f32.xlu0 %v2279
      %v2343 = vpop.xlane.xlu0 %2342
      %v2344 = vsub.f32 %v2248, %v2281
      %v2345 = vsub.f32 %v2249, %v2283
      %v2346 = vsub.f32 %v2250, %v2285
      %v2347 = vsub.f32 %v2251, %v2287
      %v2348 = vsub.f32 %v2252, %v2289
      %v2349 = vsub.f32 %v2253, %v2291
      %v2350 = vsub.f32 %v2254, %v2293
      %v2351 = vsub.f32 %v2255, %v2295
      %v2352 = vsub.f32 %v2256, %v2297
      %v2353 = vsub.f32 %v2257, %v2299
      %v2354 = vsub.f32 %v2258, %v2301
      %v2355 = vsub.f32 %v2259, %v2303
      %v2356 = vsub.f32 %v2260, %v2305
      %v2357 = vsub.f32 %v2261, %v2307
      %v2358 = vsub.f32 %v2262, %v2309
      %v2359 = vsub.f32 %v2263, %v2311
      %v2360 = vsub.f32 %v2264, %v2313
      %v2361 = vsub.f32 %v2265, %v2315
      %v2362 = vsub.f32 %v2266, %v2317
      %v2363 = vsub.f32 %v2267, %v2319
      %v2364 = vsub.f32 %v2268, %v2321
      %v2365 = vsub.f32 %v2269, %v2323
      %v2366 = vsub.f32 %v2270, %v2325
      %v2367 = vsub.f32 %v2271, %v2327
      %v2368 = vsub.f32 %v2272, %v2329
      %v2369 = vsub.f32 %v2273, %v2331
      %v2370 = vsub.f32 %v2274, %v2333
      %v2371 = vsub.f32 %v2275, %v2335
      %v2372 = vsub.f32 %v2276, %v2337
      %v2373 = vsub.f32 %v2277, %v2339
      %v2374 = vsub.f32 %v2278, %v2341
      %v2375 = vsub.f32 %v2279, %v2343
      %v2376 = vmul.f32 %v2344, 1.442695
      %v2377 = vpow.pop %v2376
      %v2378 = vmul.f32 %v2345, 1.442695
      %v2379 = vpow.pop %v2378
      %v2380 = vmul.f32 %v2346, 1.442695
      %v2381 = vpow.pop %v2380
      %v2382 = vmul.f32 %v2347, 1.442695
      %v2383 = vpow.pop %v2382
      %v2384 = vmul.f32 %v2348, 1.442695
      %v2385 = vpow.pop %v2384
      %v2386 = vmul.f32 %v2349, 1.442695
      %v2387 = vpow.pop %v2386
      %v2388 = vmul.f32 %v2350, 1.442695
      %v2389 = vpow.pop %v2388
      %v2390 = vmul.f32 %v2351, 1.442695
      %v2391 = vpow.pop %v2390
      %v2392 = vmul.f32 %v2352, 1.442695
      %v2393 = vpow.pop %v2392
      %v2394 = vmul.f32 %v2353, 1.442695
      %v2395 = vpow.pop %v2394
      %v2396 = vmul.f32 %v2354, 1.442695
      %v2397 = vpow.pop %v2396
      %v2398 = vmul.f32 %v2355, 1.442695
      %v2399 = vpow.pop %v2398
      %v2400 = vmul.f32 %v2356, 1.442695
      %v2401 = vpow.pop %v2400
      %v2402 = vmul.f32 %v2357, 1.442695
      %v2403 = vpow.pop %v2402
      %v2404 = vmul.f32 %v2358, 1.442695
      %v2405 = vpow.pop %v2404
      %v2406 = vmul.f32 %v2359, 1.442695
      %v2407 = vpow.pop %v2406
      %v2408 = vmul.f32 %v2360, 1.442695
      %v2409 = vpow.pop %v2408
      %v2410 = vmul.f32 %v2361, 1.442695
      %v2411 = vpow.pop %v2410
      %v2412 = vmul.f32 %v2362, 1.442695
      %v2413 = vpow.pop %v2412
      %v2414 = vmul.f32 %v2363, 1.442695
      %v2415 = vpow.pop %v2414
      %v2416 = vmul.f32 %v2364, 1.442695
      %v2417 = vpow.pop %v2416
      %v2418 = vmul.f32 %v2365, 1.442695
      %v2419 = vpow.pop %v2418
      %v2420 = vmul.f32 %v2366, 1.442695
      %v2421 = vpow.pop %v2420
      %v2422 = vmul.f32 %v2367, 1.442695
      %v2423 = vpow.pop %v2422
      %v2424 = vmul.f32 %v2368, 1.442695
      %v2425 = vpow.pop %v2424
      %v2426 = vmul.f32 %v2369, 1.442695
      %v2427 = vpow.pop %v2426
      %v2428 = vmul.f32 %v2370, 1.442695
      %v2429 = vpow.pop %v2428
      %v2430 = vmul.f32 %v2371, 1.442695
      %v2431 = vpow.pop %v2430
      %v2432 = vmul.f32 %v2372, 1.442695
      %v2433 = vpow.pop %v2432
      %v2434 = vmul.f32 %v2373, 1.442695
      %v2435 = vpow.pop %v2434
      %v2436 = vmul.f32 %v2374, 1.442695
      %v2437 = vpow.pop %v2436
      %v2438 = vmul.f32 %v2375, 1.442695
      %v2439 = vpow.pop %v2438
      %2440 = vadd.xlane.f32.xlu0 %v2377
      %v2441 = vpop.xlane.xlu0 %2440
      %2442 = vadd.xlane.f32.xlu0 %v2379
      %v2443 = vpop.xlane.xlu0 %2442
      %2444 = vadd.xlane.f32.xlu0 %v2381
      %v2445 = vpop.xlane.xlu0 %2444
      %2446 = vadd.xlane.f32.xlu0 %v2383
      %v2447 = vpop.xlane.xlu0 %2446
      %2448 = vadd.xlane.f32.xlu0 %v2385
      %v2449 = vpop.xlane.xlu0 %2448
      %2450 = vadd.xlane.f32.xlu0 %v2387
      %v2451 = vpop.xlane.xlu0 %2450
      %2452 = vadd.xlane.f32.xlu0 %v2389
      %v2453 = vpop.xlane.xlu0 %2452
      %2454 = vadd.xlane.f32.xlu0 %v2391
      %v2455 = vpop.xlane.xlu0 %2454
      %2456 = vadd.xlane.f32.xlu0 %v2393
      %v2457 = vpop.xlane.xlu0 %2456
      %2458 = vadd.xlane.f32.xlu0 %v2395
      %v2459 = vpop.xlane.xlu0 %2458
      %2460 = vadd.xlane.f32.xlu0 %v2397
      %v2461 = vpop.xlane.xlu0 %2460
      %2462 = vadd.xlane.f32.xlu0 %v2399
      %v2463 = vpop.xlane.xlu0 %2462
      %2464 = vadd.xlane.f32.xlu0 %v2401
      %v2465 = vpop.xlane.xlu0 %2464
      %2466 = vadd.xlane.f32.xlu0 %v2403
      %v2467 = vpop.xlane.xlu0 %2466
      %2468 = vadd.xlane.f32.xlu0 %v2405
      %v2469 = vpop.xlane.xlu0 %2468
      %2470 = vadd.xlane.f32.xlu0 %v2407
      %v2471 = vpop.xlane.xlu0 %2470
      %2472 = vadd.xlane.f32.xlu0 %v2409
      %v2473 = vpop.xlane.xlu0 %2472
      %2474 = vadd.xlane.f32.xlu0 %v2411
      %v2475 = vpop.xlane.xlu0 %2474
      %2476 = vadd.xlane.f32.xlu0 %v2413
      %v2477 = vpop.xlane.xlu0 %2476
      %2478 = vadd.xlane.f32.xlu0 %v2415
      %v2479 = vpop.xlane.xlu0 %2478
      %2480 = vadd.xlane.f32.xlu0 %v2417
      %v2481 = vpop.xlane.xlu0 %2480
      %2482 = vadd.xlane.f32.xlu0 %v2419
      %v2483 = vpop.xlane.xlu0 %2482
      %2484 = vadd.xlane.f32.xlu0 %v2421
      %v2485 = vpop.xlane.xlu0 %2484
      %2486 = vadd.xlane.f32.xlu0 %v2423
      %v2487 = vpop.xlane.xlu0 %2486
      %2488 = vadd.xlane.f32.xlu0 %v2425
      %v2489 = vpop.xlane.xlu0 %2488
      %2490 = vadd.xlane.f32.xlu0 %v2427
      %v2491 = vpop.xlane.xlu0 %2490
      %2492 = vadd.xlane.f32.xlu0 %v2429
      %v2493 = vpop.xlane.xlu0 %2492
      %2494 = vadd.xlane.f32.xlu0 %v2431
      %v2495 = vpop.xlane.xlu0 %2494
      %2496 = vadd.xlane.f32.xlu0 %v2433
      %v2497 = vpop.xlane.xlu0 %2496
      %2498 = vadd.xlane.f32.xlu0 %v2435
      %v2499 = vpop.xlane.xlu0 %2498
      %2500 = vadd.xlane.f32.xlu0 %v2437
      %v2501 = vpop.xlane.xlu0 %2500
      %2502 = vadd.xlane.f32.xlu0 %v2439
      %v2503 = vpop.xlane.xlu0 %2502
      %v2504 = vrcp.pop %v2441
      %v2505 = vrcp.pop %v2443
      %v2506 = vrcp.pop %v2445
      %v2507 = vrcp.pop %v2447
      %v2508 = vrcp.pop %v2449
      %v2509 = vrcp.pop %v2451
      %v2510 = vrcp.pop %v2453
      %v2511 = vrcp.pop %v2455
      %v2512 = vrcp.pop %v2457
      %v2513 = vrcp.pop %v2459
      %v2514 = vrcp.pop %v2461
      %v2515 = vrcp.pop %v2463
      %v2516 = vrcp.pop %v2465
      %v2517 = vrcp.pop %v2467
      %v2518 = vrcp.pop %v2469
      %v2519 = vrcp.pop %v2471
      %v2520 = vrcp.pop %v2473
      %v2521 = vrcp.pop %v2475
      %v2522 = vrcp.pop %v2477
      %v2523 = vrcp.pop %v2479
      %v2524 = vrcp.pop %v2481
      %v2525 = vrcp.pop %v2483
      %v2526 = vrcp.pop %v2485
      %v2527 = vrcp.pop %v2487
      %v2528 = vrcp.pop %v2489
      %v2529 = vrcp.pop %v2491
      %v2530 = vrcp.pop %v2493
      %v2531 = vrcp.pop %v2495
      %v2532 = vrcp.pop %v2497
      %v2533 = vrcp.pop %v2499
      %v2534 = vrcp.pop %v2501
      %v2535 = vrcp.pop %v2503
      %v2536 = vmul.f32 %v2377, %v2504
      %v2537 = vmul.f32 %v2379, %v2505
      %v2538 = vmul.f32 %v2381, %v2506
      %v2539 = vmul.f32 %v2383, %v2507
      %v2540 = vmul.f32 %v2385, %v2508
      %v2541 = vmul.f32 %v2387, %v2509
      %v2542 = vmul.f32 %v2389, %v2510
      %v2543 = vmul.f32 %v2391, %v2511
      %v2544 = vmul.f32 %v2393, %v2512
      %v2545 = vmul.f32 %v2395, %v2513
      %v2546 = vmul.f32 %v2397, %v2514
      %v2547 = vmul.f32 %v2399, %v2515
      %v2548 = vmul.f32 %v2401, %v2516
      %v2549 = vmul.f32 %v2403, %v2517
      %v2550 = vmul.f32 %v2405, %v2518
      %v2551 = vmul.f32 %v2407, %v2519
      %v2552 = vmul.f32 %v2409, %v2520
      %v2553 = vmul.f32 %v2411, %v2521
      %v2554 = vmul.f32 %v2413, %v2522
      %v2555 = vmul.f32 %v2415, %v2523
      %v2556 = vmul.f32 %v2417, %v2524
      %v2557 = vmul.f32 %v2419, %v2525
      %v2558 = vmul.f32 %v2421, %v2526
      %v2559 = vmul.f32 %v2423, %v2527
      %v2560 = vmul.f32 %v2425, %v2528
      %v2561 = vmul.f32 %v2427, %v2529
      %v2562 = vmul.f32 %v2429, %v2530
      %v2563 = vmul.f32 %v2431, %v2531
      %v2564 = vmul.f32 %v2433, %v2532
      %v2565 = vmul.f32 %v2435, %v2533
      %v2566 = vmul.f32 %v2437, %v2534
      %v2567 = vmul.f32 %v2439, %v2535
      %v2568 = vpack.c.bf16 %v2536, %v2536
      %v2569 = vpack.c.bf16 %v2537, %v2537
      %v2570 = vpack.c.bf16 %v2538, %v2538
      %v2571 = vpack.c.bf16 %v2539, %v2539
      %v2572 = vpack.c.bf16 %v2540, %v2540
      %v2573 = vpack.c.bf16 %v2541, %v2541
      %v2574 = vpack.c.bf16 %v2542, %v2542
      %v2575 = vpack.c.bf16 %v2543, %v2543
      %v2576 = vpack.c.bf16 %v2544, %v2544
      %v2577 = vpack.c.bf16 %v2545, %v2545
      %v2578 = vpack.c.bf16 %v2546, %v2546
      %v2579 = vpack.c.bf16 %v2547, %v2547
      %v2580 = vpack.c.bf16 %v2548, %v2548
      %v2581 = vpack.c.bf16 %v2549, %v2549
      %v2582 = vpack.c.bf16 %v2550, %v2550
      %v2583 = vpack.c.bf16 %v2551, %v2551
      %v2584 = vpack.c.bf16 %v2552, %v2552
      %v2585 = vpack.c.bf16 %v2553, %v2553
      %v2586 = vpack.c.bf16 %v2554, %v2554
      %v2587 = vpack.c.bf16 %v2555, %v2555
      %v2588 = vpack.c.bf16 %v2556, %v2556
      %v2589 = vpack.c.bf16 %v2557, %v2557
      %v2590 = vpack.c.bf16 %v2558, %v2558
      %v2591 = vpack.c.bf16 %v2559, %v2559
      %v2592 = vpack.c.bf16 %v2560, %v2560
      %v2593 = vpack.c.bf16 %v2561, %v2561
      %v2594 = vpack.c.bf16 %v2562, %v2562
      %v2595 = vpack.c.bf16 %v2563, %v2563
      %v2596 = vpack.c.bf16 %v2564, %v2564
      %v2597 = vpack.c.bf16 %v2565, %v2565
      %v2598 = vpack.c.bf16 %v2566, %v2566
      %v2599 = vpack.c.bf16 %v2567, %v2567
      %v2616 = vunpack.c.l.b16 %v2568
      %v2617 = vunpack.c.l.b16 %v2569
      %v2618 = vunpack.c.l.b16 %v2570
      %v2619 = vunpack.c.l.b16 %v2571
      %v2620 = vunpack.c.l.b16 %v2572
      %v2621 = vunpack.c.l.b16 %v2573
      %v2622 = vunpack.c.l.b16 %v2574
      %v2623 = vunpack.c.l.b16 %v2575
      %v2624 = vunpack.c.l.b16 %v2576
      %v2625 = vunpack.c.l.b16 %v2577
      %v2626 = vunpack.c.l.b16 %v2578
      %v2627 = vunpack.c.l.b16 %v2579
      %v2628 = vunpack.c.l.b16 %v2580
      %v2629 = vunpack.c.l.b16 %v2581
      %v2630 = vunpack.c.l.b16 %v2582
      %v2631 = vunpack.c.l.b16 %v2583
      %v2632 = vpack.c.b16 %v2617, %v2616
      %v2633 = vpack.c.b16 %v2619, %v2618
      %v2634 = vpack.c.b16 %v2621, %v2620
      %v2635 = vpack.c.b16 %v2623, %v2622
      %v2636 = vpack.c.b16 %v2625, %v2624
      %v2637 = vpack.c.b16 %v2627, %v2626
      %v2638 = vpack.c.b16 %v2629, %v2628
      %v2639 = vpack.c.b16 %v2631, %v2630
      %v2648 = vunpack.c.l.b16 %v1875
      %v2649 = vunpack.c.l.b16 %v1876
      %v2650 = vunpack.c.l.b16 %v1877
      %v2651 = vunpack.c.l.b16 %v1878
      %v2652 = vunpack.c.l.b16 %v1879
      %v2653 = vunpack.c.l.b16 %v1880
      %v2654 = vunpack.c.l.b16 %v1881
      %v2655 = vunpack.c.l.b16 %v1882
      %v2656 = vunpack.c.l.b16 %v1883
      %v2657 = vunpack.c.l.b16 %v1884
      %v2658 = vunpack.c.l.b16 %v1885
      %v2659 = vunpack.c.l.b16 %v1886
      %v2660 = vunpack.c.l.b16 %v1887
      %v2661 = vunpack.c.l.b16 %v1888
      %v2662 = vunpack.c.l.b16 %v1889
      %v2663 = vunpack.c.l.b16 %v1890
      %v2664 = vpack.c.b16 %v2649, %v2648
      %v2665 = vpack.c.b16 %v2651, %v2650
      %v2666 = vpack.c.b16 %v2653, %v2652
      %v2667 = vpack.c.b16 %v2655, %v2654
      %v2668 = vpack.c.b16 %v2657, %v2656
      %v2669 = vpack.c.b16 %v2659, %v2658
      %v2670 = vpack.c.b16 %v2661, %v2660
      %v2671 = vpack.c.b16 %v2663, %v2662
      %2680 = vmatpush.bf16.msra.mxu0 %v2671
      %2681 = vmatpush.bf16.msra.mxu0 %v2670
      %2682 = vmatpush.bf16.msra.mxu0 %v2669
      %2683 = vmatpush.bf16.msra.mxu0 %v2668
      %2684 = vmatpush.bf16.msra.mxu0 %v2667
      %2685 = vmatpush.bf16.msra.mxu0 %v2666
      %2686 = vmatpush.bf16.msra.mxu0 %v2665
      %2687 = vmatpush.bf16.msra.mxu0 %v2664
      %2688 = vmatmul.bf16.gmra.mxu0 %v2632
      %v2689 = vpop.f32.mrf.mxu0
      %v2690 = vadd.f32 0.0, %v2689
      %v2691 = vpop.f32.mrf.mxu0
      %v2692 = vadd.f32 0.0, %v2691
      %2693 = vmatmul.bf16.gmra.mxu0 %v2633
      %v2694 = vpop.f32.mrf.mxu0
      %v2695 = vadd.f32 0.0, %v2694
      %v2696 = vpop.f32.mrf.mxu0
      %v2697 = vadd.f32 0.0, %v2696
      %2698 = vmatmul.bf16.gmra.mxu0 %v2634
      %v2699 = vpop.f32.mrf.mxu0
      %v2700 = vadd.f32 0.0, %v2699
      %v2701 = vpop.f32.mrf.mxu0
      %v2702 = vadd.f32 0.0, %v2701
      %2703 = vmatmul.bf16.gmra.mxu0 %v2635
      %v2704 = vpop.f32.mrf.mxu0
      %v2705 = vadd.f32 0.0, %v2704
      %v2706 = vpop.f32.mrf.mxu0
      %v2707 = vadd.f32 0.0, %v2706
      %2708 = vmatmul.bf16.gmra.mxu0 %v2636
      %v2709 = vpop.f32.mrf.mxu0
      %v2710 = vadd.f32 0.0, %v2709
      %v2711 = vpop.f32.mrf.mxu0
      %v2712 = vadd.f32 0.0, %v2711
      %2713 = vmatmul.bf16.gmra.mxu0 %v2637
      %v2714 = vpop.f32.mrf.mxu0
      %v2715 = vadd.f32 0.0, %v2714
      %v2716 = vpop.f32.mrf.mxu0
      %v2717 = vadd.f32 0.0, %v2716
      %2718 = vmatmul.bf16.gmra.mxu0 %v2638
      %v2719 = vpop.f32.mrf.mxu0
      %v2720 = vadd.f32 0.0, %v2719
      %v2721 = vpop.f32.mrf.mxu0
      %v2722 = vadd.f32 0.0, %v2721
      %2723 = vmatmul.bf16.gmra.mxu0 %v2639
      %v2724 = vpop.f32.mrf.mxu0
      %v2725 = vadd.f32 0.0, %v2724
      %v2726 = vpop.f32.mrf.mxu0
      %v2727 = vadd.f32 0.0, %v2726
      %2728 = vdwg.mxu0
      %v2745 = vunpack.c.l.b16 %v2584
      %v2746 = vunpack.c.l.b16 %v2585
      %v2747 = vunpack.c.l.b16 %v2586
      %v2748 = vunpack.c.l.b16 %v2587
      %v2749 = vunpack.c.l.b16 %v2588
      %v2750 = vunpack.c.l.b16 %v2589
      %v2751 = vunpack.c.l.b16 %v2590
      %v2752 = vunpack.c.l.b16 %v2591
      %v2753 = vunpack.c.l.b16 %v2592
      %v2754 = vunpack.c.l.b16 %v2593
      %v2755 = vunpack.c.l.b16 %v2594
      %v2756 = vunpack.c.l.b16 %v2595
      %v2757 = vunpack.c.l.b16 %v2596
      %v2758 = vunpack.c.l.b16 %v2597
      %v2759 = vunpack.c.l.b16 %v2598
      %v2760 = vunpack.c.l.b16 %v2599
      %v2761 = vpack.c.b16 %v2746, %v2745
      %v2762 = vpack.c.b16 %v2748, %v2747
      %v2763 = vpack.c.b16 %v2750, %v2749
      %v2764 = vpack.c.b16 %v2752, %v2751
      %v2765 = vpack.c.b16 %v2754, %v2753
      %v2766 = vpack.c.b16 %v2756, %v2755
      %v2767 = vpack.c.b16 %v2758, %v2757
      %v2768 = vpack.c.b16 %v2760, %v2759
      %v2777 = vunpack.c.l.b16 %v1907
      %v2778 = vunpack.c.l.b16 %v1908
      %v2779 = vunpack.c.l.b16 %v1909
      %v2780 = vunpack.c.l.b16 %v1910
      %v2781 = vunpack.c.l.b16 %v1911
      %v2782 = vunpack.c.l.b16 %v1912
      %v2783 = vunpack.c.l.b16 %v1913
      %v2784 = vunpack.c.l.b16 %v1914
      %v2785 = vunpack.c.l.b16 %v1915
      %v2786 = vunpack.c.l.b16 %v1916
      %v2787 = vunpack.c.l.b16 %v1917
      %v2788 = vunpack.c.l.b16 %v1918
      %v2789 = vunpack.c.l.b16 %v1919
      %v2790 = vunpack.c.l.b16 %v1920
      %v2791 = vunpack.c.l.b16 %v1921
      %v2792 = vunpack.c.l.b16 %v1922
      %v2793 = vpack.c.b16 %v2778, %v2777
      %v2794 = vpack.c.b16 %v2780, %v2779
      %v2795 = vpack.c.b16 %v2782, %v2781
      %v2796 = vpack.c.b16 %v2784, %v2783
      %v2797 = vpack.c.b16 %v2786, %v2785
      %v2798 = vpack.c.b16 %v2788, %v2787
      %v2799 = vpack.c.b16 %v2790, %v2789
      %v2800 = vpack.c.b16 %v2792, %v2791
      %2809 = vmatpush.bf16.msra.mxu0 %v2800
      %2810 = vmatpush.bf16.msra.mxu0 %v2799
      %2811 = vmatpush.bf16.msra.mxu0 %v2798
      %2812 = vmatpush.bf16.msra.mxu0 %v2797
      %2813 = vmatpush.bf16.msra.mxu0 %v2796
      %2814 = vmatpush.bf16.msra.mxu0 %v2795
      %2815 = vmatpush.bf16.msra.mxu0 %v2794
      %2816 = vmatpush.bf16.msra.mxu0 %v2793
      %2817 = vmatmul.bf16.gmra.mxu0 %v2761
      %v2818 = vpop.f32.mrf.mxu0
      %v2819 = vadd.f32 0.0, %v2818
      %v2820 = vpop.f32.mrf.mxu0
      %v2821 = vadd.f32 0.0, %v2820
      %2822 = vmatmul.bf16.gmra.mxu0 %v2762
      %v2823 = vpop.f32.mrf.mxu0
      %v2824 = vadd.f32 0.0, %v2823
      %v2825 = vpop.f32.mrf.mxu0
      %v2826 = vadd.f32 0.0, %v2825
      %2827 = vmatmul.bf16.gmra.mxu0 %v2763
      %v2828 = vpop.f32.mrf.mxu0
      %v2829 = vadd.f32 0.0, %v2828
      %v2830 = vpop.f32.mrf.mxu0
      %v2831 = vadd.f32 0.0, %v2830
      %2832 = vmatmul.bf16.gmra.mxu0 %v2764
      %v2833 = vpop.f32.mrf.mxu0
      %v2834 = vadd.f32 0.0, %v2833
      %v2835 = vpop.f32.mrf.mxu0
      %v2836 = vadd.f32 0.0, %v2835
      %2837 = vmatmul.bf16.gmra.mxu0 %v2765
      %v2838 = vpop.f32.mrf.mxu0
      %v2839 = vadd.f32 0.0, %v2838
      %v2840 = vpop.f32.mrf.mxu0
      %v2841 = vadd.f32 0.0, %v2840
      %2842 = vmatmul.bf16.gmra.mxu0 %v2766
      %v2843 = vpop.f32.mrf.mxu0
      %v2844 = vadd.f32 0.0, %v2843
      %v2845 = vpop.f32.mrf.mxu0
      %v2846 = vadd.f32 0.0, %v2845
      %2847 = vmatmul.bf16.gmra.mxu0 %v2767
      %v2848 = vpop.f32.mrf.mxu0
      %v2849 = vadd.f32 0.0, %v2848
      %v2850 = vpop.f32.mrf.mxu0
      %v2851 = vadd.f32 0.0, %v2850
      %2852 = vmatmul.bf16.gmra.mxu0 %v2768
      %v2853 = vpop.f32.mrf.mxu0
      %v2854 = vadd.f32 0.0, %v2853
      %v2855 = vpop.f32.mrf.mxu0
      %v2856 = vadd.f32 0.0, %v2855
      %2857 = vdwg.mxu0
      %v2858 = vpack.c.bf16 %v2692, %v2690
      %v2859 = vpack.c.bf16 %v2821, %v2819
      %v2860 = vpack.c.bf16 %v2697, %v2695
      %v2861 = vpack.c.bf16 %v2826, %v2824
      %v2862 = vpack.c.bf16 %v2702, %v2700
      %v2863 = vpack.c.bf16 %v2831, %v2829
      %v2864 = vpack.c.bf16 %v2707, %v2705
      %v2865 = vpack.c.bf16 %v2836, %v2834
      %v2866 = vpack.c.bf16 %v2712, %v2710
      %v2867 = vpack.c.bf16 %v2841, %v2839
      %v2868 = vpack.c.bf16 %v2717, %v2715
      %v2869 = vpack.c.bf16 %v2846, %v2844
      %v2870 = vpack.c.bf16 %v2722, %v2720
      %v2871 = vpack.c.bf16 %v2851, %v2849
      %v2872 = vpack.c.bf16 %v2727, %v2725
      %v2873 = vpack.c.bf16 %v2856, %v2854
      %v2874 = vld [vmem:[%s7] sm:$0xff]
      %v2875 = vld [vmem:[%s7 + $0x8] sm:$0xff]
      %v2876 = vld [vmem:[%s7 + $0x10] sm:$0xff]
      %v2877 = vld [vmem:[%s7 + $0x18] sm:$0xff]
      %v2878 = vld [vmem:[%s7 + $0x20] sm:$0xff]
      %v2879 = vld [vmem:[%s7 + $0x28] sm:$0xff]
      %v2880 = vld [vmem:[%s7 + $0x30] sm:$0xff]
      %v2881 = vld [vmem:[%s7 + $0x38] sm:$0xff]
      %v2882 = vld [vmem:[%s7 + $0x40] sm:$0xff]
      %v2883 = vld [vmem:[%s7 + $0x48] sm:$0xff]
      %v2884 = vld [vmem:[%s7 + $0x50] sm:$0xff]
      %v2885 = vld [vmem:[%s7 + $0x58] sm:$0xff]
      %v2886 = vld [vmem:[%s7 + $0x60] sm:$0xff]
      %v2887 = vld [vmem:[%s7 + $0x68] sm:$0xff]
      %v2888 = vld [vmem:[%s7 + $0x70] sm:$0xff]
      %v2889 = vld [vmem:[%s7 + $0x78] sm:$0xff]
      %v2890 = vld [vmem:[%s7 + $0x80] sm:$0xff]
      %v2891 = vld [vmem:[%s7 + $0x88] sm:$0xff]
      %v2892 = vld [vmem:[%s7 + $0x90] sm:$0xff]
      %v2893 = vld [vmem:[%s7 + $0x98] sm:$0xff]
      %v2894 = vld [vmem:[%s7 + $0xa0] sm:$0xff]
      %v2895 = vld [vmem:[%s7 + $0xa8] sm:$0xff]
      %v2896 = vld [vmem:[%s7 + $0xb0] sm:$0xff]
      %v2897 = vld [vmem:[%s7 + $0xb8] sm:$0xff]
      %v2898 = vld [vmem:[%s7 + $0xc0] sm:$0xff]
      %v2899 = vld [vmem:[%s7 + $0xc8] sm:$0xff]
      %v2900 = vld [vmem:[%s7 + $0xd0] sm:$0xff]
      %v2901 = vld [vmem:[%s7 + $0xd8] sm:$0xff]
      %v2902 = vld [vmem:[%s7 + $0xe0] sm:$0xff]
      %v2903 = vld [vmem:[%s7 + $0xe8] sm:$0xff]
      %v2904 = vld [vmem:[%s7 + $0xf0] sm:$0xff]
      %v2905 = vld [vmem:[%s7 + $0xf8] sm:$0xff]
      %v2906 = vld [vmem:[%s8] sm:$0x3]
      %v2908 = vperm.slane %v2906, 0
      %v2909 = vperm.slane %v2906, 1
      %v2944 = vunpack.c.l.b16 %v2874
      %v2945 = vunpack.c.h.b16 %v2874
      %v2946 = vunpack.c.l.b16 %v2875
      %v2947 = vunpack.c.h.b16 %v2875
      %v2948 = vunpack.c.l.b16 %v2876
      %v2949 = vunpack.c.h.b16 %v2876
      %v2950 = vunpack.c.l.b16 %v2877
      %v2951 = vunpack.c.h.b16 %v2877
      %v2952 = vunpack.c.l.b16 %v2878
      %v2953 = vunpack.c.h.b16 %v2878
      %v2954 = vunpack.c.l.b16 %v2879
      %v2955 = vunpack.c.h.b16 %v2879
      %v2956 = vunpack.c.l.b16 %v2880
      %v2957 = vunpack.c.h.b16 %v2880
      %v2958 = vunpack.c.l.b16 %v2881
      %v2959 = vunpack.c.h.b16 %v2881
      %v2960 = vunpack.c.l.b16 %v2882
      %v2961 = vunpack.c.h.b16 %v2882
      %v2962 = vunpack.c.l.b16 %v2883
      %v2963 = vunpack.c.h.b16 %v2883
      %v2964 = vunpack.c.l.b16 %v2884
      %v2965 = vunpack.c.h.b16 %v2884
      %v2966 = vunpack.c.l.b16 %v2885
      %v2967 = vunpack.c.h.b16 %v2885
      %v2968 = vunpack.c.l.b16 %v2886
      %v2969 = vunpack.c.h.b16 %v2886
      %v2970 = vunpack.c.l.b16 %v2887
      %v2971 = vunpack.c.h.b16 %v2887
      %v2972 = vunpack.c.l.b16 %v2888
      %v2973 = vunpack.c.h.b16 %v2888
      %v2974 = vunpack.c.l.b16 %v2889
      %v2975 = vunpack.c.h.b16 %v2889
      %v2976 = vunpack.c.l.b16 %v2890
      %v2977 = vunpack.c.h.b16 %v2890
      %v2978 = vunpack.c.l.b16 %v2891
      %v2979 = vunpack.c.h.b16 %v2891
      %v2980 = vunpack.c.l.b16 %v2892
      %v2981 = vunpack.c.h.b16 %v2892
      %v2982 = vunpack.c.l.b16 %v2893
      %v2983 = vunpack.c.h.b16 %v2893
      %v2984 = vunpack.c.l.b16 %v2894
      %v2985 = vunpack.c.h.b16 %v2894
      %v2986 = vunpack.c.l.b16 %v2895
      %v2987 = vunpack.c.h.b16 %v2895
      %v2988 = vunpack.c.l.b16 %v2896
      %v2989 = vunpack.c.h.b16 %v2896
      %v2990 = vunpack.c.l.b16 %v2897
      %v2991 = vunpack.c.h.b16 %v2897
      %v2992 = vunpack.c.l.b16 %v2898
      %v2993 = vunpack.c.h.b16 %v2898
      %v2994 = vunpack.c.l.b16 %v2899
      %v2995 = vunpack.c.h.b16 %v2899
      %v2996 = vunpack.c.l.b16 %v2900
      %v2997 = vunpack.c.h.b16 %v2900
      %v2998 = vunpack.c.l.b16 %v2901
      %v2999 = vunpack.c.h.b16 %v2901
      %v3000 = vunpack.c.l.b16 %v2902
      %v3001 = vunpack.c.h.b16 %v2902
      %v3002 = vunpack.c.l.b16 %v2903
      %v3003 = vunpack.c.h.b16 %v2903
      %v3004 = vunpack.c.l.b16 %v2904
      %v3005 = vunpack.c.h.b16 %v2904
      %v3006 = vunpack.c.l.b16 %v2905
      %v3007 = vunpack.c.h.b16 %v2905
      %v3008 = vpack.c.b16 %v2946, %v2944
      %v3009 = vpack.c.b16 %v2947, %v2945
      %v3010 = vpack.c.b16 %v2950, %v2948
      %v3011 = vpack.c.b16 %v2951, %v2949
      %v3012 = vpack.c.b16 %v2954, %v2952
      %v3013 = vpack.c.b16 %v2955, %v2953
      %v3014 = vpack.c.b16 %v2958, %v2956
      %v3015 = vpack.c.b16 %v2959, %v2957
      %v3016 = vpack.c.b16 %v2962, %v2960
      %v3017 = vpack.c.b16 %v2963, %v2961
      %v3018 = vpack.c.b16 %v2966, %v2964
      %v3019 = vpack.c.b16 %v2967, %v2965
      %v3020 = vpack.c.b16 %v2970, %v2968
      %v3021 = vpack.c.b16 %v2971, %v2969
      %v3022 = vpack.c.b16 %v2974, %v2972
      %v3023 = vpack.c.b16 %v2975, %v2973
      %v3024 = vpack.c.b16 %v2978, %v2976
      %v3025 = vpack.c.b16 %v2979, %v2977
      %v3026 = vpack.c.b16 %v2982, %v2980
      %v3027 = vpack.c.b16 %v2983, %v2981
      %v3028 = vpack.c.b16 %v2986, %v2984
      %v3029 = vpack.c.b16 %v2987, %v2985
      %v3030 = vpack.c.b16 %v2990, %v2988
      %v3031 = vpack.c.b16 %v2991, %v2989
      %v3032 = vpack.c.b16 %v2994, %v2992
      %v3033 = vpack.c.b16 %v2995, %v2993
      %v3034 = vpack.c.b16 %v2998, %v2996
      %v3035 = vpack.c.b16 %v2999, %v2997
      %v3036 = vpack.c.b16 %v3002, %v3000
      %v3037 = vpack.c.b16 %v3003, %v3001
      %v3038 = vpack.c.b16 %v3006, %v3004
      %v3039 = vpack.c.b16 %v3007, %v3005
      %3072 = vmatpush.bf16.msra.mxu0 %v3022
      %3073 = vmatpush.bf16.msra.mxu0 %v3020
      %3074 = vmatpush.bf16.msra.mxu0 %v3018
      %3075 = vmatpush.bf16.msra.mxu0 %v3016
      %3076 = vmatpush.bf16.msra.mxu0 %v3014
      %3077 = vmatpush.bf16.msra.mxu0 %v3012
      %3078 = vmatpush.bf16.msra.mxu0 %v3010
      %3079 = vmatpush.bf16.msra.mxu0 %v3008
      %3080 = vmatmul.bf16.gmra.mxu0 %v2858
      %v3081 = vpop.f32.mrf.mxu0
      %v3082 = vadd.f32 %v2908, %v3081
      %v3083 = vpop.f32.mrf.mxu0
      %v3084 = vadd.f32 %v2908, %v3083
      %3085 = vmatmul.bf16.gmra.mxu0 %v2860
      %v3086 = vpop.f32.mrf.mxu0
      %v3087 = vadd.f32 %v2908, %v3086
      %v3088 = vpop.f32.mrf.mxu0
      %v3089 = vadd.f32 %v2908, %v3088
      %3090 = vmatmul.bf16.gmra.mxu0 %v2862
      %v3091 = vpop.f32.mrf.mxu0
      %v3092 = vadd.f32 %v2908, %v3091
      %v3093 = vpop.f32.mrf.mxu0
      %v3094 = vadd.f32 %v2908, %v3093
      %3095 = vmatmul.bf16.gmra.mxu0 %v2864
      %v3096 = vpop.f32.mrf.mxu0
      %v3097 = vadd.f32 %v2908, %v3096
      %v3098 = vpop.f32.mrf.mxu0
      %v3099 = vadd.f32 %v2908, %v3098
      %3100 = vmatmul.bf16.gmra.mxu0 %v2866
      %v3101 = vpop.f32.mrf.mxu0
      %v3102 = vadd.f32 %v2908, %v3101
      %v3103 = vpop.f32.mrf.mxu0
      %v3104 = vadd.f32 %v2908, %v3103
      %3105 = vmatmul.bf16.gmra.mxu0 %v2868
      %v3106 = vpop.f32.mrf.mxu0
      %v3107 = vadd.f32 %v2908, %v3106
      %v3108 = vpop.f32.mrf.mxu0
      %v3109 = vadd.f32 %v2908, %v3108
      %3110 = vmatmul.bf16.gmra.mxu0 %v2870
      %v3111 = vpop.f32.mrf.mxu0
      %v3112 = vadd.f32 %v2908, %v3111
      %v3113 = vpop.f32.mrf.mxu0
      %v3114 = vadd.f32 %v2908, %v3113
      %3115 = vmatmul.bf16.gmra.mxu0 %v2872
      %v3116 = vpop.f32.mrf.mxu0
      %v3117 = vadd.f32 %v2908, %v3116
      %v3118 = vpop.f32.mrf.mxu0
      %v3119 = vadd.f32 %v2908, %v3118
      %3120 = vdwg.mxu0
      %3121 = vmatpush.bf16.msra.mxu0 %v3038
      %3122 = vmatpush.bf16.msra.mxu0 %v3036
      %3123 = vmatpush.bf16.msra.mxu0 %v3034
      %3124 = vmatpush.bf16.msra.mxu0 %v3032
      %3125 = vmatpush.bf16.msra.mxu0 %v3030
      %3126 = vmatpush.bf16.msra.mxu0 %v3028
      %3127 = vmatpush.bf16.msra.mxu0 %v3026
      %3128 = vmatpush.bf16.msra.mxu0 %v3024
      %3129 = vmatmul.bf16.gmra.mxu0 %v2859
      %v3130 = vpop.f32.mrf.mxu0
      %v3131 = vadd.f32 %v3082, %v3130
      %v3132 = vpop.f32.mrf.mxu0
      %v3133 = vadd.f32 %v3084, %v3132
      %3134 = vmatmul.bf16.gmra.mxu0 %v2861
      %v3135 = vpop.f32.mrf.mxu0
      %v3136 = vadd.f32 %v3087, %v3135
      %v3137 = vpop.f32.mrf.mxu0
      %v3138 = vadd.f32 %v3089, %v3137
      %3139 = vmatmul.bf16.gmra.mxu0 %v2863
      %v3140 = vpop.f32.mrf.mxu0
      %v3141 = vadd.f32 %v3092, %v3140
      %v3142 = vpop.f32.mrf.mxu0
      %v3143 = vadd.f32 %v3094, %v3142
      %3144 = vmatmul.bf16.gmra.mxu0 %v2865
      %v3145 = vpop.f32.mrf.mxu0
      %v3146 = vadd.f32 %v3097, %v3145
      %v3147 = vpop.f32.mrf.mxu0
      %v3148 = vadd.f32 %v3099, %v3147
      %3149 = vmatmul.bf16.gmra.mxu0 %v2867
      %v3150 = vpop.f32.mrf.mxu0
      %v3151 = vadd.f32 %v3102, %v3150
      %v3152 = vpop.f32.mrf.mxu0
      %v3153 = vadd.f32 %v3104, %v3152
      %3154 = vmatmul.bf16.gmra.mxu0 %v2869
      %v3155 = vpop.f32.mrf.mxu0
      %v3156 = vadd.f32 %v3107, %v3155
      %v3157 = vpop.f32.mrf.mxu0
      %v3158 = vadd.f32 %v3109, %v3157
      %3159 = vmatmul.bf16.gmra.mxu0 %v2871
      %v3160 = vpop.f32.mrf.mxu0
      %v3161 = vadd.f32 %v3112, %v3160
      %v3162 = vpop.f32.mrf.mxu0
      %v3163 = vadd.f32 %v3114, %v3162
      %3164 = vmatmul.bf16.gmra.mxu0 %v2873
      %v3165 = vpop.f32.mrf.mxu0
      %v3166 = vadd.f32 %v3117, %v3165
      %v3167 = vpop.f32.mrf.mxu0
      %v3168 = vadd.f32 %v3119, %v3167
      %3169 = vdwg.mxu0
      %3170 = vmatpush.bf16.msra.mxu0 %v3023
      %3171 = vmatpush.bf16.msra.mxu0 %v3021
      %3172 = vmatpush.bf16.msra.mxu0 %v3019
      %3173 = vmatpush.bf16.msra.mxu0 %v3017
      %3174 = vmatpush.bf16.msra.mxu0 %v3015
      %3175 = vmatpush.bf16.msra.mxu0 %v3013
      %3176 = vmatpush.bf16.msra.mxu0 %v3011
      %3177 = vmatpush.bf16.msra.mxu0 %v3009
      %3178 = vmatmul.bf16.gmra.mxu0 %v2858
      %v3179 = vpop.f32.mrf.mxu0
      %v3180 = vadd.f32 %v2909, %v3179
      %v3181 = vpop.f32.mrf.mxu0
      %v3182 = vadd.f32 %v2909, %v3181
      %3183 = vmatmul.bf16.gmra.mxu0 %v2860
      %v3184 = vpop.f32.mrf.mxu0
      %v3185 = vadd.f32 %v2909, %v3184
      %v3186 = vpop.f32.mrf.mxu0
      %v3187 = vadd.f32 %v2909, %v3186
      %3188 = vmatmul.bf16.gmra.mxu0 %v2862
      %v3189 = vpop.f32.mrf.mxu0
      %v3190 = vadd.f32 %v2909, %v3189
      %v3191 = vpop.f32.mrf.mxu0
      %v3192 = vadd.f32 %v2909, %v3191
      %3193 = vmatmul.bf16.gmra.mxu0 %v2864
      %v3194 = vpop.f32.mrf.mxu0
      %v3195 = vadd.f32 %v2909, %v3194
      %v3196 = vpop.f32.mrf.mxu0
      %v3197 = vadd.f32 %v2909, %v3196
      %3198 = vmatmul.bf16.gmra.mxu0 %v2866
      %v3199 = vpop.f32.mrf.mxu0
      %v3200 = vadd.f32 %v2909, %v3199
      %v3201 = vpop.f32.mrf.mxu0
      %v3202 = vadd.f32 %v2909, %v3201
      %3203 = vmatmul.bf16.gmra.mxu0 %v2868
      %v3204 = vpop.f32.mrf.mxu0
      %v3205 = vadd.f32 %v2909, %v3204
      %v3206 = vpop.f32.mrf.mxu0
      %v3207 = vadd.f32 %v2909, %v3206
      %3208 = vmatmul.bf16.gmra.mxu0 %v2870
      %v3209 = vpop.f32.mrf.mxu0
      %v3210 = vadd.f32 %v2909, %v3209
      %v3211 = vpop.f32.mrf.mxu0
      %v3212 = vadd.f32 %v2909, %v3211
      %3213 = vmatmul.bf16.gmra.mxu0 %v2872
      %v3214 = vpop.f32.mrf.mxu0
      %v3215 = vadd.f32 %v2909, %v3214
      %v3216 = vpop.f32.mrf.mxu0
      %v3217 = vadd.f32 %v2909, %v3216
      %3218 = vdwg.mxu0
      %3219 = vmatpush.bf16.msra.mxu0 %v3039
      %3220 = vmatpush.bf16.msra.mxu0 %v3037
      %3221 = vmatpush.bf16.msra.mxu0 %v3035
      %3222 = vmatpush.bf16.msra.mxu0 %v3033
      %3223 = vmatpush.bf16.msra.mxu0 %v3031
      %3224 = vmatpush.bf16.msra.mxu0 %v3029
      %3225 = vmatpush.bf16.msra.mxu0 %v3027
      %3226 = vmatpush.bf16.msra.mxu0 %v3025
      %3227 = vmatmul.bf16.gmra.mxu0 %v2859
      %v3228 = vpop.f32.mrf.mxu0
      %v3229 = vadd.f32 %v3180, %v3228
      %v3230 = vpop.f32.mrf.mxu0
      %v3231 = vadd.f32 %v3182, %v3230
      %3232 = vmatmul.bf16.gmra.mxu0 %v2861
      %v3233 = vpop.f32.mrf.mxu0
      %v3234 = vadd.f32 %v3185, %v3233
      %v3235 = vpop.f32.mrf.mxu0
      %v3236 = vadd.f32 %v3187, %v3235
      %3237 = vmatmul.bf16.gmra.mxu0 %v2863
      %v3238 = vpop.f32.mrf.mxu0
      %v3239 = vadd.f32 %v3190, %v3238
      %v3240 = vpop.f32.mrf.mxu0
      %v3241 = vadd.f32 %v3192, %v3240
      %3242 = vmatmul.bf16.gmra.mxu0 %v2865
      %v3243 = vpop.f32.mrf.mxu0
      %v3244 = vadd.f32 %v3195, %v3243
      %v3245 = vpop.f32.mrf.mxu0
      %v3246 = vadd.f32 %v3197, %v3245
      %3247 = vmatmul.bf16.gmra.mxu0 %v2867
      %v3248 = vpop.f32.mrf.mxu0
      %v3249 = vadd.f32 %v3200, %v3248
      %v3250 = vpop.f32.mrf.mxu0
      %v3251 = vadd.f32 %v3202, %v3250
      %3252 = vmatmul.bf16.gmra.mxu0 %v2869
      %v3253 = vpop.f32.mrf.mxu0
      %v3254 = vadd.f32 %v3205, %v3253
      %v3255 = vpop.f32.mrf.mxu0
      %v3256 = vadd.f32 %v3207, %v3255
      %3257 = vmatmul.bf16.gmra.mxu0 %v2871
      %v3258 = vpop.f32.mrf.mxu0
      %v3259 = vadd.f32 %v3210, %v3258
      %v3260 = vpop.f32.mrf.mxu0
      %v3261 = vadd.f32 %v3212, %v3260
      %3262 = vmatmul.bf16.gmra.mxu0 %v2873
      %v3263 = vpop.f32.mrf.mxu0
      %v3264 = vadd.f32 %v3215, %v3263
      %v3265 = vpop.f32.mrf.mxu0
      %v3266 = vadd.f32 %v3217, %v3265
      %3267 = vdwg.mxu0
      %v3268 = vadd.f32 %v549, %v3131
      %v3269 = vadd.f32 %v550, %v3229
      %v3270 = vadd.f32 %v551, %v3133
      %v3271 = vadd.f32 %v552, %v3231
      %v3272 = vadd.f32 %v553, %v3136
      %v3273 = vadd.f32 %v554, %v3234
      %v3274 = vadd.f32 %v555, %v3138
      %v3275 = vadd.f32 %v556, %v3236
      %v3276 = vadd.f32 %v557, %v3141
      %v3277 = vadd.f32 %v558, %v3239
      %v3278 = vadd.f32 %v559, %v3143
      %v3279 = vadd.f32 %v560, %v3241
      %v3280 = vadd.f32 %v561, %v3146
      %v3281 = vadd.f32 %v562, %v3244
      %v3282 = vadd.f32 %v563, %v3148
      %v3283 = vadd.f32 %v564, %v3246
      %v3284 = vadd.f32 %v565, %v3151
      %v3285 = vadd.f32 %v566, %v3249
      %v3286 = vadd.f32 %v567, %v3153
      %v3287 = vadd.f32 %v568, %v3251
      %v3288 = vadd.f32 %v569, %v3156
      %v3289 = vadd.f32 %v570, %v3254
      %v3290 = vadd.f32 %v571, %v3158
      %v3291 = vadd.f32 %v572, %v3256
      %v3292 = vadd.f32 %v573, %v3161
      %v3293 = vadd.f32 %v574, %v3259
      %v3294 = vadd.f32 %v575, %v3163
      %v3295 = vadd.f32 %v576, %v3261
      %v3296 = vadd.f32 %v577, %v3166
      %v3297 = vadd.f32 %v578, %v3264
      %v3298 = vadd.f32 %v579, %v3168
      %v3299 = vadd.f32 %v580, %v3266
      %v3300 = vld [vmem:[%s9] sm:$0x3]
      %v3301 = vld [vmem:[%s10] sm:$0x3]
      %v3302 = vadd.f32 %v3268, %v3269
      %3303 = vadd.xlane.f32.xlu0 %v3302
      %v3304 = vpop.xlane.xlu0 %3303
      %v3305 = vadd.f32 %v3270, %v3271
      %3306 = vadd.xlane.f32.xlu0 %v3305
      %v3307 = vpop.xlane.xlu0 %3306
      %v3308 = vadd.f32 %v3272, %v3273
      %3309 = vadd.xlane.f32.xlu0 %v3308
      %v3310 = vpop.xlane.xlu0 %3309
      %v3311 = vadd.f32 %v3274, %v3275
      %3312 = vadd.xlane.f32.xlu0 %v3311
      %v3313 = vpop.xlane.xlu0 %3312
      %v3314 = vadd.f32 %v3276, %v3277
      %3315 = vadd.xlane.f32.xlu0 %v3314
      %v3316 = vpop.xlane.xlu0 %3315
      %v3317 = vadd.f32 %v3278, %v3279
      %3318 = vadd.xlane.f32.xlu0 %v3317
      %v3319 = vpop.xlane.xlu0 %3318
      %v3320 = vadd.f32 %v3280, %v3281
      %3321 = vadd.xlane.f32.xlu0 %v3320
      %v3322 = vpop.xlane.xlu0 %3321
      %v3323 = vadd.f32 %v3282, %v3283
      %3324 = vadd.xlane.f32.xlu0 %v3323
      %v3325 = vpop.xlane.xlu0 %3324
      %v3326 = vadd.f32 %v3284, %v3285
      %3327 = vadd.xlane.f32.xlu0 %v3326
      %v3328 = vpop.xlane.xlu0 %3327
      %v3329 = vadd.f32 %v3286, %v3287
      %3330 = vadd.xlane.f32.xlu0 %v3329
      %v3331 = vpop.xlane.xlu0 %3330
      %v3332 = vadd.f32 %v3288, %v3289
      %3333 = vadd.xlane.f32.xlu0 %v3332
      %v3334 = vpop.xlane.xlu0 %3333
      %v3335 = vadd.f32 %v3290, %v3291
      %3336 = vadd.xlane.f32.xlu0 %v3335
      %v3337 = vpop.xlane.xlu0 %3336
      %v3338 = vadd.f32 %v3292, %v3293
      %3339 = vadd.xlane.f32.xlu0 %v3338
      %v3340 = vpop.xlane.xlu0 %3339
      %v3341 = vadd.f32 %v3294, %v3295
      %3342 = vadd.xlane.f32.xlu0 %v3341
      %v3343 = vpop.xlane.xlu0 %3342
      %v3344 = vadd.f32 %v3296, %v3297
      %3345 = vadd.xlane.f32.xlu0 %v3344
      %v3346 = vpop.xlane.xlu0 %3345
      %v3347 = vadd.f32 %v3298, %v3299
      %3348 = vadd.xlane.f32.xlu0 %v3347
      %v3349 = vpop.xlane.xlu0 %3348
      %v3350 = vrcp.pop 256.0
      %v3351 = vmul.f32 256.0, %v3350
      %v3352 = vsub.f32 1.0, %v3351
      %v3353 = vmul.f32 %v3350, %v3352
      %v3354 = vadd.f32 %v3350, %v3353
      %vm3355 = vweird.f32 %v3350
      %v3356 = vsel %vm3355, %v3350, %v3354
      %v3357 = vmul.f32 %v3304, %v3356
      %v3358 = vmul.f32 %v3307, %v3356
      %v3359 = vmul.f32 %v3310, %v3356
      %v3360 = vmul.f32 %v3313, %v3356
      %v3361 = vmul.f32 %v3316, %v3356
      %v3362 = vmul.f32 %v3319, %v3356
      %v3363 = vmul.f32 %v3322, %v3356
      %v3364 = vmul.f32 %v3325, %v3356
      %v3365 = vmul.f32 %v3328, %v3356
      %v3366 = vmul.f32 %v3331, %v3356
      %v3367 = vmul.f32 %v3334, %v3356
      %v3368 = vmul.f32 %v3337, %v3356
      %v3369 = vmul.f32 %v3340, %v3356
      %v3370 = vmul.f32 %v3343, %v3356
      %v3371 = vmul.f32 %v3346, %v3356
      %v3372 = vmul.f32 %v3349, %v3356
      %v3373 = vsub.f32 %v3268, %v3357
      %v3374 = vsub.f32 %v3269, %v3357
      %v3375 = vsub.f32 %v3270, %v3358
      %v3376 = vsub.f32 %v3271, %v3358
      %v3377 = vsub.f32 %v3272, %v3359
      %v3378 = vsub.f32 %v3273, %v3359
      %v3379 = vsub.f32 %v3274, %v3360
      %v3380 = vsub.f32 %v3275, %v3360
      %v3381 = vsub.f32 %v3276, %v3361
      %v3382 = vsub.f32 %v3277, %v3361
      %v3383 = vsub.f32 %v3278, %v3362
      %v3384 = vsub.f32 %v3279, %v3362
      %v3385 = vsub.f32 %v3280, %v3363
      %v3386 = vsub.f32 %v3281, %v3363
      %v3387 = vsub.f32 %v3282, %v3364
      %v3388 = vsub.f32 %v3283, %v3364
      %v3389 = vsub.f32 %v3284, %v3365
      %v3390 = vsub.f32 %v3285, %v3365
      %v3391 = vsub.f32 %v3286, %v3366
      %v3392 = vsub.f32 %v3287, %v3366
      %v3393 = vsub.f32 %v3288, %v3367
      %v3394 = vsub.f32 %v3289, %v3367
      %v3395 = vsub.f32 %v3290, %v3368
      %v3396 = vsub.f32 %v3291, %v3368
      %v3397 = vsub.f32 %v3292, %v3369
      %v3398 = vsub.f32 %v3293, %v3369
      %v3399 = vsub.f32 %v3294, %v3370
      %v3400 = vsub.f32 %v3295, %v3370
      %v3401 = vsub.f32 %v3296, %v3371
      %v3402 = vsub.f32 %v3297, %v3371
      %v3403 = vsub.f32 %v3298, %v3372
      %v3404 = vsub.f32 %v3299, %v3372
      %v3405 = vmul.f32 %v3373, %v3373
      %v3406 = vmul.f32 %v3374, %v3374
      %v3407 = vmul.f32 %v3375, %v3375
      %v3408 = vmul.f32 %v3376, %v3376
      %v3409 = vmul.f32 %v3377, %v3377
      %v3410 = vmul.f32 %v3378, %v3378
      %v3411 = vmul.f32 %v3379, %v3379
      %v3412 = vmul.f32 %v3380, %v3380
      %v3413 = vmul.f32 %v3381, %v3381
      %v3414 = vmul.f32 %v3382, %v3382
      %v3415 = vmul.f32 %v3383, %v3383
      %v3416 = vmul.f32 %v3384, %v3384
      %v3417 = vmul.f32 %v3385, %v3385
      %v3418 = vmul.f32 %v3386, %v3386
      %v3419 = vmul.f32 %v3387, %v3387
      %v3420 = vmul.f32 %v3388, %v3388
      %v3421 = vmul.f32 %v3389, %v3389
      %v3422 = vmul.f32 %v3390, %v3390
      %v3423 = vmul.f32 %v3391, %v3391
      %v3424 = vmul.f32 %v3392, %v3392
      %v3425 = vmul.f32 %v3393, %v3393
      %v3426 = vmul.f32 %v3394, %v3394
      %v3427 = vmul.f32 %v3395, %v3395
      %v3428 = vmul.f32 %v3396, %v3396
      %v3429 = vmul.f32 %v3397, %v3397
      %v3430 = vmul.f32 %v3398, %v3398
      %v3431 = vmul.f32 %v3399, %v3399
      %v3432 = vmul.f32 %v3400, %v3400
      %v3433 = vmul.f32 %v3401, %v3401
      %v3434 = vmul.f32 %v3402, %v3402
      %v3435 = vmul.f32 %v3403, %v3403
      %v3436 = vmul.f32 %v3404, %v3404
      %v3437 = vadd.f32 %v3405, %v3406
      %3438 = vadd.xlane.f32.xlu0 %v3437
      %v3439 = vpop.xlane.xlu0 %3438
      %v3440 = vadd.f32 %v3407, %v3408
      %3441 = vadd.xlane.f32.xlu0 %v3440
      %v3442 = vpop.xlane.xlu0 %3441
      %v3443 = vadd.f32 %v3409, %v3410
      %3444 = vadd.xlane.f32.xlu0 %v3443
      %v3445 = vpop.xlane.xlu0 %3444
      %v3446 = vadd.f32 %v3411, %v3412
      %3447 = vadd.xlane.f32.xlu0 %v3446
      %v3448 = vpop.xlane.xlu0 %3447
      %v3449 = vadd.f32 %v3413, %v3414
      %3450 = vadd.xlane.f32.xlu0 %v3449
      %v3451 = vpop.xlane.xlu0 %3450
      %v3452 = vadd.f32 %v3415, %v3416
      %3453 = vadd.xlane.f32.xlu0 %v3452
      %v3454 = vpop.xlane.xlu0 %3453
      %v3455 = vadd.f32 %v3417, %v3418
      %3456 = vadd.xlane.f32.xlu0 %v3455
      %v3457 = vpop.xlane.xlu0 %3456
      %v3458 = vadd.f32 %v3419, %v3420
      %3459 = vadd.xlane.f32.xlu0 %v3458
      %v3460 = vpop.xlane.xlu0 %3459
      %v3461 = vadd.f32 %v3421, %v3422
      %3462 = vadd.xlane.f32.xlu0 %v3461
      %v3463 = vpop.xlane.xlu0 %3462
      %v3464 = vadd.f32 %v3423, %v3424
      %3465 = vadd.xlane.f32.xlu0 %v3464
      %v3466 = vpop.xlane.xlu0 %3465
      %v3467 = vadd.f32 %v3425, %v3426
      %3468 = vadd.xlane.f32.xlu0 %v3467
      %v3469 = vpop.xlane.xlu0 %3468
      %v3470 = vadd.f32 %v3427, %v3428
      %3471 = vadd.xlane.f32.xlu0 %v3470
      %v3472 = vpop.xlane.xlu0 %3471
      %v3473 = vadd.f32 %v3429, %v3430
      %3474 = vadd.xlane.f32.xlu0 %v3473
      %v3475 = vpop.xlane.xlu0 %3474
      %v3476 = vadd.f32 %v3431, %v3432
      %3477 = vadd.xlane.f32.xlu0 %v3476
      %v3478 = vpop.xlane.xlu0 %3477
      %v3479 = vadd.f32 %v3433, %v3434
      %3480 = vadd.xlane.f32.xlu0 %v3479
      %v3481 = vpop.xlane.xlu0 %3480
      %v3482 = vadd.f32 %v3435, %v3436
      %3483 = vadd.xlane.f32.xlu0 %v3482
      %v3484 = vpop.xlane.xlu0 %3483
      %v3485 = vmul.f32 %v3439, %v3356
      %v3486 = vmul.f32 %v3442, %v3356
      %v3487 = vmul.f32 %v3445, %v3356
      %v3488 = vmul.f32 %v3448, %v3356
      %v3489 = vmul.f32 %v3451, %v3356
      %v3490 = vmul.f32 %v3454, %v3356
      %v3491 = vmul.f32 %v3457, %v3356
      %v3492 = vmul.f32 %v3460, %v3356
      %v3493 = vmul.f32 %v3463, %v3356
      %v3494 = vmul.f32 %v3466, %v3356
      %v3495 = vmul.f32 %v3469, %v3356
      %v3496 = vmul.f32 %v3472, %v3356
      %v3497 = vmul.f32 %v3475, %v3356
      %v3498 = vmul.f32 %v3478, %v3356
      %v3499 = vmul.f32 %v3481, %v3356
      %v3500 = vmul.f32 %v3484, %v3356
      %v3501 = vadd.f32 %v3485, 1e-05
      %v3502 = vadd.f32 %v3486, 1e-05
      %v3503 = vadd.f32 %v3487, 1e-05
      %v3504 = vadd.f32 %v3488, 1e-05
      %v3505 = vadd.f32 %v3489, 1e-05
      %v3506 = vadd.f32 %v3490, 1e-05
      %v3507 = vadd.f32 %v3491, 1e-05
      %v3508 = vadd.f32 %v3492, 1e-05
      %v3509 = vadd.f32 %v3493, 1e-05
      %v3510 = vadd.f32 %v3494, 1e-05
      %v3511 = vadd.f32 %v3495, 1e-05
      %v3512 = vadd.f32 %v3496, 1e-05
      %v3513 = vadd.f32 %v3497, 1e-05
      %v3514 = vadd.f32 %v3498, 1e-05
      %v3515 = vadd.f32 %v3499, 1e-05
      %v3516 = vadd.f32 %v3500, 1e-05
      %v3517 = vrsqrt.pop %v3501
      %v3518 = vmul.f32 %v3517, %v3501
      %v3519 = vmul.f32 %v3518, %v3517
      %v3520 = vmul.f32 0.5, %v3519
      %v3521 = vsub.f32 1.5, %v3520
      %v3522 = vmul.f32 %v3517, %v3521
      %vm3523 = vweird.f32 %v3501
      %vm3524 = vweird.f32 %v3517
      %vm3525 = vmor %vm3523, %vm3524
      %v3526 = vsel %vm3525, %v3517, %v3522
      %v3527 = vrsqrt.pop %v3502
      %v3528 = vmul.f32 %v3527, %v3502
      %v3529 = vmul.f32 %v3528, %v3527
      %v3530 = vmul.f32 0.5, %v3529
      %v3531 = vsub.f32 1.5, %v3530
      %v3532 = vmul.f32 %v3527, %v3531
      %vm3533 = vweird.f32 %v3502
      %vm3534 = vweird.f32 %v3527
      %vm3535 = vmor %vm3533, %vm3534
      %v3536 = vsel %vm3535, %v3527, %v3532
      %v3537 = vrsqrt.pop %v3503
      %v3538 = vmul.f32 %v3537, %v3503
      %v3539 = vmul.f32 %v3538, %v3537
      %v3540 = vmul.f32 0.5, %v3539
      %v3541 = vsub.f32 1.5, %v3540
      %v3542 = vmul.f32 %v3537, %v3541
      %vm3543 = vweird.f32 %v3503
      %vm3544 = vweird.f32 %v3537
      %vm3545 = vmor %vm3543, %vm3544
      %v3546 = vsel %vm3545, %v3537, %v3542
      %v3547 = vrsqrt.pop %v3504
      %v3548 = vmul.f32 %v3547, %v3504
      %v3549 = vmul.f32 %v3548, %v3547
      %v3550 = vmul.f32 0.5, %v3549
      %v3551 = vsub.f32 1.5, %v3550
      %v3552 = vmul.f32 %v3547, %v3551
      %vm3553 = vweird.f32 %v3504
      %vm3554 = vweird.f32 %v3547
      %vm3555 = vmor %vm3553, %vm3554
      %v3556 = vsel %vm3555, %v3547, %v3552
      %v3557 = vrsqrt.pop %v3505
      %v3558 = vmul.f32 %v3557, %v3505
      %v3559 = vmul.f32 %v3558, %v3557
      %v3560 = vmul.f32 0.5, %v3559
      %v3561 = vsub.f32 1.5, %v3560
      %v3562 = vmul.f32 %v3557, %v3561
      %vm3563 = vweird.f32 %v3505
      %vm3564 = vweird.f32 %v3557
      %vm3565 = vmor %vm3563, %vm3564
      %v3566 = vsel %vm3565, %v3557, %v3562
      %v3567 = vrsqrt.pop %v3506
      %v3568 = vmul.f32 %v3567, %v3506
      %v3569 = vmul.f32 %v3568, %v3567
      %v3570 = vmul.f32 0.5, %v3569
      %v3571 = vsub.f32 1.5, %v3570
      %v3572 = vmul.f32 %v3567, %v3571
      %vm3573 = vweird.f32 %v3506
      %vm3574 = vweird.f32 %v3567
      %vm3575 = vmor %vm3573, %vm3574
      %v3576 = vsel %vm3575, %v3567, %v3572
      %v3577 = vrsqrt.pop %v3507
      %v3578 = vmul.f32 %v3577, %v3507
      %v3579 = vmul.f32 %v3578, %v3577
      %v3580 = vmul.f32 0.5, %v3579
      %v3581 = vsub.f32 1.5, %v3580
      %v3582 = vmul.f32 %v3577, %v3581
      %vm3583 = vweird.f32 %v3507
      %vm3584 = vweird.f32 %v3577
      %vm3585 = vmor %vm3583, %vm3584
      %v3586 = vsel %vm3585, %v3577, %v3582
      %v3587 = vrsqrt.pop %v3508
      %v3588 = vmul.f32 %v3587, %v3508
      %v3589 = vmul.f32 %v3588, %v3587
      %v3590 = vmul.f32 0.5, %v3589
      %v3591 = vsub.f32 1.5, %v3590
      %v3592 = vmul.f32 %v3587, %v3591
      %vm3593 = vweird.f32 %v3508
      %vm3594 = vweird.f32 %v3587
      %vm3595 = vmor %vm3593, %vm3594
      %v3596 = vsel %vm3595, %v3587, %v3592
      %v3597 = vrsqrt.pop %v3509
      %v3598 = vmul.f32 %v3597, %v3509
      %v3599 = vmul.f32 %v3598, %v3597
      %v3600 = vmul.f32 0.5, %v3599
      %v3601 = vsub.f32 1.5, %v3600
      %v3602 = vmul.f32 %v3597, %v3601
      %vm3603 = vweird.f32 %v3509
      %vm3604 = vweird.f32 %v3597
      %vm3605 = vmor %vm3603, %vm3604
      %v3606 = vsel %vm3605, %v3597, %v3602
      %v3607 = vrsqrt.pop %v3510
      %v3608 = vmul.f32 %v3607, %v3510
      %v3609 = vmul.f32 %v3608, %v3607
      %v3610 = vmul.f32 0.5, %v3609
      %v3611 = vsub.f32 1.5, %v3610
      %v3612 = vmul.f32 %v3607, %v3611
      %vm3613 = vweird.f32 %v3510
      %vm3614 = vweird.f32 %v3607
      %vm3615 = vmor %vm3613, %vm3614
      %v3616 = vsel %vm3615, %v3607, %v3612
      %v3617 = vrsqrt.pop %v3511
      %v3618 = vmul.f32 %v3617, %v3511
      %v3619 = vmul.f32 %v3618, %v3617
      %v3620 = vmul.f32 0.5, %v3619
      %v3621 = vsub.f32 1.5, %v3620
      %v3622 = vmul.f32 %v3617, %v3621
      %vm3623 = vweird.f32 %v3511
      %vm3624 = vweird.f32 %v3617
      %vm3625 = vmor %vm3623, %vm3624
      %v3626 = vsel %vm3625, %v3617, %v3622
      %v3627 = vrsqrt.pop %v3512
      %v3628 = vmul.f32 %v3627, %v3512
      %v3629 = vmul.f32 %v3628, %v3627
      %v3630 = vmul.f32 0.5, %v3629
      %v3631 = vsub.f32 1.5, %v3630
      %v3632 = vmul.f32 %v3627, %v3631
      %vm3633 = vweird.f32 %v3512
      %vm3634 = vweird.f32 %v3627
      %vm3635 = vmor %vm3633, %vm3634
      %v3636 = vsel %vm3635, %v3627, %v3632
      %v3637 = vrsqrt.pop %v3513
      %v3638 = vmul.f32 %v3637, %v3513
      %v3639 = vmul.f32 %v3638, %v3637
      %v3640 = vmul.f32 0.5, %v3639
      %v3641 = vsub.f32 1.5, %v3640
      %v3642 = vmul.f32 %v3637, %v3641
      %vm3643 = vweird.f32 %v3513
      %vm3644 = vweird.f32 %v3637
      %vm3645 = vmor %vm3643, %vm3644
      %v3646 = vsel %vm3645, %v3637, %v3642
      %v3647 = vrsqrt.pop %v3514
      %v3648 = vmul.f32 %v3647, %v3514
      %v3649 = vmul.f32 %v3648, %v3647
      %v3650 = vmul.f32 0.5, %v3649
      %v3651 = vsub.f32 1.5, %v3650
      %v3652 = vmul.f32 %v3647, %v3651
      %vm3653 = vweird.f32 %v3514
      %vm3654 = vweird.f32 %v3647
      %vm3655 = vmor %vm3653, %vm3654
      %v3656 = vsel %vm3655, %v3647, %v3652
      %v3657 = vrsqrt.pop %v3515
      %v3658 = vmul.f32 %v3657, %v3515
      %v3659 = vmul.f32 %v3658, %v3657
      %v3660 = vmul.f32 0.5, %v3659
      %v3661 = vsub.f32 1.5, %v3660
      %v3662 = vmul.f32 %v3657, %v3661
      %vm3663 = vweird.f32 %v3515
      %vm3664 = vweird.f32 %v3657
      %vm3665 = vmor %vm3663, %vm3664
      %v3666 = vsel %vm3665, %v3657, %v3662
      %v3667 = vrsqrt.pop %v3516
      %v3668 = vmul.f32 %v3667, %v3516
      %v3669 = vmul.f32 %v3668, %v3667
      %v3670 = vmul.f32 0.5, %v3669
      %v3671 = vsub.f32 1.5, %v3670
      %v3672 = vmul.f32 %v3667, %v3671
      %vm3673 = vweird.f32 %v3516
      %vm3674 = vweird.f32 %v3667
      %vm3675 = vmor %vm3673, %vm3674
      %v3676 = vsel %vm3675, %v3667, %v3672
      %v3677 = vmul.f32 %v3373, %v3526
      %v3678 = vmul.f32 %v3374, %v3526
      %v3679 = vmul.f32 %v3375, %v3536
      %v3680 = vmul.f32 %v3376, %v3536
      %v3681 = vmul.f32 %v3377, %v3546
      %v3682 = vmul.f32 %v3378, %v3546
      %v3683 = vmul.f32 %v3379, %v3556
      %v3684 = vmul.f32 %v3380, %v3556
      %v3685 = vmul.f32 %v3381, %v3566
      %v3686 = vmul.f32 %v3382, %v3566
      %v3687 = vmul.f32 %v3383, %v3576
      %v3688 = vmul.f32 %v3384, %v3576
      %v3689 = vmul.f32 %v3385, %v3586
      %v3690 = vmul.f32 %v3386, %v3586
      %v3691 = vmul.f32 %v3387, %v3596
      %v3692 = vmul.f32 %v3388, %v3596
      %v3693 = vmul.f32 %v3389, %v3606
      %v3694 = vmul.f32 %v3390, %v3606
      %v3695 = vmul.f32 %v3391, %v3616
      %v3696 = vmul.f32 %v3392, %v3616
      %v3697 = vmul.f32 %v3393, %v3626
      %v3698 = vmul.f32 %v3394, %v3626
      %v3699 = vmul.f32 %v3395, %v3636
      %v3700 = vmul.f32 %v3396, %v3636
      %v3701 = vmul.f32 %v3397, %v3646
      %v3702 = vmul.f32 %v3398, %v3646
      %v3703 = vmul.f32 %v3399, %v3656
      %v3704 = vmul.f32 %v3400, %v3656
      %v3705 = vmul.f32 %v3401, %v3666
      %v3706 = vmul.f32 %v3402, %v3666
      %v3707 = vmul.f32 %v3403, %v3676
      %v3708 = vmul.f32 %v3404, %v3676
      %v3710 = vperm.slane %v3300, 0
      %v3711 = vperm.slane %v3300, 1
      %v3714 = vmul.f32 %v3677, %v3710
      %v3715 = vmul.f32 %v3678, %v3711
      %v3716 = vmul.f32 %v3679, %v3710
      %v3717 = vmul.f32 %v3680, %v3711
      %v3718 = vmul.f32 %v3681, %v3710
      %v3719 = vmul.f32 %v3682, %v3711
      %v3720 = vmul.f32 %v3683, %v3710
      %v3721 = vmul.f32 %v3684, %v3711
      %v3722 = vmul.f32 %v3685, %v3710
      %v3723 = vmul.f32 %v3686, %v3711
      %v3724 = vmul.f32 %v3687, %v3710
      %v3725 = vmul.f32 %v3688, %v3711
      %v3726 = vmul.f32 %v3689, %v3710
      %v3727 = vmul.f32 %v3690, %v3711
      %v3728 = vmul.f32 %v3691, %v3710
      %v3729 = vmul.f32 %v3692, %v3711
      %v3730 = vmul.f32 %v3693, %v3710
      %v3731 = vmul.f32 %v3694, %v3711
      %v3732 = vmul.f32 %v3695, %v3710
      %v3733 = vmul.f32 %v3696, %v3711
      %v3734 = vmul.f32 %v3697, %v3710
      %v3735 = vmul.f32 %v3698, %v3711
      %v3736 = vmul.f32 %v3699, %v3710
      %v3737 = vmul.f32 %v3700, %v3711
      %v3738 = vmul.f32 %v3701, %v3710
      %v3739 = vmul.f32 %v3702, %v3711
      %v3740 = vmul.f32 %v3703, %v3710
      %v3741 = vmul.f32 %v3704, %v3711
      %v3742 = vmul.f32 %v3705, %v3710
      %v3743 = vmul.f32 %v3706, %v3711
      %v3744 = vmul.f32 %v3707, %v3710
      %v3745 = vmul.f32 %v3708, %v3711
      %v3747 = vperm.slane %v3301, 0
      %v3748 = vperm.slane %v3301, 1
      %v3751 = vadd.f32 %v3714, %v3747
      %v3752 = vadd.f32 %v3715, %v3748
      %v3753 = vadd.f32 %v3716, %v3747
      %v3754 = vadd.f32 %v3717, %v3748
      %v3755 = vadd.f32 %v3718, %v3747
      %v3756 = vadd.f32 %v3719, %v3748
      %v3757 = vadd.f32 %v3720, %v3747
      %v3758 = vadd.f32 %v3721, %v3748
      %v3759 = vadd.f32 %v3722, %v3747
      %v3760 = vadd.f32 %v3723, %v3748
      %v3761 = vadd.f32 %v3724, %v3747
      %v3762 = vadd.f32 %v3725, %v3748
      %v3763 = vadd.f32 %v3726, %v3747
      %v3764 = vadd.f32 %v3727, %v3748
      %v3765 = vadd.f32 %v3728, %v3747
      %v3766 = vadd.f32 %v3729, %v3748
      %v3767 = vadd.f32 %v3730, %v3747
      %v3768 = vadd.f32 %v3731, %v3748
      %v3769 = vadd.f32 %v3732, %v3747
      %v3770 = vadd.f32 %v3733, %v3748
      %v3771 = vadd.f32 %v3734, %v3747
      %v3772 = vadd.f32 %v3735, %v3748
      %v3773 = vadd.f32 %v3736, %v3747
      %v3774 = vadd.f32 %v3737, %v3748
      %v3775 = vadd.f32 %v3738, %v3747
      %v3776 = vadd.f32 %v3739, %v3748
      %v3777 = vadd.f32 %v3740, %v3747
      %v3778 = vadd.f32 %v3741, %v3748
      %v3779 = vadd.f32 %v3742, %v3747
      %v3780 = vadd.f32 %v3743, %v3748
      %v3781 = vadd.f32 %v3744, %v3747
      %v3782 = vadd.f32 %v3745, %v3748
      %v3783 = vpack.c.bf16 %v3753, %v3751
      %v3784 = vpack.c.bf16 %v3754, %v3752
      %v3785 = vpack.c.bf16 %v3757, %v3755
      %v3786 = vpack.c.bf16 %v3758, %v3756
      %v3787 = vpack.c.bf16 %v3761, %v3759
      %v3788 = vpack.c.bf16 %v3762, %v3760
      %v3789 = vpack.c.bf16 %v3765, %v3763
      %v3790 = vpack.c.bf16 %v3766, %v3764
      %v3791 = vpack.c.bf16 %v3769, %v3767
      %v3792 = vpack.c.bf16 %v3770, %v3768
      %v3793 = vpack.c.bf16 %v3773, %v3771
      %v3794 = vpack.c.bf16 %v3774, %v3772
      %v3795 = vpack.c.bf16 %v3777, %v3775
      %v3796 = vpack.c.bf16 %v3778, %v3776
      %v3797 = vpack.c.bf16 %v3781, %v3779
      %v3798 = vpack.c.bf16 %v3782, %v3780
      %v3799 = vld [vmem:[%s11] sm:$0xff]
      %v3800 = vld [vmem:[%s11 + $0x8] sm:$0xff]
      %v3801 = vld [vmem:[%s11 + $0x10] sm:$0xff]
      %v3802 = vld [vmem:[%s11 + $0x18] sm:$0xff]
      %v3803 = vld [vmem:[%s11 + $0x20] sm:$0xff]
      %v3804 = vld [vmem:[%s11 + $0x28] sm:$0xff]
      %v3805 = vld [vmem:[%s11 + $0x30] sm:$0xff]
      %v3806 = vld [vmem:[%s11 + $0x38] sm:$0xff]
      %v3807 = vld [vmem:[%s11 + $0x40] sm:$0xff]
      %v3808 = vld [vmem:[%s11 + $0x48] sm:$0xff]
      %v3809 = vld [vmem:[%s11 + $0x50] sm:$0xff]
      %v3810 = vld [vmem:[%s11 + $0x58] sm:$0xff]
      %v3811 = vld [vmem:[%s11 + $0x60] sm:$0xff]
      %v3812 = vld [vmem:[%s11 + $0x68] sm:$0xff]
      %v3813 = vld [vmem:[%s11 + $0x70] sm:$0xff]
      %v3814 = vld [vmem:[%s11 + $0x78] sm:$0xff]
      %v3815 = vld [vmem:[%s11 + $0x80] sm:$0xff]
      %v3816 = vld [vmem:[%s11 + $0x88] sm:$0xff]
      %v3817 = vld [vmem:[%s11 + $0x90] sm:$0xff]
      %v3818 = vld [vmem:[%s11 + $0x98] sm:$0xff]
      %v3819 = vld [vmem:[%s11 + $0xa0] sm:$0xff]
      %v3820 = vld [vmem:[%s11 + $0xa8] sm:$0xff]
      %v3821 = vld [vmem:[%s11 + $0xb0] sm:$0xff]
      %v3822 = vld [vmem:[%s11 + $0xb8] sm:$0xff]
      %v3823 = vld [vmem:[%s11 + $0xc0] sm:$0xff]
      %v3824 = vld [vmem:[%s11 + $0xc8] sm:$0xff]
      %v3825 = vld [vmem:[%s11 + $0xd0] sm:$0xff]
      %v3826 = vld [vmem:[%s11 + $0xd8] sm:$0xff]
      %v3827 = vld [vmem:[%s11 + $0xe0] sm:$0xff]
      %v3828 = vld [vmem:[%s11 + $0xe8] sm:$0xff]
      %v3829 = vld [vmem:[%s11 + $0xf0] sm:$0xff]
      %v3830 = vld [vmem:[%s11 + $0xf8] sm:$0xff]
      %v3831 = vld [vmem:[%s11 + $0x100] sm:$0xff]
      %v3832 = vld [vmem:[%s11 + $0x108] sm:$0xff]
      %v3833 = vld [vmem:[%s11 + $0x110] sm:$0xff]
      %v3834 = vld [vmem:[%s11 + $0x118] sm:$0xff]
      %v3835 = vld [vmem:[%s11 + $0x120] sm:$0xff]
      %v3836 = vld [vmem:[%s11 + $0x128] sm:$0xff]
      %v3837 = vld [vmem:[%s11 + $0x130] sm:$0xff]
      %v3838 = vld [vmem:[%s11 + $0x138] sm:$0xff]
      %v3839 = vld [vmem:[%s11 + $0x140] sm:$0xff]
      %v3840 = vld [vmem:[%s11 + $0x148] sm:$0xff]
      %v3841 = vld [vmem:[%s11 + $0x150] sm:$0xff]
      %v3842 = vld [vmem:[%s11 + $0x158] sm:$0xff]
      %v3843 = vld [vmem:[%s11 + $0x160] sm:$0xff]
      %v3844 = vld [vmem:[%s11 + $0x168] sm:$0xff]
      %v3845 = vld [vmem:[%s11 + $0x170] sm:$0xff]
      %v3846 = vld [vmem:[%s11 + $0x178] sm:$0xff]
      %v3847 = vld [vmem:[%s11 + $0x180] sm:$0xff]
      %v3848 = vld [vmem:[%s11 + $0x188] sm:$0xff]
      %v3849 = vld [vmem:[%s11 + $0x190] sm:$0xff]
      %v3850 = vld [vmem:[%s11 + $0x198] sm:$0xff]
      %v3851 = vld [vmem:[%s11 + $0x1a0] sm:$0xff]
      %v3852 = vld [vmem:[%s11 + $0x1a8] sm:$0xff]
      %v3853 = vld [vmem:[%s11 + $0x1b0] sm:$0xff]
      %v3854 = vld [vmem:[%s11 + $0x1b8] sm:$0xff]
      %v3855 = vld [vmem:[%s11 + $0x1c0] sm:$0xff]
      %v3856 = vld [vmem:[%s11 + $0x1c8] sm:$0xff]
      %v3857 = vld [vmem:[%s11 + $0x1d0] sm:$0xff]
      %v3858 = vld [vmem:[%s11 + $0x1d8] sm:$0xff]
      %v3859 = vld [vmem:[%s11 + $0x1e0] sm:$0xff]
      %v3860 = vld [vmem:[%s11 + $0x1e8] sm:$0xff]
      %v3861 = vld [vmem:[%s11 + $0x1f0] sm:$0xff]
      %v3862 = vld [vmem:[%s11 + $0x1f8] sm:$0xff]
      %v3863 = vld [vmem:[%s12] sm:$0xf]
      %v3865 = vperm.slane %v3863, 0
      %v3866 = vperm.slane %v3863, 1
      %v3867 = vperm.slane %v3863, 2
      %v3868 = vperm.slane %v3863, 3
      %v3937 = vunpack.c.l.b16 %v3799
      %v3938 = vunpack.c.h.b16 %v3799
      %v3939 = vunpack.c.l.b16 %v3800
      %v3940 = vunpack.c.h.b16 %v3800
      %v3941 = vunpack.c.l.b16 %v3801
      %v3942 = vunpack.c.h.b16 %v3801
      %v3943 = vunpack.c.l.b16 %v3802
      %v3944 = vunpack.c.h.b16 %v3802
      %v3945 = vunpack.c.l.b16 %v3803
      %v3946 = vunpack.c.h.b16 %v3803
      %v3947 = vunpack.c.l.b16 %v3804
      %v3948 = vunpack.c.h.b16 %v3804
      %v3949 = vunpack.c.l.b16 %v3805
      %v3950 = vunpack.c.h.b16 %v3805
      %v3951 = vunpack.c.l.b16 %v3806
      %v3952 = vunpack.c.h.b16 %v3806
      %v3953 = vunpack.c.l.b16 %v3807
      %v3954 = vunpack.c.h.b16 %v3807
      %v3955 = vunpack.c.l.b16 %v3808
      %v3956 = vunpack.c.h.b16 %v3808
      %v3957 = vunpack.c.l.b16 %v3809
      %v3958 = vunpack.c.h.b16 %v3809
      %v3959 = vunpack.c.l.b16 %v3810
      %v3960 = vunpack.c.h.b16 %v3810
      %v3961 = vunpack.c.l.b16 %v3811
      %v3962 = vunpack.c.h.b16 %v3811
      %v3963 = vunpack.c.l.b16 %v3812
      %v3964 = vunpack.c.h.b16 %v3812
      %v3965 = vunpack.c.l.b16 %v3813
      %v3966 = vunpack.c.h.b16 %v3813
      %v3967 = vunpack.c.l.b16 %v3814
      %v3968 = vunpack.c.h.b16 %v3814
      %v3969 = vunpack.c.l.b16 %v3815
      %v3970 = vunpack.c.h.b16 %v3815
      %v3971 = vunpack.c.l.b16 %v3816
      %v3972 = vunpack.c.h.b16 %v3816
      %v3973 = vunpack.c.l.b16 %v3817
      %v3974 = vunpack.c.h.b16 %v3817
      %v3975 = vunpack.c.l.b16 %v3818
      %v3976 = vunpack.c.h.b16 %v3818
      %v3977 = vunpack.c.l.b16 %v3819
      %v3978 = vunpack.c.h.b16 %v3819
      %v3979 = vunpack.c.l.b16 %v3820
      %v3980 = vunpack.c.h.b16 %v3820
      %v3981 = vunpack.c.l.b16 %v3821
      %v3982 = vunpack.c.h.b16 %v3821
      %v3983 = vunpack.c.l.b16 %v3822
      %v3984 = vunpack.c.h.b16 %v3822
      %v3985 = vunpack.c.l.b16 %v3823
      %v3986 = vunpack.c.h.b16 %v3823
      %v3987 = vunpack.c.l.b16 %v3824
      %v3988 = vunpack.c.h.b16 %v3824
      %v3989 = vunpack.c.l.b16 %v3825
      %v3990 = vunpack.c.h.b16 %v3825
      %v3991 = vunpack.c.l.b16 %v3826
      %v3992 = vunpack.c.h.b16 %v3826
      %v3993 = vunpack.c.l.b16 %v3827
      %v3994 = vunpack.c.h.b16 %v3827
      %v3995 = vunpack.c.l.b16 %v3828
      %v3996 = vunpack.c.h.b16 %v3828
      %v3997 = vunpack.c.l.b16 %v3829
      %v3998 = vunpack.c.h.b16 %v3829
      %v3999 = vunpack.c.l.b16 %v3830
      %v4000 = vunpack.c.h.b16 %v3830
      %v4001 = vunpack.c.l.b16 %v3831
      %v4002 = vunpack.c.h.b16 %v3831
      %v4003 = vunpack.c.l.b16 %v3832
      %v4004 = vunpack.c.h.b16 %v3832
      %v4005 = vunpack.c.l.b16 %v3833
      %v4006 = vunpack.c.h.b16 %v3833
      %v4007 = vunpack.c.l.b16 %v3834
      %v4008 = vunpack.c.h.b16 %v3834
      %v4009 = vunpack.c.l.b16 %v3835
      %v4010 = vunpack.c.h.b16 %v3835
      %v4011 = vunpack.c.l.b16 %v3836
      %v4012 = vunpack.c.h.b16 %v3836
      %v4013 = vunpack.c.l.b16 %v3837
      %v4014 = vunpack.c.h.b16 %v3837
      %v4015 = vunpack.c.l.b16 %v3838
      %v4016 = vunpack.c.h.b16 %v3838
      %v4017 = vunpack.c.l.b16 %v3839
      %v4018 = vunpack.c.h.b16 %v3839
      %v4019 = vunpack.c.l.b16 %v3840
      %v4020 = vunpack.c.h.b16 %v3840
      %v4021 = vunpack.c.l.b16 %v3841
      %v4022 = vunpack.c.h.b16 %v3841
      %v4023 = vunpack.c.l.b16 %v3842
      %v4024 = vunpack.c.h.b16 %v3842
      %v4025 = vunpack.c.l.b16 %v3843
      %v4026 = vunpack.c.h.b16 %v3843
      %v4027 = vunpack.c.l.b16 %v3844
      %v4028 = vunpack.c.h.b16 %v3844
      %v4029 = vunpack.c.l.b16 %v3845
      %v4030 = vunpack.c.h.b16 %v3845
      %v4031 = vunpack.c.l.b16 %v3846
      %v4032 = vunpack.c.h.b16 %v3846
      %v4033 = vunpack.c.l.b16 %v3847
      %v4034 = vunpack.c.h.b16 %v3847
      %v4035 = vunpack.c.l.b16 %v3848
      %v4036 = vunpack.c.h.b16 %v3848
      %v4037 = vunpack.c.l.b16 %v3849
      %v4038 = vunpack.c.h.b16 %v3849
      %v4039 = vunpack.c.l.b16 %v3850
      %v4040 = vunpack.c.h.b16 %v3850
      %v4041 = vunpack.c.l.b16 %v3851
      %v4042 = vunpack.c.h.b16 %v3851
      %v4043 = vunpack.c.l.b16 %v3852
      %v4044 = vunpack.c.h.b16 %v3852
      %v4045 = vunpack.c.l.b16 %v3853
      %v4046 = vunpack.c.h.b16 %v3853
      %v4047 = vunpack.c.l.b16 %v3854
      %v4048 = vunpack.c.h.b16 %v3854
      %v4049 = vunpack.c.l.b16 %v3855
      %v4050 = vunpack.c.h.b16 %v3855
      %v4051 = vunpack.c.l.b16 %v3856
      %v4052 = vunpack.c.h.b16 %v3856
      %v4053 = vunpack.c.l.b16 %v3857
      %v4054 = vunpack.c.h.b16 %v3857
      %v4055 = vunpack.c.l.b16 %v3858
      %v4056 = vunpack.c.h.b16 %v3858
      %v4057 = vunpack.c.l.b16 %v3859
      %v4058 = vunpack.c.h.b16 %v3859
      %v4059 = vunpack.c.l.b16 %v3860
      %v4060 = vunpack.c.h.b16 %v3860
      %v4061 = vunpack.c.l.b16 %v3861
      %v4062 = vunpack.c.h.b16 %v3861
      %v4063 = vunpack.c.l.b16 %v3862
      %v4064 = vunpack.c.h.b16 %v3862
      %v4065 = vpack.c.b16 %v3941, %v3937
      %v4066 = vpack.c.b16 %v3942, %v3938
      %v4067 = vpack.c.b16 %v3943, %v3939
      %v4068 = vpack.c.b16 %v3944, %v3940
      %v4069 = vpack.c.b16 %v3949, %v3945
      %v4070 = vpack.c.b16 %v3950, %v3946
      %v4071 = vpack.c.b16 %v3951, %v3947
      %v4072 = vpack.c.b16 %v3952, %v3948
      %v4073 = vpack.c.b16 %v3957, %v3953
      %v4074 = vpack.c.b16 %v3958, %v3954
      %v4075 = vpack.c.b16 %v3959, %v3955
      %v4076 = vpack.c.b16 %v3960, %v3956
      %v4077 = vpack.c.b16 %v3965, %v3961
      %v4078 = vpack.c.b16 %v3966, %v3962
      %v4079 = vpack.c.b16 %v3967, %v3963
      %v4080 = vpack.c.b16 %v3968, %v3964
      %v4081 = vpack.c.b16 %v3973, %v3969
      %v4082 = vpack.c.b16 %v3974, %v3970
      %v4083 = vpack.c.b16 %v3975, %v3971
      %v4084 = vpack.c.b16 %v3976, %v3972
      %v4085 = vpack.c.b16 %v3981, %v3977
      %v4086 = vpack.c.b16 %v3982, %v3978
      %v4087 = vpack.c.b16 %v3983, %v3979
      %v4088 = vpack.c.b16 %v3984, %v3980
      %v4089 = vpack.c.b16 %v3989, %v3985
      %v4090 = vpack.c.b16 %v3990, %v3986
      %v4091 = vpack.c.b16 %v3991, %v3987
      %v4092 = vpack.c.b16 %v3992, %v3988
      %v4093 = vpack.c.b16 %v3997, %v3993
      %v4094 = vpack.c.b16 %v3998, %v3994
      %v4095 = vpack.c.b16 %v3999, %v3995
      %v4096 = vpack.c.b16 %v4000, %v3996
      %v4097 = vpack.c.b16 %v4005, %v4001
      %v4098 = vpack.c.b16 %v4006, %v4002
      %v4099 = vpack.c.b16 %v4007, %v4003
      %v4100 = vpack.c.b16 %v4008, %v4004
      %v4101 = vpack.c.b16 %v4013, %v4009
      %v4102 = vpack.c.b16 %v4014, %v4010
      %v4103 = vpack.c.b16 %v4015, %v4011
      %v4104 = vpack.c.b16 %v4016, %v4012
      %v4105 = vpack.c.b16 %v4021, %v4017
      %v4106 = vpack.c.b16 %v4022, %v4018
      %v4107 = vpack.c.b16 %v4023, %v4019
      %v4108 = vpack.c.b16 %v4024, %v4020
      %v4109 = vpack.c.b16 %v4029, %v4025
      %v4110 = vpack.c.b16 %v4030, %v4026
      %v4111 = vpack.c.b16 %v4031, %v4027
      %v4112 = vpack.c.b16 %v4032, %v4028
      %v4113 = vpack.c.b16 %v4037, %v4033
      %v4114 = vpack.c.b16 %v4038, %v4034
      %v4115 = vpack.c.b16 %v4039, %v4035
      %v4116 = vpack.c.b16 %v4040, %v4036
      %v4117 = vpack.c.b16 %v4045, %v4041
      %v4118 = vpack.c.b16 %v4046, %v4042
      %v4119 = vpack.c.b16 %v4047, %v4043
      %v4120 = vpack.c.b16 %v4048, %v4044
      %v4121 = vpack.c.b16 %v4053, %v4049
      %v4122 = vpack.c.b16 %v4054, %v4050
      %v4123 = vpack.c.b16 %v4055, %v4051
      %v4124 = vpack.c.b16 %v4056, %v4052
      %v4125 = vpack.c.b16 %v4061, %v4057
      %v4126 = vpack.c.b16 %v4062, %v4058
      %v4127 = vpack.c.b16 %v4063, %v4059
      %v4128 = vpack.c.b16 %v4064, %v4060
      %4193 = vmatpush.bf16.msra.mxu0 %v4093
      %4194 = vmatpush.bf16.msra.mxu0 %v4089
      %4195 = vmatpush.bf16.msra.mxu0 %v4085
      %4196 = vmatpush.bf16.msra.mxu0 %v4081
      %4197 = vmatpush.bf16.msra.mxu0 %v4077
      %4198 = vmatpush.bf16.msra.mxu0 %v4073
      %4199 = vmatpush.bf16.msra.mxu0 %v4069
      %4200 = vmatpush.bf16.msra.mxu0 %v4065
      %4201 = vmatmul.bf16.gmra.mxu0 %v3783
      %v4202 = vpop.f32.mrf.mxu0
      %v4203 = vadd.f32 %v3865, %v4202
      %v4204 = vpop.f32.mrf.mxu0
      %v4205 = vadd.f32 %v3865, %v4204
      %4206 = vmatmul.bf16.gmra.mxu0 %v3785
      %v4207 = vpop.f32.mrf.mxu0
      %v4208 = vadd.f32 %v3865, %v4207
      %v4209 = vpop.f32.mrf.mxu0
      %v4210 = vadd.f32 %v3865, %v4209
      %4211 = vmatmul.bf16.gmra.mxu0 %v3787
      %v4212 = vpop.f32.mrf.mxu0
      %v4213 = vadd.f32 %v3865, %v4212
      %v4214 = vpop.f32.mrf.mxu0
      %v4215 = vadd.f32 %v3865, %v4214
      %4216 = vmatmul.bf16.gmra.mxu0 %v3789
      %v4217 = vpop.f32.mrf.mxu0
      %v4218 = vadd.f32 %v3865, %v4217
      %v4219 = vpop.f32.mrf.mxu0
      %v4220 = vadd.f32 %v3865, %v4219
      %4221 = vmatmul.bf16.gmra.mxu0 %v3791
      %v4222 = vpop.f32.mrf.mxu0
      %v4223 = vadd.f32 %v3865, %v4222
      %v4224 = vpop.f32.mrf.mxu0
      %v4225 = vadd.f32 %v3865, %v4224
      %4226 = vmatmul.bf16.gmra.mxu0 %v3793
      %v4227 = vpop.f32.mrf.mxu0
      %v4228 = vadd.f32 %v3865, %v4227
      %v4229 = vpop.f32.mrf.mxu0
      %v4230 = vadd.f32 %v3865, %v4229
      %4231 = vmatmul.bf16.gmra.mxu0 %v3795
      %v4232 = vpop.f32.mrf.mxu0
      %v4233 = vadd.f32 %v3865, %v4232
      %v4234 = vpop.f32.mrf.mxu0
      %v4235 = vadd.f32 %v3865, %v4234
      %4236 = vmatmul.bf16.gmra.mxu0 %v3797
      %v4237 = vpop.f32.mrf.mxu0
      %v4238 = vadd.f32 %v3865, %v4237
      %v4239 = vpop.f32.mrf.mxu0
      %v4240 = vadd.f32 %v3865, %v4239
      %4241 = vdwg.mxu0
      %4242 = vmatpush.bf16.msra.mxu0 %v4125
      %4243 = vmatpush.bf16.msra.mxu0 %v4121
      %4244 = vmatpush.bf16.msra.mxu0 %v4117
      %4245 = vmatpush.bf16.msra.mxu0 %v4113
      %4246 = vmatpush.bf16.msra.mxu0 %v4109
      %4247 = vmatpush.bf16.msra.mxu0 %v4105
      %4248 = vmatpush.bf16.msra.mxu0 %v4101
      %4249 = vmatpush.bf16.msra.mxu0 %v4097
      %4250 = vmatmul.bf16.gmra.mxu0 %v3784
      %v4251 = vpop.f32.mrf.mxu0
      %v4252 = vadd.f32 %v4203, %v4251
      %v4253 = vpop.f32.mrf.mxu0
      %v4254 = vadd.f32 %v4205, %v4253
      %4255 = vmatmul.bf16.gmra.mxu0 %v3786
      %v4256 = vpop.f32.mrf.mxu0
      %v4257 = vadd.f32 %v4208, %v4256
      %v4258 = vpop.f32.mrf.mxu0
      %v4259 = vadd.f32 %v4210, %v4258
      %4260 = vmatmul.bf16.gmra.mxu0 %v3788
      %v4261 = vpop.f32.mrf.mxu0
      %v4262 = vadd.f32 %v4213, %v4261
      %v4263 = vpop.f32.mrf.mxu0
      %v4264 = vadd.f32 %v4215, %v4263
      %4265 = vmatmul.bf16.gmra.mxu0 %v3790
      %v4266 = vpop.f32.mrf.mxu0
      %v4267 = vadd.f32 %v4218, %v4266
      %v4268 = vpop.f32.mrf.mxu0
      %v4269 = vadd.f32 %v4220, %v4268
      %4270 = vmatmul.bf16.gmra.mxu0 %v3792
      %v4271 = vpop.f32.mrf.mxu0
      %v4272 = vadd.f32 %v4223, %v4271
      %v4273 = vpop.f32.mrf.mxu0
      %v4274 = vadd.f32 %v4225, %v4273
      %4275 = vmatmul.bf16.gmra.mxu0 %v3794
      %v4276 = vpop.f32.mrf.mxu0
      %v4277 = vadd.f32 %v4228, %v4276
      %v4278 = vpop.f32.mrf.mxu0
      %v4279 = vadd.f32 %v4230, %v4278
      %4280 = vmatmul.bf16.gmra.mxu0 %v3796
      %v4281 = vpop.f32.mrf.mxu0
      %v4282 = vadd.f32 %v4233, %v4281
      %v4283 = vpop.f32.mrf.mxu0
      %v4284 = vadd.f32 %v4235, %v4283
      %4285 = vmatmul.bf16.gmra.mxu0 %v3798
      %v4286 = vpop.f32.mrf.mxu0
      %v4287 = vadd.f32 %v4238, %v4286
      %v4288 = vpop.f32.mrf.mxu0
      %v4289 = vadd.f32 %v4240, %v4288
      %4290 = vdwg.mxu0
      %4291 = vmatpush.bf16.msra.mxu0 %v4094
      %4292 = vmatpush.bf16.msra.mxu0 %v4090
      %4293 = vmatpush.bf16.msra.mxu0 %v4086
      %4294 = vmatpush.bf16.msra.mxu0 %v4082
      %4295 = vmatpush.bf16.msra.mxu0 %v4078
      %4296 = vmatpush.bf16.msra.mxu0 %v4074
      %4297 = vmatpush.bf16.msra.mxu0 %v4070
      %4298 = vmatpush.bf16.msra.mxu0 %v4066
      %4299 = vmatmul.bf16.gmra.mxu0 %v3783
      %v4300 = vpop.f32.mrf.mxu0
      %v4301 = vadd.f32 %v3866, %v4300
      %v4302 = vpop.f32.mrf.mxu0
      %v4303 = vadd.f32 %v3866, %v4302
      %4304 = vmatmul.bf16.gmra.mxu0 %v3785
      %v4305 = vpop.f32.mrf.mxu0
      %v4306 = vadd.f32 %v3866, %v4305
      %v4307 = vpop.f32.mrf.mxu0
      %v4308 = vadd.f32 %v3866, %v4307
      %4309 = vmatmul.bf16.gmra.mxu0 %v3787
      %v4310 = vpop.f32.mrf.mxu0
      %v4311 = vadd.f32 %v3866, %v4310
      %v4312 = vpop.f32.mrf.mxu0
      %v4313 = vadd.f32 %v3866, %v4312
      %4314 = vmatmul.bf16.gmra.mxu0 %v3789
      %v4315 = vpop.f32.mrf.mxu0
      %v4316 = vadd.f32 %v3866, %v4315
      %v4317 = vpop.f32.mrf.mxu0
      %v4318 = vadd.f32 %v3866, %v4317
      %4319 = vmatmul.bf16.gmra.mxu0 %v3791
      %v4320 = vpop.f32.mrf.mxu0
      %v4321 = vadd.f32 %v3866, %v4320
      %v4322 = vpop.f32.mrf.mxu0
      %v4323 = vadd.f32 %v3866, %v4322
      %4324 = vmatmul.bf16.gmra.mxu0 %v3793
      %v4325 = vpop.f32.mrf.mxu0
      %v4326 = vadd.f32 %v3866, %v4325
      %v4327 = vpop.f32.mrf.mxu0
      %v4328 = vadd.f32 %v3866, %v4327
      %4329 = vmatmul.bf16.gmra.mxu0 %v3795
      %v4330 = vpop.f32.mrf.mxu0
      %v4331 = vadd.f32 %v3866, %v4330
      %v4332 = vpop.f32.mrf.mxu0
      %v4333 = vadd.f32 %v3866, %v4332
      %4334 = vmatmul.bf16.gmra.mxu0 %v3797
      %v4335 = vpop.f32.mrf.mxu0
      %v4336 = vadd.f32 %v3866, %v4335
      %v4337 = vpop.f32.mrf.mxu0
      %v4338 = vadd.f32 %v3866, %v4337
      %4339 = vdwg.mxu0
      %4340 = vmatpush.bf16.msra.mxu0 %v4126
      %4341 = vmatpush.bf16.msra.mxu0 %v4122
      %4342 = vmatpush.bf16.msra.mxu0 %v4118
      %4343 = vmatpush.bf16.msra.mxu0 %v4114
      %4344 = vmatpush.bf16.msra.mxu0 %v4110
      %4345 = vmatpush.bf16.msra.mxu0 %v4106
      %4346 = vmatpush.bf16.msra.mxu0 %v4102
      %4347 = vmatpush.bf16.msra.mxu0 %v4098
      %4348 = vmatmul.bf16.gmra.mxu0 %v3784
      %v4349 = vpop.f32.mrf.mxu0
      %v4350 = vadd.f32 %v4301, %v4349
      %v4351 = vpop.f32.mrf.mxu0
      %v4352 = vadd.f32 %v4303, %v4351
      %4353 = vmatmul.bf16.gmra.mxu0 %v3786
      %v4354 = vpop.f32.mrf.mxu0
      %v4355 = vadd.f32 %v4306, %v4354
      %v4356 = vpop.f32.mrf.mxu0
      %v4357 = vadd.f32 %v4308, %v4356
      %4358 = vmatmul.bf16.gmra.mxu0 %v3788
      %v4359 = vpop.f32.mrf.mxu0
      %v4360 = vadd.f32 %v4311, %v4359
      %v4361 = vpop.f32.mrf.mxu0
      %v4362 = vadd.f32 %v4313, %v4361
      %4363 = vmatmul.bf16.gmra.mxu0 %v3790
      %v4364 = vpop.f32.mrf.mxu0
      %v4365 = vadd.f32 %v4316, %v4364
      %v4366 = vpop.f32.mrf.mxu0
      %v4367 = vadd.f32 %v4318, %v4366
      %4368 = vmatmul.bf16.gmra.mxu0 %v3792
      %v4369 = vpop.f32.mrf.mxu0
      %v4370 = vadd.f32 %v4321, %v4369
      %v4371 = vpop.f32.mrf.mxu0
      %v4372 = vadd.f32 %v4323, %v4371
      %4373 = vmatmul.bf16.gmra.mxu0 %v3794
      %v4374 = vpop.f32.mrf.mxu0
      %v4375 = vadd.f32 %v4326, %v4374
      %v4376 = vpop.f32.mrf.mxu0
      %v4377 = vadd.f32 %v4328, %v4376
      %4378 = vmatmul.bf16.gmra.mxu0 %v3796
      %v4379 = vpop.f32.mrf.mxu0
      %v4380 = vadd.f32 %v4331, %v4379
      %v4381 = vpop.f32.mrf.mxu0
      %v4382 = vadd.f32 %v4333, %v4381
      %4383 = vmatmul.bf16.gmra.mxu0 %v3798
      %v4384 = vpop.f32.mrf.mxu0
      %v4385 = vadd.f32 %v4336, %v4384
      %v4386 = vpop.f32.mrf.mxu0
      %v4387 = vadd.f32 %v4338, %v4386
      %4388 = vdwg.mxu0
      %4389 = vmatpush.bf16.msra.mxu0 %v4095
      %4390 = vmatpush.bf16.msra.mxu0 %v4091
      %4391 = vmatpush.bf16.msra.mxu0 %v4087
      %4392 = vmatpush.bf16.msra.mxu0 %v4083
      %4393 = vmatpush.bf16.msra.mxu0 %v4079
      %4394 = vmatpush.bf16.msra.mxu0 %v4075
      %4395 = vmatpush.bf16.msra.mxu0 %v4071
      %4396 = vmatpush.bf16.msra.mxu0 %v4067
      %4397 = vmatmul.bf16.gmra.mxu0 %v3783
      %v4398 = vpop.f32.mrf.mxu0
      %v4399 = vadd.f32 %v3867, %v4398
      %v4400 = vpop.f32.mrf.mxu0
      %v4401 = vadd.f32 %v3867, %v4400
      %4402 = vmatmul.bf16.gmra.mxu0 %v3785
      %v4403 = vpop.f32.mrf.mxu0
      %v4404 = vadd.f32 %v3867, %v4403
      %v4405 = vpop.f32.mrf.mxu0
      %v4406 = vadd.f32 %v3867, %v4405
      %4407 = vmatmul.bf16.gmra.mxu0 %v3787
      %v4408 = vpop.f32.mrf.mxu0
      %v4409 = vadd.f32 %v3867, %v4408
      %v4410 = vpop.f32.mrf.mxu0
      %v4411 = vadd.f32 %v3867, %v4410
      %4412 = vmatmul.bf16.gmra.mxu0 %v3789
      %v4413 = vpop.f32.mrf.mxu0
      %v4414 = vadd.f32 %v3867, %v4413
      %v4415 = vpop.f32.mrf.mxu0
      %v4416 = vadd.f32 %v3867, %v4415
      %4417 = vmatmul.bf16.gmra.mxu0 %v3791
      %v4418 = vpop.f32.mrf.mxu0
      %v4419 = vadd.f32 %v3867, %v4418
      %v4420 = vpop.f32.mrf.mxu0
      %v4421 = vadd.f32 %v3867, %v4420
      %4422 = vmatmul.bf16.gmra.mxu0 %v3793
      %v4423 = vpop.f32.mrf.mxu0
      %v4424 = vadd.f32 %v3867, %v4423
      %v4425 = vpop.f32.mrf.mxu0
      %v4426 = vadd.f32 %v3867, %v4425
      %4427 = vmatmul.bf16.gmra.mxu0 %v3795
      %v4428 = vpop.f32.mrf.mxu0
      %v4429 = vadd.f32 %v3867, %v4428
      %v4430 = vpop.f32.mrf.mxu0
      %v4431 = vadd.f32 %v3867, %v4430
      %4432 = vmatmul.bf16.gmra.mxu0 %v3797
      %v4433 = vpop.f32.mrf.mxu0
      %v4434 = vadd.f32 %v3867, %v4433
      %v4435 = vpop.f32.mrf.mxu0
      %v4436 = vadd.f32 %v3867, %v4435
      %4437 = vdwg.mxu0
      %4438 = vmatpush.bf16.msra.mxu0 %v4127
      %4439 = vmatpush.bf16.msra.mxu0 %v4123
      %4440 = vmatpush.bf16.msra.mxu0 %v4119
      %4441 = vmatpush.bf16.msra.mxu0 %v4115
      %4442 = vmatpush.bf16.msra.mxu0 %v4111
      %4443 = vmatpush.bf16.msra.mxu0 %v4107
      %4444 = vmatpush.bf16.msra.mxu0 %v4103
      %4445 = vmatpush.bf16.msra.mxu0 %v4099
      %4446 = vmatmul.bf16.gmra.mxu0 %v3784
      %v4447 = vpop.f32.mrf.mxu0
      %v4448 = vadd.f32 %v4399, %v4447
      %v4449 = vpop.f32.mrf.mxu0
      %v4450 = vadd.f32 %v4401, %v4449
      %4451 = vmatmul.bf16.gmra.mxu0 %v3786
      %v4452 = vpop.f32.mrf.mxu0
      %v4453 = vadd.f32 %v4404, %v4452
      %v4454 = vpop.f32.mrf.mxu0
      %v4455 = vadd.f32 %v4406, %v4454
      %4456 = vmatmul.bf16.gmra.mxu0 %v3788
      %v4457 = vpop.f32.mrf.mxu0
      %v4458 = vadd.f32 %v4409, %v4457
      %v4459 = vpop.f32.mrf.mxu0
      %v4460 = vadd.f32 %v4411, %v4459
      %4461 = vmatmul.bf16.gmra.mxu0 %v3790
      %v4462 = vpop.f32.mrf.mxu0
      %v4463 = vadd.f32 %v4414, %v4462
      %v4464 = vpop.f32.mrf.mxu0
      %v4465 = vadd.f32 %v4416, %v4464
      %4466 = vmatmul.bf16.gmra.mxu0 %v3792
      %v4467 = vpop.f32.mrf.mxu0
      %v4468 = vadd.f32 %v4419, %v4467
      %v4469 = vpop.f32.mrf.mxu0
      %v4470 = vadd.f32 %v4421, %v4469
      %4471 = vmatmul.bf16.gmra.mxu0 %v3794
      %v4472 = vpop.f32.mrf.mxu0
      %v4473 = vadd.f32 %v4424, %v4472
      %v4474 = vpop.f32.mrf.mxu0
      %v4475 = vadd.f32 %v4426, %v4474
      %4476 = vmatmul.bf16.gmra.mxu0 %v3796
      %v4477 = vpop.f32.mrf.mxu0
      %v4478 = vadd.f32 %v4429, %v4477
      %v4479 = vpop.f32.mrf.mxu0
      %v4480 = vadd.f32 %v4431, %v4479
      %4481 = vmatmul.bf16.gmra.mxu0 %v3798
      %v4482 = vpop.f32.mrf.mxu0
      %v4483 = vadd.f32 %v4434, %v4482
      %v4484 = vpop.f32.mrf.mxu0
      %v4485 = vadd.f32 %v4436, %v4484
      %4486 = vdwg.mxu0
      %4487 = vmatpush.bf16.msra.mxu0 %v4096
      %4488 = vmatpush.bf16.msra.mxu0 %v4092
      %4489 = vmatpush.bf16.msra.mxu0 %v4088
      %4490 = vmatpush.bf16.msra.mxu0 %v4084
      %4491 = vmatpush.bf16.msra.mxu0 %v4080
      %4492 = vmatpush.bf16.msra.mxu0 %v4076
      %4493 = vmatpush.bf16.msra.mxu0 %v4072
      %4494 = vmatpush.bf16.msra.mxu0 %v4068
      %4495 = vmatmul.bf16.gmra.mxu0 %v3783
      %v4496 = vpop.f32.mrf.mxu0
      %v4497 = vadd.f32 %v3868, %v4496
      %v4498 = vpop.f32.mrf.mxu0
      %v4499 = vadd.f32 %v3868, %v4498
      %4500 = vmatmul.bf16.gmra.mxu0 %v3785
      %v4501 = vpop.f32.mrf.mxu0
      %v4502 = vadd.f32 %v3868, %v4501
      %v4503 = vpop.f32.mrf.mxu0
      %v4504 = vadd.f32 %v3868, %v4503
      %4505 = vmatmul.bf16.gmra.mxu0 %v3787
      %v4506 = vpop.f32.mrf.mxu0
      %v4507 = vadd.f32 %v3868, %v4506
      %v4508 = vpop.f32.mrf.mxu0
      %v4509 = vadd.f32 %v3868, %v4508
      %4510 = vmatmul.bf16.gmra.mxu0 %v3789
      %v4511 = vpop.f32.mrf.mxu0
      %v4512 = vadd.f32 %v3868, %v4511
      %v4513 = vpop.f32.mrf.mxu0
      %v4514 = vadd.f32 %v3868, %v4513
      %4515 = vmatmul.bf16.gmra.mxu0 %v3791
      %v4516 = vpop.f32.mrf.mxu0
      %v4517 = vadd.f32 %v3868, %v4516
      %v4518 = vpop.f32.mrf.mxu0
      %v4519 = vadd.f32 %v3868, %v4518
      %4520 = vmatmul.bf16.gmra.mxu0 %v3793
      %v4521 = vpop.f32.mrf.mxu0
      %v4522 = vadd.f32 %v3868, %v4521
      %v4523 = vpop.f32.mrf.mxu0
      %v4524 = vadd.f32 %v3868, %v4523
      %4525 = vmatmul.bf16.gmra.mxu0 %v3795
      %v4526 = vpop.f32.mrf.mxu0
      %v4527 = vadd.f32 %v3868, %v4526
      %v4528 = vpop.f32.mrf.mxu0
      %v4529 = vadd.f32 %v3868, %v4528
      %4530 = vmatmul.bf16.gmra.mxu0 %v3797
      %v4531 = vpop.f32.mrf.mxu0
      %v4532 = vadd.f32 %v3868, %v4531
      %v4533 = vpop.f32.mrf.mxu0
      %v4534 = vadd.f32 %v3868, %v4533
      %4535 = vdwg.mxu0
      %4536 = vmatpush.bf16.msra.mxu0 %v4128
      %4537 = vmatpush.bf16.msra.mxu0 %v4124
      %4538 = vmatpush.bf16.msra.mxu0 %v4120
      %4539 = vmatpush.bf16.msra.mxu0 %v4116
      %4540 = vmatpush.bf16.msra.mxu0 %v4112
      %4541 = vmatpush.bf16.msra.mxu0 %v4108
      %4542 = vmatpush.bf16.msra.mxu0 %v4104
      %4543 = vmatpush.bf16.msra.mxu0 %v4100
      %4544 = vmatmul.bf16.gmra.mxu0 %v3784
      %v4545 = vpop.f32.mrf.mxu0
      %v4546 = vadd.f32 %v4497, %v4545
      %v4547 = vpop.f32.mrf.mxu0
      %v4548 = vadd.f32 %v4499, %v4547
      %4549 = vmatmul.bf16.gmra.mxu0 %v3786
      %v4550 = vpop.f32.mrf.mxu0
      %v4551 = vadd.f32 %v4502, %v4550
      %v4552 = vpop.f32.mrf.mxu0
      %v4553 = vadd.f32 %v4504, %v4552
      %4554 = vmatmul.bf16.gmra.mxu0 %v3788
      %v4555 = vpop.f32.mrf.mxu0
      %v4556 = vadd.f32 %v4507, %v4555
      %v4557 = vpop.f32.mrf.mxu0
      %v4558 = vadd.f32 %v4509, %v4557
      %4559 = vmatmul.bf16.gmra.mxu0 %v3790
      %v4560 = vpop.f32.mrf.mxu0
      %v4561 = vadd.f32 %v4512, %v4560
      %v4562 = vpop.f32.mrf.mxu0
      %v4563 = vadd.f32 %v4514, %v4562
      %4564 = vmatmul.bf16.gmra.mxu0 %v3792
      %v4565 = vpop.f32.mrf.mxu0
      %v4566 = vadd.f32 %v4517, %v4565
      %v4567 = vpop.f32.mrf.mxu0
      %v4568 = vadd.f32 %v4519, %v4567
      %4569 = vmatmul.bf16.gmra.mxu0 %v3794
      %v4570 = vpop.f32.mrf.mxu0
      %v4571 = vadd.f32 %v4522, %v4570
      %v4572 = vpop.f32.mrf.mxu0
      %v4573 = vadd.f32 %v4524, %v4572
      %4574 = vmatmul.bf16.gmra.mxu0 %v3796
      %v4575 = vpop.f32.mrf.mxu0
      %v4576 = vadd.f32 %v4527, %v4575
      %v4577 = vpop.f32.mrf.mxu0
      %v4578 = vadd.f32 %v4529, %v4577
      %4579 = vmatmul.bf16.gmra.mxu0 %v3798
      %v4580 = vpop.f32.mrf.mxu0
      %v4581 = vadd.f32 %v4532, %v4580
      %v4582 = vpop.f32.mrf.mxu0
      %v4583 = vadd.f32 %v4534, %v4582
      %4584 = vdwg.mxu0
      %v4585 = vmax.f32 %v4252, 0.0
      %v4586 = vmax.f32 %v4350, 0.0
      %v4587 = vmax.f32 %v4448, 0.0
      %v4588 = vmax.f32 %v4546, 0.0
      %v4589 = vmax.f32 %v4254, 0.0
      %v4590 = vmax.f32 %v4352, 0.0
      %v4591 = vmax.f32 %v4450, 0.0
      %v4592 = vmax.f32 %v4548, 0.0
      %v4593 = vmax.f32 %v4257, 0.0
      %v4594 = vmax.f32 %v4355, 0.0
      %v4595 = vmax.f32 %v4453, 0.0
      %v4596 = vmax.f32 %v4551, 0.0
      %v4597 = vmax.f32 %v4259, 0.0
      %v4598 = vmax.f32 %v4357, 0.0
      %v4599 = vmax.f32 %v4455, 0.0
      %v4600 = vmax.f32 %v4553, 0.0
      %v4601 = vmax.f32 %v4262, 0.0
      %v4602 = vmax.f32 %v4360, 0.0
      %v4603 = vmax.f32 %v4458, 0.0
      %v4604 = vmax.f32 %v4556, 0.0
      %v4605 = vmax.f32 %v4264, 0.0
      %v4606 = vmax.f32 %v4362, 0.0
      %v4607 = vmax.f32 %v4460, 0.0
      %v4608 = vmax.f32 %v4558, 0.0
      %v4609 = vmax.f32 %v4267, 0.0
      %v4610 = vmax.f32 %v4365, 0.0
      %v4611 = vmax.f32 %v4463, 0.0
      %v4612 = vmax.f32 %v4561, 0.0
      %v4613 = vmax.f32 %v4269, 0.0
      %v4614 = vmax.f32 %v4367, 0.0
      %v4615 = vmax.f32 %v4465, 0.0
      %v4616 = vmax.f32 %v4563, 0.0
      %v4617 = vmax.f32 %v4272, 0.0
      %v4618 = vmax.f32 %v4370, 0.0
      %v4619 = vmax.f32 %v4468, 0.0
      %v4620 = vmax.f32 %v4566, 0.0
      %v4621 = vmax.f32 %v4274, 0.0
      %v4622 = vmax.f32 %v4372, 0.0
      %v4623 = vmax.f32 %v4470, 0.0
      %v4624 = vmax.f32 %v4568, 0.0
      %v4625 = vmax.f32 %v4277, 0.0
      %v4626 = vmax.f32 %v4375, 0.0
      %v4627 = vmax.f32 %v4473, 0.0
      %v4628 = vmax.f32 %v4571, 0.0
      %v4629 = vmax.f32 %v4279, 0.0
      %v4630 = vmax.f32 %v4377, 0.0
      %v4631 = vmax.f32 %v4475, 0.0
      %v4632 = vmax.f32 %v4573, 0.0
      %v4633 = vmax.f32 %v4282, 0.0
      %v4634 = vmax.f32 %v4380, 0.0
      %v4635 = vmax.f32 %v4478, 0.0
      %v4636 = vmax.f32 %v4576, 0.0
      %v4637 = vmax.f32 %v4284, 0.0
      %v4638 = vmax.f32 %v4382, 0.0
      %v4639 = vmax.f32 %v4480, 0.0
      %v4640 = vmax.f32 %v4578, 0.0
      %v4641 = vmax.f32 %v4287, 0.0
      %v4642 = vmax.f32 %v4385, 0.0
      %v4643 = vmax.f32 %v4483, 0.0
      %v4644 = vmax.f32 %v4581, 0.0
      %v4645 = vmax.f32 %v4289, 0.0
      %v4646 = vmax.f32 %v4387, 0.0
      %v4647 = vmax.f32 %v4485, 0.0
      %v4648 = vmax.f32 %v4583, 0.0
      %v4649 = vpack.c.bf16 %v4589, %v4585
      %v4650 = vpack.c.bf16 %v4590, %v4586
      %v4651 = vpack.c.bf16 %v4591, %v4587
      %v4652 = vpack.c.bf16 %v4592, %v4588
      %v4653 = vpack.c.bf16 %v4597, %v4593
      %v4654 = vpack.c.bf16 %v4598, %v4594
      %v4655 = vpack.c.bf16 %v4599, %v4595
      %v4656 = vpack.c.bf16 %v4600, %v4596
      %v4657 = vpack.c.bf16 %v4605, %v4601
      %v4658 = vpack.c.bf16 %v4606, %v4602
      %v4659 = vpack.c.bf16 %v4607, %v4603
      %v4660 = vpack.c.bf16 %v4608, %v4604
      %v4661 = vpack.c.bf16 %v4613, %v4609
      %v4662 = vpack.c.bf16 %v4614, %v4610
      %v4663 = vpack.c.bf16 %v4615, %v4611
      %v4664 = vpack.c.bf16 %v4616, %v4612
      %v4665 = vpack.c.bf16 %v4621, %v4617
      %v4666 = vpack.c.bf16 %v4622, %v4618
      %v4667 = vpack.c.bf16 %v4623, %v4619
      %v4668 = vpack.c.bf16 %v4624, %v4620
      %v4669 = vpack.c.bf16 %v4629, %v4625
      %v4670 = vpack.c.bf16 %v4630, %v4626
      %v4671 = vpack.c.bf16 %v4631, %v4627
      %v4672 = vpack.c.bf16 %v4632, %v4628
      %v4673 = vpack.c.bf16 %v4637, %v4633
      %v4674 = vpack.c.bf16 %v4638, %v4634
      %v4675 = vpack.c.bf16 %v4639, %v4635
      %v4676 = vpack.c.bf16 %v4640, %v4636
      %v4677 = vpack.c.bf16 %v4645, %v4641
      %v4678 = vpack.c.bf16 %v4646, %v4642
      %v4679 = vpack.c.bf16 %v4647, %v4643
      %v4680 = vpack.c.bf16 %v4648, %v4644
      %v4681 = vld [vmem:[%s13] sm:$0xff]
      %v4682 = vld [vmem:[%s13 + $0x8] sm:$0xff]
      %v4683 = vld [vmem:[%s13 + $0x10] sm:$0xff]
      %v4684 = vld [vmem:[%s13 + $0x18] sm:$0xff]
      %v4685 = vld [vmem:[%s13 + $0x20] sm:$0xff]
      %v4686 = vld [vmem:[%s13 + $0x28] sm:$0xff]
      %v4687 = vld [vmem:[%s13 + $0x30] sm:$0xff]
      %v4688 = vld [vmem:[%s13 + $0x38] sm:$0xff]
      %v4689 = vld [vmem:[%s13 + $0x40] sm:$0xff]
      %v4690 = vld [vmem:[%s13 + $0x48] sm:$0xff]
      %v4691 = vld [vmem:[%s13 + $0x50] sm:$0xff]
      %v4692 = vld [vmem:[%s13 + $0x58] sm:$0xff]
      %v4693 = vld [vmem:[%s13 + $0x60] sm:$0xff]
      %v4694 = vld [vmem:[%s13 + $0x68] sm:$0xff]
      %v4695 = vld [vmem:[%s13 + $0x70] sm:$0xff]
      %v4696 = vld [vmem:[%s13 + $0x78] sm:$0xff]
      %v4697 = vld [vmem:[%s13 + $0x80] sm:$0xff]
      %v4698 = vld [vmem:[%s13 + $0x88] sm:$0xff]
      %v4699 = vld [vmem:[%s13 + $0x90] sm:$0xff]
      %v4700 = vld [vmem:[%s13 + $0x98] sm:$0xff]
      %v4701 = vld [vmem:[%s13 + $0xa0] sm:$0xff]
      %v4702 = vld [vmem:[%s13 + $0xa8] sm:$0xff]
      %v4703 = vld [vmem:[%s13 + $0xb0] sm:$0xff]
      %v4704 = vld [vmem:[%s13 + $0xb8] sm:$0xff]
      %v4705 = vld [vmem:[%s13 + $0xc0] sm:$0xff]
      %v4706 = vld [vmem:[%s13 + $0xc8] sm:$0xff]
      %v4707 = vld [vmem:[%s13 + $0xd0] sm:$0xff]
      %v4708 = vld [vmem:[%s13 + $0xd8] sm:$0xff]
      %v4709 = vld [vmem:[%s13 + $0xe0] sm:$0xff]
      %v4710 = vld [vmem:[%s13 + $0xe8] sm:$0xff]
      %v4711 = vld [vmem:[%s13 + $0xf0] sm:$0xff]
      %v4712 = vld [vmem:[%s13 + $0xf8] sm:$0xff]
      %v4713 = vld [vmem:[%s13 + $0x100] sm:$0xff]
      %v4714 = vld [vmem:[%s13 + $0x108] sm:$0xff]
      %v4715 = vld [vmem:[%s13 + $0x110] sm:$0xff]
      %v4716 = vld [vmem:[%s13 + $0x118] sm:$0xff]
      %v4717 = vld [vmem:[%s13 + $0x120] sm:$0xff]
      %v4718 = vld [vmem:[%s13 + $0x128] sm:$0xff]
      %v4719 = vld [vmem:[%s13 + $0x130] sm:$0xff]
      %v4720 = vld [vmem:[%s13 + $0x138] sm:$0xff]
      %v4721 = vld [vmem:[%s13 + $0x140] sm:$0xff]
      %v4722 = vld [vmem:[%s13 + $0x148] sm:$0xff]
      %v4723 = vld [vmem:[%s13 + $0x150] sm:$0xff]
      %v4724 = vld [vmem:[%s13 + $0x158] sm:$0xff]
      %v4725 = vld [vmem:[%s13 + $0x160] sm:$0xff]
      %v4726 = vld [vmem:[%s13 + $0x168] sm:$0xff]
      %v4727 = vld [vmem:[%s13 + $0x170] sm:$0xff]
      %v4728 = vld [vmem:[%s13 + $0x178] sm:$0xff]
      %v4729 = vld [vmem:[%s13 + $0x180] sm:$0xff]
      %v4730 = vld [vmem:[%s13 + $0x188] sm:$0xff]
      %v4731 = vld [vmem:[%s13 + $0x190] sm:$0xff]
      %v4732 = vld [vmem:[%s13 + $0x198] sm:$0xff]
      %v4733 = vld [vmem:[%s13 + $0x1a0] sm:$0xff]
      %v4734 = vld [vmem:[%s13 + $0x1a8] sm:$0xff]
      %v4735 = vld [vmem:[%s13 + $0x1b0] sm:$0xff]
      %v4736 = vld [vmem:[%s13 + $0x1b8] sm:$0xff]
      %v4737 = vld [vmem:[%s13 + $0x1c0] sm:$0xff]
      %v4738 = vld [vmem:[%s13 + $0x1c8] sm:$0xff]
      %v4739 = vld [vmem:[%s13 + $0x1d0] sm:$0xff]
      %v4740 = vld [vmem:[%s13 + $0x1d8] sm:$0xff]
      %v4741 = vld [vmem:[%s13 + $0x1e0] sm:$0xff]
      %v4742 = vld [vmem:[%s13 + $0x1e8] sm:$0xff]
      %v4743 = vld [vmem:[%s13 + $0x1f0] sm:$0xff]
      %v4744 = vld [vmem:[%s13 + $0x1f8] sm:$0xff]
      %v4745 = vld [vmem:[%s14] sm:$0x3]
      %v4747 = vperm.slane %v4745, 0
      %v4748 = vperm.slane %v4745, 1
      %v4815 = vunpack.c.l.b16 %v4681
      %v4816 = vunpack.c.h.b16 %v4681
      %v4817 = vunpack.c.l.b16 %v4682
      %v4818 = vunpack.c.h.b16 %v4682
      %v4819 = vunpack.c.l.b16 %v4683
      %v4820 = vunpack.c.h.b16 %v4683
      %v4821 = vunpack.c.l.b16 %v4684
      %v4822 = vunpack.c.h.b16 %v4684
      %v4823 = vunpack.c.l.b16 %v4685
      %v4824 = vunpack.c.h.b16 %v4685
      %v4825 = vunpack.c.l.b16 %v4686
      %v4826 = vunpack.c.h.b16 %v4686
      %v4827 = vunpack.c.l.b16 %v4687
      %v4828 = vunpack.c.h.b16 %v4687
      %v4829 = vunpack.c.l.b16 %v4688
      %v4830 = vunpack.c.h.b16 %v4688
      %v4831 = vunpack.c.l.b16 %v4689
      %v4832 = vunpack.c.h.b16 %v4689
      %v4833 = vunpack.c.l.b16 %v4690
      %v4834 = vunpack.c.h.b16 %v4690
      %v4835 = vunpack.c.l.b16 %v4691
      %v4836 = vunpack.c.h.b16 %v4691
      %v4837 = vunpack.c.l.b16 %v4692
      %v4838 = vunpack.c.h.b16 %v4692
      %v4839 = vunpack.c.l.b16 %v4693
      %v4840 = vunpack.c.h.b16 %v4693
      %v4841 = vunpack.c.l.b16 %v4694
      %v4842 = vunpack.c.h.b16 %v4694
      %v4843 = vunpack.c.l.b16 %v4695
      %v4844 = vunpack.c.h.b16 %v4695
      %v4845 = vunpack.c.l.b16 %v4696
      %v4846 = vunpack.c.h.b16 %v4696
      %v4847 = vunpack.c.l.b16 %v4697
      %v4848 = vunpack.c.h.b16 %v4697
      %v4849 = vunpack.c.l.b16 %v4698
      %v4850 = vunpack.c.h.b16 %v4698
      %v4851 = vunpack.c.l.b16 %v4699
      %v4852 = vunpack.c.h.b16 %v4699
      %v4853 = vunpack.c.l.b16 %v4700
      %v4854 = vunpack.c.h.b16 %v4700
      %v4855 = vunpack.c.l.b16 %v4701
      %v4856 = vunpack.c.h.b16 %v4701
      %v4857 = vunpack.c.l.b16 %v4702
      %v4858 = vunpack.c.h.b16 %v4702
      %v4859 = vunpack.c.l.b16 %v4703
      %v4860 = vunpack.c.h.b16 %v4703
      %v4861 = vunpack.c.l.b16 %v4704
      %v4862 = vunpack.c.h.b16 %v4704
      %v4863 = vunpack.c.l.b16 %v4705
      %v4864 = vunpack.c.h.b16 %v4705
      %v4865 = vunpack.c.l.b16 %v4706
      %v4866 = vunpack.c.h.b16 %v4706
      %v4867 = vunpack.c.l.b16 %v4707
      %v4868 = vunpack.c.h.b16 %v4707
      %v4869 = vunpack.c.l.b16 %v4708
      %v4870 = vunpack.c.h.b16 %v4708
      %v4871 = vunpack.c.l.b16 %v4709
      %v4872 = vunpack.c.h.b16 %v4709
      %v4873 = vunpack.c.l.b16 %v4710
      %v4874 = vunpack.c.h.b16 %v4710
      %v4875 = vunpack.c.l.b16 %v4711
      %v4876 = vunpack.c.h.b16 %v4711
      %v4877 = vunpack.c.l.b16 %v4712
      %v4878 = vunpack.c.h.b16 %v4712
      %v4879 = vunpack.c.l.b16 %v4713
      %v4880 = vunpack.c.h.b16 %v4713
      %v4881 = vunpack.c.l.b16 %v4714
      %v4882 = vunpack.c.h.b16 %v4714
      %v4883 = vunpack.c.l.b16 %v4715
      %v4884 = vunpack.c.h.b16 %v4715
      %v4885 = vunpack.c.l.b16 %v4716
      %v4886 = vunpack.c.h.b16 %v4716
      %v4887 = vunpack.c.l.b16 %v4717
      %v4888 = vunpack.c.h.b16 %v4717
      %v4889 = vunpack.c.l.b16 %v4718
      %v4890 = vunpack.c.h.b16 %v4718
      %v4891 = vunpack.c.l.b16 %v4719
      %v4892 = vunpack.c.h.b16 %v4719
      %v4893 = vunpack.c.l.b16 %v4720
      %v4894 = vunpack.c.h.b16 %v4720
      %v4895 = vunpack.c.l.b16 %v4721
      %v4896 = vunpack.c.h.b16 %v4721
      %v4897 = vunpack.c.l.b16 %v4722
      %v4898 = vunpack.c.h.b16 %v4722
      %v4899 = vunpack.c.l.b16 %v4723
      %v4900 = vunpack.c.h.b16 %v4723
      %v4901 = vunpack.c.l.b16 %v4724
      %v4902 = vunpack.c.h.b16 %v4724
      %v4903 = vunpack.c.l.b16 %v4725
      %v4904 = vunpack.c.h.b16 %v4725
      %v4905 = vunpack.c.l.b16 %v4726
      %v4906 = vunpack.c.h.b16 %v4726
      %v4907 = vunpack.c.l.b16 %v4727
      %v4908 = vunpack.c.h.b16 %v4727
      %v4909 = vunpack.c.l.b16 %v4728
      %v4910 = vunpack.c.h.b16 %v4728
      %v4911 = vunpack.c.l.b16 %v4729
      %v4912 = vunpack.c.h.b16 %v4729
      %v4913 = vunpack.c.l.b16 %v4730
      %v4914 = vunpack.c.h.b16 %v4730
      %v4915 = vunpack.c.l.b16 %v4731
      %v4916 = vunpack.c.h.b16 %v4731
      %v4917 = vunpack.c.l.b16 %v4732
      %v4918 = vunpack.c.h.b16 %v4732
      %v4919 = vunpack.c.l.b16 %v4733
      %v4920 = vunpack.c.h.b16 %v4733
      %v4921 = vunpack.c.l.b16 %v4734
      %v4922 = vunpack.c.h.b16 %v4734
      %v4923 = vunpack.c.l.b16 %v4735
      %v4924 = vunpack.c.h.b16 %v4735
      %v4925 = vunpack.c.l.b16 %v4736
      %v4926 = vunpack.c.h.b16 %v4736
      %v4927 = vunpack.c.l.b16 %v4737
      %v4928 = vunpack.c.h.b16 %v4737
      %v4929 = vunpack.c.l.b16 %v4738
      %v4930 = vunpack.c.h.b16 %v4738
      %v4931 = vunpack.c.l.b16 %v4739
      %v4932 = vunpack.c.h.b16 %v4739
      %v4933 = vunpack.c.l.b16 %v4740
      %v4934 = vunpack.c.h.b16 %v4740
      %v4935 = vunpack.c.l.b16 %v4741
      %v4936 = vunpack.c.h.b16 %v4741
      %v4937 = vunpack.c.l.b16 %v4742
      %v4938 = vunpack.c.h.b16 %v4742
      %v4939 = vunpack.c.l.b16 %v4743
      %v4940 = vunpack.c.h.b16 %v4743
      %v4941 = vunpack.c.l.b16 %v4744
      %v4942 = vunpack.c.h.b16 %v4744
      %v4943 = vpack.c.b16 %v4817, %v4815
      %v4944 = vpack.c.b16 %v4818, %v4816
      %v4945 = vpack.c.b16 %v4821, %v4819
      %v4946 = vpack.c.b16 %v4822, %v4820
      %v4947 = vpack.c.b16 %v4825, %v4823
      %v4948 = vpack.c.b16 %v4826, %v4824
      %v4949 = vpack.c.b16 %v4829, %v4827
      %v4950 = vpack.c.b16 %v4830, %v4828
      %v4951 = vpack.c.b16 %v4833, %v4831
      %v4952 = vpack.c.b16 %v4834, %v4832
      %v4953 = vpack.c.b16 %v4837, %v4835
      %v4954 = vpack.c.b16 %v4838, %v4836
      %v4955 = vpack.c.b16 %v4841, %v4839
      %v4956 = vpack.c.b16 %v4842, %v4840
      %v4957 = vpack.c.b16 %v4845, %v4843
      %v4958 = vpack.c.b16 %v4846, %v4844
      %v4959 = vpack.c.b16 %v4849, %v4847
      %v4960 = vpack.c.b16 %v4850, %v4848
      %v4961 = vpack.c.b16 %v4853, %v4851
      %v4962 = vpack.c.b16 %v4854, %v4852
      %v4963 = vpack.c.b16 %v4857, %v4855
      %v4964 = vpack.c.b16 %v4858, %v4856
      %v4965 = vpack.c.b16 %v4861, %v4859
      %v4966 = vpack.c.b16 %v4862, %v4860
      %v4967 = vpack.c.b16 %v4865, %v4863
      %v4968 = vpack.c.b16 %v4866, %v4864
      %v4969 = vpack.c.b16 %v4869, %v4867
      %v4970 = vpack.c.b16 %v4870, %v4868
      %v4971 = vpack.c.b16 %v4873, %v4871
      %v4972 = vpack.c.b16 %v4874, %v4872
      %v4973 = vpack.c.b16 %v4877, %v4875
      %v4974 = vpack.c.b16 %v4878, %v4876
      %v4975 = vpack.c.b16 %v4881, %v4879
      %v4976 = vpack.c.b16 %v4882, %v4880
      %v4977 = vpack.c.b16 %v4885, %v4883
      %v4978 = vpack.c.b16 %v4886, %v4884
      %v4979 = vpack.c.b16 %v4889, %v4887
      %v4980 = vpack.c.b16 %v4890, %v4888
      %v4981 = vpack.c.b16 %v4893, %v4891
      %v4982 = vpack.c.b16 %v4894, %v4892
      %v4983 = vpack.c.b16 %v4897, %v4895
      %v4984 = vpack.c.b16 %v4898, %v4896
      %v4985 = vpack.c.b16 %v4901, %v4899
      %v4986 = vpack.c.b16 %v4902, %v4900
      %v4987 = vpack.c.b16 %v4905, %v4903
      %v4988 = vpack.c.b16 %v4906, %v4904
      %v4989 = vpack.c.b16 %v4909, %v4907
      %v4990 = vpack.c.b16 %v4910, %v4908
      %v4991 = vpack.c.b16 %v4913, %v4911
      %v4992 = vpack.c.b16 %v4914, %v4912
      %v4993 = vpack.c.b16 %v4917, %v4915
      %v4994 = vpack.c.b16 %v4918, %v4916
      %v4995 = vpack.c.b16 %v4921, %v4919
      %v4996 = vpack.c.b16 %v4922, %v4920
      %v4997 = vpack.c.b16 %v4925, %v4923
      %v4998 = vpack.c.b16 %v4926, %v4924
      %v4999 = vpack.c.b16 %v4929, %v4927
      %v5000 = vpack.c.b16 %v4930, %v4928
      %v5001 = vpack.c.b16 %v4933, %v4931
      %v5002 = vpack.c.b16 %v4934, %v4932
      %v5003 = vpack.c.b16 %v4937, %v4935
      %v5004 = vpack.c.b16 %v4938, %v4936
      %v5005 = vpack.c.b16 %v4941, %v4939
      %v5006 = vpack.c.b16 %v4942, %v4940
      %5071 = vmatpush.bf16.msra.mxu0 %v4957
      %5072 = vmatpush.bf16.msra.mxu0 %v4955
      %5073 = vmatpush.bf16.msra.mxu0 %v4953
      %5074 = vmatpush.bf16.msra.mxu0 %v4951
      %5075 = vmatpush.bf16.msra.mxu0 %v4949
      %5076 = vmatpush.bf16.msra.mxu0 %v4947
      %5077 = vmatpush.bf16.msra.mxu0 %v4945
      %5078 = vmatpush.bf16.msra.mxu0 %v4943
      %5079 = vmatmul.bf16.gmra.mxu0 %v4649
      %v5080 = vpop.f32.mrf.mxu0
      %v5081 = vadd.f32 %v4747, %v5080
      %v5082 = vpop.f32.mrf.mxu0
      %v5083 = vadd.f32 %v4747, %v5082
      %5084 = vmatmul.bf16.gmra.mxu0 %v4653
      %v5085 = vpop.f32.mrf.mxu0
      %v5086 = vadd.f32 %v4747, %v5085
      %v5087 = vpop.f32.mrf.mxu0
      %v5088 = vadd.f32 %v4747, %v5087
      %5089 = vmatmul.bf16.gmra.mxu0 %v4657
      %v5090 = vpop.f32.mrf.mxu0
      %v5091 = vadd.f32 %v4747, %v5090
      %v5092 = vpop.f32.mrf.mxu0
      %v5093 = vadd.f32 %v4747, %v5092
      %5094 = vmatmul.bf16.gmra.mxu0 %v4661
      %v5095 = vpop.f32.mrf.mxu0
      %v5096 = vadd.f32 %v4747, %v5095
      %v5097 = vpop.f32.mrf.mxu0
      %v5098 = vadd.f32 %v4747, %v5097
      %5099 = vmatmul.bf16.gmra.mxu0 %v4665
      %v5100 = vpop.f32.mrf.mxu0
      %v5101 = vadd.f32 %v4747, %v5100
      %v5102 = vpop.f32.mrf.mxu0
      %v5103 = vadd.f32 %v4747, %v5102
      %5104 = vmatmul.bf16.gmra.mxu0 %v4669
      %v5105 = vpop.f32.mrf.mxu0
      %v5106 = vadd.f32 %v4747, %v5105
      %v5107 = vpop.f32.mrf.mxu0
      %v5108 = vadd.f32 %v4747, %v5107
      %5109 = vmatmul.bf16.gmra.mxu0 %v4673
      %v5110 = vpop.f32.mrf.mxu0
      %v5111 = vadd.f32 %v4747, %v5110
      %v5112 = vpop.f32.mrf.mxu0
      %v5113 = vadd.f32 %v4747, %v5112
      %5114 = vmatmul.bf16.gmra.mxu0 %v4677
      %v5115 = vpop.f32.mrf.mxu0
      %v5116 = vadd.f32 %v4747, %v5115
      %v5117 = vpop.f32.mrf.mxu0
      %v5118 = vadd.f32 %v4747, %v5117
      %5119 = vdwg.mxu0
      %5120 = vmatpush.bf16.msra.mxu0 %v4973
      %5121 = vmatpush.bf16.msra.mxu0 %v4971
      %5122 = vmatpush.bf16.msra.mxu0 %v4969
      %5123 = vmatpush.bf16.msra.mxu0 %v4967
      %5124 = vmatpush.bf16.msra.mxu0 %v4965
      %5125 = vmatpush.bf16.msra.mxu0 %v4963
      %5126 = vmatpush.bf16.msra.mxu0 %v4961
      %5127 = vmatpush.bf16.msra.mxu0 %v4959
      %5128 = vmatmul.bf16.gmra.mxu0 %v4650
      %v5129 = vpop.f32.mrf.mxu0
      %v5130 = vadd.f32 %v5081, %v5129
      %v5131 = vpop.f32.mrf.mxu0
      %v5132 = vadd.f32 %v5083, %v5131
      %5133 = vmatmul.bf16.gmra.mxu0 %v4654
      %v5134 = vpop.f32.mrf.mxu0
      %v5135 = vadd.f32 %v5086, %v5134
      %v5136 = vpop.f32.mrf.mxu0
      %v5137 = vadd.f32 %v5088, %v5136
      %5138 = vmatmul.bf16.gmra.mxu0 %v4658
      %v5139 = vpop.f32.mrf.mxu0
      %v5140 = vadd.f32 %v5091, %v5139
      %v5141 = vpop.f32.mrf.mxu0
      %v5142 = vadd.f32 %v5093, %v5141
      %5143 = vmatmul.bf16.gmra.mxu0 %v4662
      %v5144 = vpop.f32.mrf.mxu0
      %v5145 = vadd.f32 %v5096, %v5144
      %v5146 = vpop.f32.mrf.mxu0
      %v5147 = vadd.f32 %v5098, %v5146
      %5148 = vmatmul.bf16.gmra.mxu0 %v4666
      %v5149 = vpop.f32.mrf.mxu0
      %v5150 = vadd.f32 %v5101, %v5149
      %v5151 = vpop.f32.mrf.mxu0
      %v5152 = vadd.f32 %v5103, %v5151
      %5153 = vmatmul.bf16.gmra.mxu0 %v4670
      %v5154 = vpop.f32.mrf.mxu0
      %v5155 = vadd.f32 %v5106, %v5154
      %v5156 = vpop.f32.mrf.mxu0
      %v5157 = vadd.f32 %v5108, %v5156
      %5158 = vmatmul.bf16.gmra.mxu0 %v4674
      %v5159 = vpop.f32.mrf.mxu0
      %v5160 = vadd.f32 %v5111, %v5159
      %v5161 = vpop.f32.mrf.mxu0
      %v5162 = vadd.f32 %v5113, %v5161
      %5163 = vmatmul.bf16.gmra.mxu0 %v4678
      %v5164 = vpop.f32.mrf.mxu0
      %v5165 = vadd.f32 %v5116, %v5164
      %v5166 = vpop.f32.mrf.mxu0
      %v5167 = vadd.f32 %v5118, %v5166
      %5168 = vdwg.mxu0
      %5169 = vmatpush.bf16.msra.mxu0 %v4989
      %5170 = vmatpush.bf16.msra.mxu0 %v4987
      %5171 = vmatpush.bf16.msra.mxu0 %v4985
      %5172 = vmatpush.bf16.msra.mxu0 %v4983
      %5173 = vmatpush.bf16.msra.mxu0 %v4981
      %5174 = vmatpush.bf16.msra.mxu0 %v4979
      %5175 = vmatpush.bf16.msra.mxu0 %v4977
      %5176 = vmatpush.bf16.msra.mxu0 %v4975
      %5177 = vmatmul.bf16.gmra.mxu0 %v4651
      %v5178 = vpop.f32.mrf.mxu0
      %v5179 = vadd.f32 %v5130, %v5178
      %v5180 = vpop.f32.mrf.mxu0
      %v5181 = vadd.f32 %v5132, %v5180
      %5182 = vmatmul.bf16.gmra.mxu0 %v4655
      %v5183 = vpop.f32.mrf.mxu0
      %v5184 = vadd.f32 %v5135, %v5183
      %v5185 = vpop.f32.mrf.mxu0
      %v5186 = vadd.f32 %v5137, %v5185
      %5187 = vmatmul.bf16.gmra.mxu0 %v4659
      %v5188 = vpop.f32.mrf.mxu0
      %v5189 = vadd.f32 %v5140, %v5188
      %v5190 = vpop.f32.mrf.mxu0
      %v5191 = vadd.f32 %v5142, %v5190
      %5192 = vmatmul.bf16.gmra.mxu0 %v4663
      %v5193 = vpop.f32.mrf.mxu0
      %v5194 = vadd.f32 %v5145, %v5193
      %v5195 = vpop.f32.mrf.mxu0
      %v5196 = vadd.f32 %v5147, %v5195
      %5197 = vmatmul.bf16.gmra.mxu0 %v4667
      %v5198 = vpop.f32.mrf.mxu0
      %v5199 = vadd.f32 %v5150, %v5198
      %v5200 = vpop.f32.mrf.mxu0
      %v5201 = vadd.f32 %v5152, %v5200
      %5202 = vmatmul.bf16.gmra.mxu0 %v4671
      %v5203 = vpop.f32.mrf.mxu0
      %v5204 = vadd.f32 %v5155, %v5203
      %v5205 = vpop.f32.mrf.mxu0
      %v5206 = vadd.f32 %v5157, %v5205
      %5207 = vmatmul.bf16.gmra.mxu0 %v4675
      %v5208 = vpop.f32.mrf.mxu0
      %v5209 = vadd.f32 %v5160, %v5208
      %v5210 = vpop.f32.mrf.mxu0
      %v5211 = vadd.f32 %v5162, %v5210
      %5212 = vmatmul.bf16.gmra.mxu0 %v4679
      %v5213 = vpop.f32.mrf.mxu0
      %v5214 = vadd.f32 %v5165, %v5213
      %v5215 = vpop.f32.mrf.mxu0
      %v5216 = vadd.f32 %v5167, %v5215
      %5217 = vdwg.mxu0
      %5218 = vmatpush.bf16.msra.mxu0 %v5005
      %5219 = vmatpush.bf16.msra.mxu0 %v5003
      %5220 = vmatpush.bf16.msra.mxu0 %v5001
      %5221 = vmatpush.bf16.msra.mxu0 %v4999
      %5222 = vmatpush.bf16.msra.mxu0 %v4997
      %5223 = vmatpush.bf16.msra.mxu0 %v4995
      %5224 = vmatpush.bf16.msra.mxu0 %v4993
      %5225 = vmatpush.bf16.msra.mxu0 %v4991
      %5226 = vmatmul.bf16.gmra.mxu0 %v4652
      %v5227 = vpop.f32.mrf.mxu0
      %v5228 = vadd.f32 %v5179, %v5227
      %v5229 = vpop.f32.mrf.mxu0
      %v5230 = vadd.f32 %v5181, %v5229
      %5231 = vmatmul.bf16.gmra.mxu0 %v4656
      %v5232 = vpop.f32.mrf.mxu0
      %v5233 = vadd.f32 %v5184, %v5232
      %v5234 = vpop.f32.mrf.mxu0
      %v5235 = vadd.f32 %v5186, %v5234
      %5236 = vmatmul.bf16.gmra.mxu0 %v4660
      %v5237 = vpop.f32.mrf.mxu0
      %v5238 = vadd.f32 %v5189, %v5237
      %v5239 = vpop.f32.mrf.mxu0
      %v5240 = vadd.f32 %v5191, %v5239
      %5241 = vmatmul.bf16.gmra.mxu0 %v4664
      %v5242 = vpop.f32.mrf.mxu0
      %v5243 = vadd.f32 %v5194, %v5242
      %v5244 = vpop.f32.mrf.mxu0
      %v5245 = vadd.f32 %v5196, %v5244
      %5246 = vmatmul.bf16.gmra.mxu0 %v4668
      %v5247 = vpop.f32.mrf.mxu0
      %v5248 = vadd.f32 %v5199, %v5247
      %v5249 = vpop.f32.mrf.mxu0
      %v5250 = vadd.f32 %v5201, %v5249
      %5251 = vmatmul.bf16.gmra.mxu0 %v4672
      %v5252 = vpop.f32.mrf.mxu0
      %v5253 = vadd.f32 %v5204, %v5252
      %v5254 = vpop.f32.mrf.mxu0
      %v5255 = vadd.f32 %v5206, %v5254
      %5256 = vmatmul.bf16.gmra.mxu0 %v4676
      %v5257 = vpop.f32.mrf.mxu0
      %v5258 = vadd.f32 %v5209, %v5257
      %v5259 = vpop.f32.mrf.mxu0
      %v5260 = vadd.f32 %v5211, %v5259
      %5261 = vmatmul.bf16.gmra.mxu0 %v4680
      %v5262 = vpop.f32.mrf.mxu0
      %v5263 = vadd.f32 %v5214, %v5262
      %v5264 = vpop.f32.mrf.mxu0
      %v5265 = vadd.f32 %v5216, %v5264
      %5266 = vdwg.mxu0
      %5267 = vmatpush.bf16.msra.mxu0 %v4958
      %5268 = vmatpush.bf16.msra.mxu0 %v4956
      %5269 = vmatpush.bf16.msra.mxu0 %v4954
      %5270 = vmatpush.bf16.msra.mxu0 %v4952
      %5271 = vmatpush.bf16.msra.mxu0 %v4950
      %5272 = vmatpush.bf16.msra.mxu0 %v4948
      %5273 = vmatpush.bf16.msra.mxu0 %v4946
      %5274 = vmatpush.bf16.msra.mxu0 %v4944
      %5275 = vmatmul.bf16.gmra.mxu0 %v4649
      %v5276 = vpop.f32.mrf.mxu0
      %v5277 = vadd.f32 %v4748, %v5276
      %v5278 = vpop.f32.mrf.mxu0
      %v5279 = vadd.f32 %v4748, %v5278
      %5280 = vmatmul.bf16.gmra.mxu0 %v4653
      %v5281 = vpop.f32.mrf.mxu0
      %v5282 = vadd.f32 %v4748, %v5281
      %v5283 = vpop.f32.mrf.mxu0
      %v5284 = vadd.f32 %v4748, %v5283
      %5285 = vmatmul.bf16.gmra.mxu0 %v4657
      %v5286 = vpop.f32.mrf.mxu0
      %v5287 = vadd.f32 %v4748, %v5286
      %v5288 = vpop.f32.mrf.mxu0
      %v5289 = vadd.f32 %v4748, %v5288
      %5290 = vmatmul.bf16.gmra.mxu0 %v4661
      %v5291 = vpop.f32.mrf.mxu0
      %v5292 = vadd.f32 %v4748, %v5291
      %v5293 = vpop.f32.mrf.mxu0
      %v5294 = vadd.f32 %v4748, %v5293
      %5295 = vmatmul.bf16.gmra.mxu0 %v4665
      %v5296 = vpop.f32.mrf.mxu0
      %v5297 = vadd.f32 %v4748, %v5296
      %v5298 = vpop.f32.mrf.mxu0
      %v5299 = vadd.f32 %v4748, %v5298
      %5300 = vmatmul.bf16.gmra.mxu0 %v4669
      %v5301 = vpop.f32.mrf.mxu0
      %v5302 = vadd.f32 %v4748, %v5301
      %v5303 = vpop.f32.mrf.mxu0
      %v5304 = vadd.f32 %v4748, %v5303
      %5305 = vmatmul.bf16.gmra.mxu0 %v4673
      %v5306 = vpop.f32.mrf.mxu0
      %v5307 = vadd.f32 %v4748, %v5306
      %v5308 = vpop.f32.mrf.mxu0
      %v5309 = vadd.f32 %v4748, %v5308
      %5310 = vmatmul.bf16.gmra.mxu0 %v4677
      %v5311 = vpop.f32.mrf.mxu0
      %v5312 = vadd.f32 %v4748, %v5311
      %v5313 = vpop.f32.mrf.mxu0
      %v5314 = vadd.f32 %v4748, %v5313
      %5315 = vdwg.mxu0
      %5316 = vmatpush.bf16.msra.mxu0 %v4974
      %5317 = vmatpush.bf16.msra.mxu0 %v4972
      %5318 = vmatpush.bf16.msra.mxu0 %v4970
      %5319 = vmatpush.bf16.msra.mxu0 %v4968
      %5320 = vmatpush.bf16.msra.mxu0 %v4966
      %5321 = vmatpush.bf16.msra.mxu0 %v4964
      %5322 = vmatpush.bf16.msra.mxu0 %v4962
      %5323 = vmatpush.bf16.msra.mxu0 %v4960
      %5324 = vmatmul.bf16.gmra.mxu0 %v4650
      %v5325 = vpop.f32.mrf.mxu0
      %v5326 = vadd.f32 %v5277, %v5325
      %v5327 = vpop.f32.mrf.mxu0
      %v5328 = vadd.f32 %v5279, %v5327
      %5329 = vmatmul.bf16.gmra.mxu0 %v4654
      %v5330 = vpop.f32.mrf.mxu0
      %v5331 = vadd.f32 %v5282, %v5330
      %v5332 = vpop.f32.mrf.mxu0
      %v5333 = vadd.f32 %v5284, %v5332
      %5334 = vmatmul.bf16.gmra.mxu0 %v4658
      %v5335 = vpop.f32.mrf.mxu0
      %v5336 = vadd.f32 %v5287, %v5335
      %v5337 = vpop.f32.mrf.mxu0
      %v5338 = vadd.f32 %v5289, %v5337
      %5339 = vmatmul.bf16.gmra.mxu0 %v4662
      %v5340 = vpop.f32.mrf.mxu0
      %v5341 = vadd.f32 %v5292, %v5340
      %v5342 = vpop.f32.mrf.mxu0
      %v5343 = vadd.f32 %v5294, %v5342
      %5344 = vmatmul.bf16.gmra.mxu0 %v4666
      %v5345 = vpop.f32.mrf.mxu0
      %v5346 = vadd.f32 %v5297, %v5345
      %v5347 = vpop.f32.mrf.mxu0
      %v5348 = vadd.f32 %v5299, %v5347
      %5349 = vmatmul.bf16.gmra.mxu0 %v4670
      %v5350 = vpop.f32.mrf.mxu0
      %v5351 = vadd.f32 %v5302, %v5350
      %v5352 = vpop.f32.mrf.mxu0
      %v5353 = vadd.f32 %v5304, %v5352
      %5354 = vmatmul.bf16.gmra.mxu0 %v4674
      %v5355 = vpop.f32.mrf.mxu0
      %v5356 = vadd.f32 %v5307, %v5355
      %v5357 = vpop.f32.mrf.mxu0
      %v5358 = vadd.f32 %v5309, %v5357
      %5359 = vmatmul.bf16.gmra.mxu0 %v4678
      %v5360 = vpop.f32.mrf.mxu0
      %v5361 = vadd.f32 %v5312, %v5360
      %v5362 = vpop.f32.mrf.mxu0
      %v5363 = vadd.f32 %v5314, %v5362
      %5364 = vdwg.mxu0
      %5365 = vmatpush.bf16.msra.mxu0 %v4990
      %5366 = vmatpush.bf16.msra.mxu0 %v4988
      %5367 = vmatpush.bf16.msra.mxu0 %v4986
      %5368 = vmatpush.bf16.msra.mxu0 %v4984
      %5369 = vmatpush.bf16.msra.mxu0 %v4982
      %5370 = vmatpush.bf16.msra.mxu0 %v4980
      %5371 = vmatpush.bf16.msra.mxu0 %v4978
      %5372 = vmatpush.bf16.msra.mxu0 %v4976
      %5373 = vmatmul.bf16.gmra.mxu0 %v4651
      %v5374 = vpop.f32.mrf.mxu0
      %v5375 = vadd.f32 %v5326, %v5374
      %v5376 = vpop.f32.mrf.mxu0
      %v5377 = vadd.f32 %v5328, %v5376
      %5378 = vmatmul.bf16.gmra.mxu0 %v4655
      %v5379 = vpop.f32.mrf.mxu0
      %v5380 = vadd.f32 %v5331, %v5379
      %v5381 = vpop.f32.mrf.mxu0
      %v5382 = vadd.f32 %v5333, %v5381
      %5383 = vmatmul.bf16.gmra.mxu0 %v4659
      %v5384 = vpop.f32.mrf.mxu0
      %v5385 = vadd.f32 %v5336, %v5384
      %v5386 = vpop.f32.mrf.mxu0
      %v5387 = vadd.f32 %v5338, %v5386
      %5388 = vmatmul.bf16.gmra.mxu0 %v4663
      %v5389 = vpop.f32.mrf.mxu0
      %v5390 = vadd.f32 %v5341, %v5389
      %v5391 = vpop.f32.mrf.mxu0
      %v5392 = vadd.f32 %v5343, %v5391
      %5393 = vmatmul.bf16.gmra.mxu0 %v4667
      %v5394 = vpop.f32.mrf.mxu0
      %v5395 = vadd.f32 %v5346, %v5394
      %v5396 = vpop.f32.mrf.mxu0
      %v5397 = vadd.f32 %v5348, %v5396
      %5398 = vmatmul.bf16.gmra.mxu0 %v4671
      %v5399 = vpop.f32.mrf.mxu0
      %v5400 = vadd.f32 %v5351, %v5399
      %v5401 = vpop.f32.mrf.mxu0
      %v5402 = vadd.f32 %v5353, %v5401
      %5403 = vmatmul.bf16.gmra.mxu0 %v4675
      %v5404 = vpop.f32.mrf.mxu0
      %v5405 = vadd.f32 %v5356, %v5404
      %v5406 = vpop.f32.mrf.mxu0
      %v5407 = vadd.f32 %v5358, %v5406
      %5408 = vmatmul.bf16.gmra.mxu0 %v4679
      %v5409 = vpop.f32.mrf.mxu0
      %v5410 = vadd.f32 %v5361, %v5409
      %v5411 = vpop.f32.mrf.mxu0
      %v5412 = vadd.f32 %v5363, %v5411
      %5413 = vdwg.mxu0
      %5414 = vmatpush.bf16.msra.mxu0 %v5006
      %5415 = vmatpush.bf16.msra.mxu0 %v5004
      %5416 = vmatpush.bf16.msra.mxu0 %v5002
      %5417 = vmatpush.bf16.msra.mxu0 %v5000
      %5418 = vmatpush.bf16.msra.mxu0 %v4998
      %5419 = vmatpush.bf16.msra.mxu0 %v4996
      %5420 = vmatpush.bf16.msra.mxu0 %v4994
      %5421 = vmatpush.bf16.msra.mxu0 %v4992
      %5422 = vmatmul.bf16.gmra.mxu0 %v4652
      %v5423 = vpop.f32.mrf.mxu0
      %v5424 = vadd.f32 %v5375, %v5423
      %v5425 = vpop.f32.mrf.mxu0
      %v5426 = vadd.f32 %v5377, %v5425
      %5427 = vmatmul.bf16.gmra.mxu0 %v4656
      %v5428 = vpop.f32.mrf.mxu0
      %v5429 = vadd.f32 %v5380, %v5428
      %v5430 = vpop.f32.mrf.mxu0
      %v5431 = vadd.f32 %v5382, %v5430
      %5432 = vmatmul.bf16.gmra.mxu0 %v4660
      %v5433 = vpop.f32.mrf.mxu0
      %v5434 = vadd.f32 %v5385, %v5433
      %v5435 = vpop.f32.mrf.mxu0
      %v5436 = vadd.f32 %v5387, %v5435
      %5437 = vmatmul.bf16.gmra.mxu0 %v4664
      %v5438 = vpop.f32.mrf.mxu0
      %v5439 = vadd.f32 %v5390, %v5438
      %v5440 = vpop.f32.mrf.mxu0
      %v5441 = vadd.f32 %v5392, %v5440
      %5442 = vmatmul.bf16.gmra.mxu0 %v4668
      %v5443 = vpop.f32.mrf.mxu0
      %v5444 = vadd.f32 %v5395, %v5443
      %v5445 = vpop.f32.mrf.mxu0
      %v5446 = vadd.f32 %v5397, %v5445
      %5447 = vmatmul.bf16.gmra.mxu0 %v4672
      %v5448 = vpop.f32.mrf.mxu0
      %v5449 = vadd.f32 %v5400, %v5448
      %v5450 = vpop.f32.mrf.mxu0
      %v5451 = vadd.f32 %v5402, %v5450
      %5452 = vmatmul.bf16.gmra.mxu0 %v4676
      %v5453 = vpop.f32.mrf.mxu0
      %v5454 = vadd.f32 %v5405, %v5453
      %v5455 = vpop.f32.mrf.mxu0
      %v5456 = vadd.f32 %v5407, %v5455
      %5457 = vmatmul.bf16.gmra.mxu0 %v4680
      %v5458 = vpop.f32.mrf.mxu0
      %v5459 = vadd.f32 %v5410, %v5458
      %v5460 = vpop.f32.mrf.mxu0
      %v5461 = vadd.f32 %v5412, %v5460
      %5462 = vdwg.mxu0
      %v5463 = vadd.f32 %v3751, %v5228
      %v5464 = vadd.f32 %v3752, %v5424
      %v5465 = vadd.f32 %v3753, %v5230
      %v5466 = vadd.f32 %v3754, %v5426
      %v5467 = vadd.f32 %v3755, %v5233
      %v5468 = vadd.f32 %v3756, %v5429
      %v5469 = vadd.f32 %v3757, %v5235
      %v5470 = vadd.f32 %v3758, %v5431
      %v5471 = vadd.f32 %v3759, %v5238
      %v5472 = vadd.f32 %v3760, %v5434
      %v5473 = vadd.f32 %v3761, %v5240
      %v5474 = vadd.f32 %v3762, %v5436
      %v5475 = vadd.f32 %v3763, %v5243
      %v5476 = vadd.f32 %v3764, %v5439
      %v5477 = vadd.f32 %v3765, %v5245
      %v5478 = vadd.f32 %v3766, %v5441
      %v5479 = vadd.f32 %v3767, %v5248
      %v5480 = vadd.f32 %v3768, %v5444
      %v5481 = vadd.f32 %v3769, %v5250
      %v5482 = vadd.f32 %v3770, %v5446
      %v5483 = vadd.f32 %v3771, %v5253
      %v5484 = vadd.f32 %v3772, %v5449
      %v5485 = vadd.f32 %v3773, %v5255
      %v5486 = vadd.f32 %v3774, %v5451
      %v5487 = vadd.f32 %v3775, %v5258
      %v5488 = vadd.f32 %v3776, %v5454
      %v5489 = vadd.f32 %v3777, %v5260
      %v5490 = vadd.f32 %v3778, %v5456
      %v5491 = vadd.f32 %v3779, %v5263
      %v5492 = vadd.f32 %v3780, %v5459
      %v5493 = vadd.f32 %v3781, %v5265
      %v5494 = vadd.f32 %v3782, %v5461
      %v5495 = vld [vmem:[%s15] sm:$0x3]
      %v5496 = vld [vmem:[%s16] sm:$0x3]
      %v5497 = vadd.f32 %v5463, %v5464
      %5498 = vadd.xlane.f32.xlu0 %v5497
      %v5499 = vpop.xlane.xlu0 %5498
      %v5500 = vadd.f32 %v5465, %v5466
      %5501 = vadd.xlane.f32.xlu0 %v5500
      %v5502 = vpop.xlane.xlu0 %5501
      %v5503 = vadd.f32 %v5467, %v5468
      %5504 = vadd.xlane.f32.xlu0 %v5503
      %v5505 = vpop.xlane.xlu0 %5504
      %v5506 = vadd.f32 %v5469, %v5470
      %5507 = vadd.xlane.f32.xlu0 %v5506
      %v5508 = vpop.xlane.xlu0 %5507
      %v5509 = vadd.f32 %v5471, %v5472
      %5510 = vadd.xlane.f32.xlu0 %v5509
      %v5511 = vpop.xlane.xlu0 %5510
      %v5512 = vadd.f32 %v5473, %v5474
      %5513 = vadd.xlane.f32.xlu0 %v5512
      %v5514 = vpop.xlane.xlu0 %5513
      %v5515 = vadd.f32 %v5475, %v5476
      %5516 = vadd.xlane.f32.xlu0 %v5515
      %v5517 = vpop.xlane.xlu0 %5516
      %v5518 = vadd.f32 %v5477, %v5478
      %5519 = vadd.xlane.f32.xlu0 %v5518
      %v5520 = vpop.xlane.xlu0 %5519
      %v5521 = vadd.f32 %v5479, %v5480
      %5522 = vadd.xlane.f32.xlu0 %v5521
      %v5523 = vpop.xlane.xlu0 %5522
      %v5524 = vadd.f32 %v5481, %v5482
      %5525 = vadd.xlane.f32.xlu0 %v5524
      %v5526 = vpop.xlane.xlu0 %5525
      %v5527 = vadd.f32 %v5483, %v5484
      %5528 = vadd.xlane.f32.xlu0 %v5527
      %v5529 = vpop.xlane.xlu0 %5528
      %v5530 = vadd.f32 %v5485, %v5486
      %5531 = vadd.xlane.f32.xlu0 %v5530
      %v5532 = vpop.xlane.xlu0 %5531
      %v5533 = vadd.f32 %v5487, %v5488
      %5534 = vadd.xlane.f32.xlu0 %v5533
      %v5535 = vpop.xlane.xlu0 %5534
      %v5536 = vadd.f32 %v5489, %v5490
      %5537 = vadd.xlane.f32.xlu0 %v5536
      %v5538 = vpop.xlane.xlu0 %5537
      %v5539 = vadd.f32 %v5491, %v5492
      %5540 = vadd.xlane.f32.xlu0 %v5539
      %v5541 = vpop.xlane.xlu0 %5540
      %v5542 = vadd.f32 %v5493, %v5494
      %5543 = vadd.xlane.f32.xlu0 %v5542
      %v5544 = vpop.xlane.xlu0 %5543
      %v5545 = vmul.f32 %v5499, %v3356
      %v5546 = vmul.f32 %v5502, %v3356
      %v5547 = vmul.f32 %v5505, %v3356
      %v5548 = vmul.f32 %v5508, %v3356
      %v5549 = vmul.f32 %v5511, %v3356
      %v5550 = vmul.f32 %v5514, %v3356
      %v5551 = vmul.f32 %v5517, %v3356
      %v5552 = vmul.f32 %v5520, %v3356
      %v5553 = vmul.f32 %v5523, %v3356
      %v5554 = vmul.f32 %v5526, %v3356
      %v5555 = vmul.f32 %v5529, %v3356
      %v5556 = vmul.f32 %v5532, %v3356
      %v5557 = vmul.f32 %v5535, %v3356
      %v5558 = vmul.f32 %v5538, %v3356
      %v5559 = vmul.f32 %v5541, %v3356
      %v5560 = vmul.f32 %v5544, %v3356
      %v5561 = vsub.f32 %v5463, %v5545
      %v5562 = vsub.f32 %v5464, %v5545
      %v5563 = vsub.f32 %v5465, %v5546
      %v5564 = vsub.f32 %v5466, %v5546
      %v5565 = vsub.f32 %v5467, %v5547
      %v5566 = vsub.f32 %v5468, %v5547
      %v5567 = vsub.f32 %v5469, %v5548
      %v5568 = vsub.f32 %v5470, %v5548
      %v5569 = vsub.f32 %v5471, %v5549
      %v5570 = vsub.f32 %v5472, %v5549
      %v5571 = vsub.f32 %v5473, %v5550
      %v5572 = vsub.f32 %v5474, %v5550
      %v5573 = vsub.f32 %v5475, %v5551
      %v5574 = vsub.f32 %v5476, %v5551
      %v5575 = vsub.f32 %v5477, %v5552
      %v5576 = vsub.f32 %v5478, %v5552
      %v5577 = vsub.f32 %v5479, %v5553
      %v5578 = vsub.f32 %v5480, %v5553
      %v5579 = vsub.f32 %v5481, %v5554
      %v5580 = vsub.f32 %v5482, %v5554
      %v5581 = vsub.f32 %v5483, %v5555
      %v5582 = vsub.f32 %v5484, %v5555
      %v5583 = vsub.f32 %v5485, %v5556
      %v5584 = vsub.f32 %v5486, %v5556
      %v5585 = vsub.f32 %v5487, %v5557
      %v5586 = vsub.f32 %v5488, %v5557
      %v5587 = vsub.f32 %v5489, %v5558
      %v5588 = vsub.f32 %v5490, %v5558
      %v5589 = vsub.f32 %v5491, %v5559
      %v5590 = vsub.f32 %v5492, %v5559
      %v5591 = vsub.f32 %v5493, %v5560
      %v5592 = vsub.f32 %v5494, %v5560
      %v5593 = vmul.f32 %v5561, %v5561
      %v5594 = vmul.f32 %v5562, %v5562
      %v5595 = vmul.f32 %v5563, %v5563
      %v5596 = vmul.f32 %v5564, %v5564
      %v5597 = vmul.f32 %v5565, %v5565
      %v5598 = vmul.f32 %v5566, %v5566
      %v5599 = vmul.f32 %v5567, %v5567
      %v5600 = vmul.f32 %v5568, %v5568
      %v5601 = vmul.f32 %v5569, %v5569
      %v5602 = vmul.f32 %v5570, %v5570
      %v5603 = vmul.f32 %v5571, %v5571
      %v5604 = vmul.f32 %v5572, %v5572
      %v5605 = vmul.f32 %v5573, %v5573
      %v5606 = vmul.f32 %v5574, %v5574
      %v5607 = vmul.f32 %v5575, %v5575
      %v5608 = vmul.f32 %v5576, %v5576
      %v5609 = vmul.f32 %v5577, %v5577
      %v5610 = vmul.f32 %v5578, %v5578
      %v5611 = vmul.f32 %v5579, %v5579
      %v5612 = vmul.f32 %v5580, %v5580
      %v5613 = vmul.f32 %v5581, %v5581
      %v5614 = vmul.f32 %v5582, %v5582
      %v5615 = vmul.f32 %v5583, %v5583
      %v5616 = vmul.f32 %v5584, %v5584
      %v5617 = vmul.f32 %v5585, %v5585
      %v5618 = vmul.f32 %v5586, %v5586
      %v5619 = vmul.f32 %v5587, %v5587
      %v5620 = vmul.f32 %v5588, %v5588
      %v5621 = vmul.f32 %v5589, %v5589
      %v5622 = vmul.f32 %v5590, %v5590
      %v5623 = vmul.f32 %v5591, %v5591
      %v5624 = vmul.f32 %v5592, %v5592
      %v5625 = vadd.f32 %v5593, %v5594
      %5626 = vadd.xlane.f32.xlu0 %v5625
      %v5627 = vpop.xlane.xlu0 %5626
      %v5628 = vadd.f32 %v5595, %v5596
      %5629 = vadd.xlane.f32.xlu0 %v5628
      %v5630 = vpop.xlane.xlu0 %5629
      %v5631 = vadd.f32 %v5597, %v5598
      %5632 = vadd.xlane.f32.xlu0 %v5631
      %v5633 = vpop.xlane.xlu0 %5632
      %v5634 = vadd.f32 %v5599, %v5600
      %5635 = vadd.xlane.f32.xlu0 %v5634
      %v5636 = vpop.xlane.xlu0 %5635
      %v5637 = vadd.f32 %v5601, %v5602
      %5638 = vadd.xlane.f32.xlu0 %v5637
      %v5639 = vpop.xlane.xlu0 %5638
      %v5640 = vadd.f32 %v5603, %v5604
      %5641 = vadd.xlane.f32.xlu0 %v5640
      %v5642 = vpop.xlane.xlu0 %5641
      %v5643 = vadd.f32 %v5605, %v5606
      %5644 = vadd.xlane.f32.xlu0 %v5643
      %v5645 = vpop.xlane.xlu0 %5644
      %v5646 = vadd.f32 %v5607, %v5608
      %5647 = vadd.xlane.f32.xlu0 %v5646
      %v5648 = vpop.xlane.xlu0 %5647
      %v5649 = vadd.f32 %v5609, %v5610
      %5650 = vadd.xlane.f32.xlu0 %v5649
      %v5651 = vpop.xlane.xlu0 %5650
      %v5652 = vadd.f32 %v5611, %v5612
      %5653 = vadd.xlane.f32.xlu0 %v5652
      %v5654 = vpop.xlane.xlu0 %5653
      %v5655 = vadd.f32 %v5613, %v5614
      %5656 = vadd.xlane.f32.xlu0 %v5655
      %v5657 = vpop.xlane.xlu0 %5656
      %v5658 = vadd.f32 %v5615, %v5616
      %5659 = vadd.xlane.f32.xlu0 %v5658
      %v5660 = vpop.xlane.xlu0 %5659
      %v5661 = vadd.f32 %v5617, %v5618
      %5662 = vadd.xlane.f32.xlu0 %v5661
      %v5663 = vpop.xlane.xlu0 %5662
      %v5664 = vadd.f32 %v5619, %v5620
      %5665 = vadd.xlane.f32.xlu0 %v5664
      %v5666 = vpop.xlane.xlu0 %5665
      %v5667 = vadd.f32 %v5621, %v5622
      %5668 = vadd.xlane.f32.xlu0 %v5667
      %v5669 = vpop.xlane.xlu0 %5668
      %v5670 = vadd.f32 %v5623, %v5624
      %5671 = vadd.xlane.f32.xlu0 %v5670
      %v5672 = vpop.xlane.xlu0 %5671
      %v5673 = vmul.f32 %v5627, %v3356
      %v5674 = vmul.f32 %v5630, %v3356
      %v5675 = vmul.f32 %v5633, %v3356
      %v5676 = vmul.f32 %v5636, %v3356
      %v5677 = vmul.f32 %v5639, %v3356
      %v5678 = vmul.f32 %v5642, %v3356
      %v5679 = vmul.f32 %v5645, %v3356
      %v5680 = vmul.f32 %v5648, %v3356
      %v5681 = vmul.f32 %v5651, %v3356
      %v5682 = vmul.f32 %v5654, %v3356
      %v5683 = vmul.f32 %v5657, %v3356
      %v5684 = vmul.f32 %v5660, %v3356
      %v5685 = vmul.f32 %v5663, %v3356
      %v5686 = vmul.f32 %v5666, %v3356
      %v5687 = vmul.f32 %v5669, %v3356
      %v5688 = vmul.f32 %v5672, %v3356
      %v5689 = vadd.f32 %v5673, 1e-05
      %v5690 = vadd.f32 %v5674, 1e-05
      %v5691 = vadd.f32 %v5675, 1e-05
      %v5692 = vadd.f32 %v5676, 1e-05
      %v5693 = vadd.f32 %v5677, 1e-05
      %v5694 = vadd.f32 %v5678, 1e-05
      %v5695 = vadd.f32 %v5679, 1e-05
      %v5696 = vadd.f32 %v5680, 1e-05
      %v5697 = vadd.f32 %v5681, 1e-05
      %v5698 = vadd.f32 %v5682, 1e-05
      %v5699 = vadd.f32 %v5683, 1e-05
      %v5700 = vadd.f32 %v5684, 1e-05
      %v5701 = vadd.f32 %v5685, 1e-05
      %v5702 = vadd.f32 %v5686, 1e-05
      %v5703 = vadd.f32 %v5687, 1e-05
      %v5704 = vadd.f32 %v5688, 1e-05
      %v5705 = vrsqrt.pop %v5689
      %v5706 = vmul.f32 %v5705, %v5689
      %v5707 = vmul.f32 %v5706, %v5705
      %v5708 = vmul.f32 0.5, %v5707
      %v5709 = vsub.f32 1.5, %v5708
      %v5710 = vmul.f32 %v5705, %v5709
      %vm5711 = vweird.f32 %v5689
      %vm5712 = vweird.f32 %v5705
      %vm5713 = vmor %vm5711, %vm5712
      %v5714 = vsel %vm5713, %v5705, %v5710
      %v5715 = vrsqrt.pop %v5690
      %v5716 = vmul.f32 %v5715, %v5690
      %v5717 = vmul.f32 %v5716, %v5715
      %v5718 = vmul.f32 0.5, %v5717
      %v5719 = vsub.f32 1.5, %v5718
      %v5720 = vmul.f32 %v5715, %v5719
      %vm5721 = vweird.f32 %v5690
      %vm5722 = vweird.f32 %v5715
      %vm5723 = vmor %vm5721, %vm5722
      %v5724 = vsel %vm5723, %v5715, %v5720
      %v5725 = vrsqrt.pop %v5691
      %v5726 = vmul.f32 %v5725, %v5691
      %v5727 = vmul.f32 %v5726, %v5725
      %v5728 = vmul.f32 0.5, %v5727
      %v5729 = vsub.f32 1.5, %v5728
      %v5730 = vmul.f32 %v5725, %v5729
      %vm5731 = vweird.f32 %v5691
      %vm5732 = vweird.f32 %v5725
      %vm5733 = vmor %vm5731, %vm5732
      %v5734 = vsel %vm5733, %v5725, %v5730
      %v5735 = vrsqrt.pop %v5692
      %v5736 = vmul.f32 %v5735, %v5692
      %v5737 = vmul.f32 %v5736, %v5735
      %v5738 = vmul.f32 0.5, %v5737
      %v5739 = vsub.f32 1.5, %v5738
      %v5740 = vmul.f32 %v5735, %v5739
      %vm5741 = vweird.f32 %v5692
      %vm5742 = vweird.f32 %v5735
      %vm5743 = vmor %vm5741, %vm5742
      %v5744 = vsel %vm5743, %v5735, %v5740
      %v5745 = vrsqrt.pop %v5693
      %v5746 = vmul.f32 %v5745, %v5693
      %v5747 = vmul.f32 %v5746, %v5745
      %v5748 = vmul.f32 0.5, %v5747
      %v5749 = vsub.f32 1.5, %v5748
      %v5750 = vmul.f32 %v5745, %v5749
      %vm5751 = vweird.f32 %v5693
      %vm5752 = vweird.f32 %v5745
      %vm5753 = vmor %vm5751, %vm5752
      %v5754 = vsel %vm5753, %v5745, %v5750
      %v5755 = vrsqrt.pop %v5694
      %v5756 = vmul.f32 %v5755, %v5694
      %v5757 = vmul.f32 %v5756, %v5755
      %v5758 = vmul.f32 0.5, %v5757
      %v5759 = vsub.f32 1.5, %v5758
      %v5760 = vmul.f32 %v5755, %v5759
      %vm5761 = vweird.f32 %v5694
      %vm5762 = vweird.f32 %v5755
      %vm5763 = vmor %vm5761, %vm5762
      %v5764 = vsel %vm5763, %v5755, %v5760
      %v5765 = vrsqrt.pop %v5695
      %v5766 = vmul.f32 %v5765, %v5695
      %v5767 = vmul.f32 %v5766, %v5765
      %v5768 = vmul.f32 0.5, %v5767
      %v5769 = vsub.f32 1.5, %v5768
      %v5770 = vmul.f32 %v5765, %v5769
      %vm5771 = vweird.f32 %v5695
      %vm5772 = vweird.f32 %v5765
      %vm5773 = vmor %vm5771, %vm5772
      %v5774 = vsel %vm5773, %v5765, %v5770
      %v5775 = vrsqrt.pop %v5696
      %v5776 = vmul.f32 %v5775, %v5696
      %v5777 = vmul.f32 %v5776, %v5775
      %v5778 = vmul.f32 0.5, %v5777
      %v5779 = vsub.f32 1.5, %v5778
      %v5780 = vmul.f32 %v5775, %v5779
      %vm5781 = vweird.f32 %v5696
      %vm5782 = vweird.f32 %v5775
      %vm5783 = vmor %vm5781, %vm5782
      %v5784 = vsel %vm5783, %v5775, %v5780
      %v5785 = vrsqrt.pop %v5697
      %v5786 = vmul.f32 %v5785, %v5697
      %v5787 = vmul.f32 %v5786, %v5785
      %v5788 = vmul.f32 0.5, %v5787
      %v5789 = vsub.f32 1.5, %v5788
      %v5790 = vmul.f32 %v5785, %v5789
      %vm5791 = vweird.f32 %v5697
      %vm5792 = vweird.f32 %v5785
      %vm5793 = vmor %vm5791, %vm5792
      %v5794 = vsel %vm5793, %v5785, %v5790
      %v5795 = vrsqrt.pop %v5698
      %v5796 = vmul.f32 %v5795, %v5698
      %v5797 = vmul.f32 %v5796, %v5795
      %v5798 = vmul.f32 0.5, %v5797
      %v5799 = vsub.f32 1.5, %v5798
      %v5800 = vmul.f32 %v5795, %v5799
      %vm5801 = vweird.f32 %v5698
      %vm5802 = vweird.f32 %v5795
      %vm5803 = vmor %vm5801, %vm5802
      %v5804 = vsel %vm5803, %v5795, %v5800
      %v5805 = vrsqrt.pop %v5699
      %v5806 = vmul.f32 %v5805, %v5699
      %v5807 = vmul.f32 %v5806, %v5805
      %v5808 = vmul.f32 0.5, %v5807
      %v5809 = vsub.f32 1.5, %v5808
      %v5810 = vmul.f32 %v5805, %v5809
      %vm5811 = vweird.f32 %v5699
      %vm5812 = vweird.f32 %v5805
      %vm5813 = vmor %vm5811, %vm5812
      %v5814 = vsel %vm5813, %v5805, %v5810
      %v5815 = vrsqrt.pop %v5700
      %v5816 = vmul.f32 %v5815, %v5700
      %v5817 = vmul.f32 %v5816, %v5815
      %v5818 = vmul.f32 0.5, %v5817
      %v5819 = vsub.f32 1.5, %v5818
      %v5820 = vmul.f32 %v5815, %v5819
      %vm5821 = vweird.f32 %v5700
      %vm5822 = vweird.f32 %v5815
      %vm5823 = vmor %vm5821, %vm5822
      %v5824 = vsel %vm5823, %v5815, %v5820
      %v5825 = vrsqrt.pop %v5701
      %v5826 = vmul.f32 %v5825, %v5701
      %v5827 = vmul.f32 %v5826, %v5825
      %v5828 = vmul.f32 0.5, %v5827
      %v5829 = vsub.f32 1.5, %v5828
      %v5830 = vmul.f32 %v5825, %v5829
      %vm5831 = vweird.f32 %v5701
      %vm5832 = vweird.f32 %v5825
      %vm5833 = vmor %vm5831, %vm5832
      %v5834 = vsel %vm5833, %v5825, %v5830
      %v5835 = vrsqrt.pop %v5702
      %v5836 = vmul.f32 %v5835, %v5702
      %v5837 = vmul.f32 %v5836, %v5835
      %v5838 = vmul.f32 0.5, %v5837
      %v5839 = vsub.f32 1.5, %v5838
      %v5840 = vmul.f32 %v5835, %v5839
      %vm5841 = vweird.f32 %v5702
      %vm5842 = vweird.f32 %v5835
      %vm5843 = vmor %vm5841, %vm5842
      %v5844 = vsel %vm5843, %v5835, %v5840
      %v5845 = vrsqrt.pop %v5703
      %v5846 = vmul.f32 %v5845, %v5703
      %v5847 = vmul.f32 %v5846, %v5845
      %v5848 = vmul.f32 0.5, %v5847
      %v5849 = vsub.f32 1.5, %v5848
      %v5850 = vmul.f32 %v5845, %v5849
      %vm5851 = vweird.f32 %v5703
      %vm5852 = vweird.f32 %v5845
      %vm5853 = vmor %vm5851, %vm5852
      %v5854 = vsel %vm5853, %v5845, %v5850
      %v5855 = vrsqrt.pop %v5704
      %v5856 = vmul.f32 %v5855, %v5704
      %v5857 = vmul.f32 %v5856, %v5855
      %v5858 = vmul.f32 0.5, %v5857
      %v5859 = vsub.f32 1.5, %v5858
      %v5860 = vmul.f32 %v5855, %v5859
      %vm5861 = vweird.f32 %v5704
      %vm5862 = vweird.f32 %v5855
      %vm5863 = vmor %vm5861, %vm5862
      %v5864 = vsel %vm5863, %v5855, %v5860
      %v5865 = vmul.f32 %v5561, %v5714
      %v5866 = vmul.f32 %v5562, %v5714
      %v5867 = vmul.f32 %v5563, %v5724
      %v5868 = vmul.f32 %v5564, %v5724
      %v5869 = vmul.f32 %v5565, %v5734
      %v5870 = vmul.f32 %v5566, %v5734
      %v5871 = vmul.f32 %v5567, %v5744
      %v5872 = vmul.f32 %v5568, %v5744
      %v5873 = vmul.f32 %v5569, %v5754
      %v5874 = vmul.f32 %v5570, %v5754
      %v5875 = vmul.f32 %v5571, %v5764
      %v5876 = vmul.f32 %v5572, %v5764
      %v5877 = vmul.f32 %v5573, %v5774
      %v5878 = vmul.f32 %v5574, %v5774
      %v5879 = vmul.f32 %v5575, %v5784
      %v5880 = vmul.f32 %v5576, %v5784
      %v5881 = vmul.f32 %v5577, %v5794
      %v5882 = vmul.f32 %v5578, %v5794
      %v5883 = vmul.f32 %v5579, %v5804
      %v5884 = vmul.f32 %v5580, %v5804
      %v5885 = vmul.f32 %v5581, %v5814
      %v5886 = vmul.f32 %v5582, %v5814
      %v5887 = vmul.f32 %v5583, %v5824
      %v5888 = vmul.f32 %v5584, %v5824
      %v5889 = vmul.f32 %v5585, %v5834
      %v5890 = vmul.f32 %v5586, %v5834
      %v5891 = vmul.f32 %v5587, %v5844
      %v5892 = vmul.f32 %v5588, %v5844
      %v5893 = vmul.f32 %v5589, %v5854
      %v5894 = vmul.f32 %v5590, %v5854
      %v5895 = vmul.f32 %v5591, %v5864
      %v5896 = vmul.f32 %v5592, %v5864
      %v5898 = vperm.slane %v5495, 0
      %v5899 = vperm.slane %v5495, 1
      %v5902 = vmul.f32 %v5865, %v5898
      %v5903 = vmul.f32 %v5866, %v5899
      %v5904 = vmul.f32 %v5867, %v5898
      %v5905 = vmul.f32 %v5868, %v5899
      %v5906 = vmul.f32 %v5869, %v5898
      %v5907 = vmul.f32 %v5870, %v5899
      %v5908 = vmul.f32 %v5871, %v5898
      %v5909 = vmul.f32 %v5872, %v5899
      %v5910 = vmul.f32 %v5873, %v5898
      %v5911 = vmul.f32 %v5874, %v5899
      %v5912 = vmul.f32 %v5875, %v5898
      %v5913 = vmul.f32 %v5876, %v5899
      %v5914 = vmul.f32 %v5877, %v5898
      %v5915 = vmul.f32 %v5878, %v5899
      %v5916 = vmul.f32 %v5879, %v5898
      %v5917 = vmul.f32 %v5880, %v5899
      %v5918 = vmul.f32 %v5881, %v5898
      %v5919 = vmul.f32 %v5882, %v5899
      %v5920 = vmul.f32 %v5883, %v5898
      %v5921 = vmul.f32 %v5884, %v5899
      %v5922 = vmul.f32 %v5885, %v5898
      %v5923 = vmul.f32 %v5886, %v5899
      %v5924 = vmul.f32 %v5887, %v5898
      %v5925 = vmul.f32 %v5888, %v5899
      %v5926 = vmul.f32 %v5889, %v5898
      %v5927 = vmul.f32 %v5890, %v5899
      %v5928 = vmul.f32 %v5891, %v5898
      %v5929 = vmul.f32 %v5892, %v5899
      %v5930 = vmul.f32 %v5893, %v5898
      %v5931 = vmul.f32 %v5894, %v5899
      %v5932 = vmul.f32 %v5895, %v5898
      %v5933 = vmul.f32 %v5896, %v5899
      %v5935 = vperm.slane %v5496, 0
      %v5936 = vperm.slane %v5496, 1
      %v5939 = vadd.f32 %v5902, %v5935
      %v5940 = vadd.f32 %v5903, %v5936
      %v5941 = vadd.f32 %v5904, %v5935
      %v5942 = vadd.f32 %v5905, %v5936
      %v5943 = vadd.f32 %v5906, %v5935
      %v5944 = vadd.f32 %v5907, %v5936
      %v5945 = vadd.f32 %v5908, %v5935
      %v5946 = vadd.f32 %v5909, %v5936
      %v5947 = vadd.f32 %v5910, %v5935
      %v5948 = vadd.f32 %v5911, %v5936
      %v5949 = vadd.f32 %v5912, %v5935
      %v5950 = vadd.f32 %v5913, %v5936
      %v5951 = vadd.f32 %v5914, %v5935
      %v5952 = vadd.f32 %v5915, %v5936
      %v5953 = vadd.f32 %v5916, %v5935
      %v5954 = vadd.f32 %v5917, %v5936
      %v5955 = vadd.f32 %v5918, %v5935
      %v5956 = vadd.f32 %v5919, %v5936
      %v5957 = vadd.f32 %v5920, %v5935
      %v5958 = vadd.f32 %v5921, %v5936
      %v5959 = vadd.f32 %v5922, %v5935
      %v5960 = vadd.f32 %v5923, %v5936
      %v5961 = vadd.f32 %v5924, %v5935
      %v5962 = vadd.f32 %v5925, %v5936
      %v5963 = vadd.f32 %v5926, %v5935
      %v5964 = vadd.f32 %v5927, %v5936
      %v5965 = vadd.f32 %v5928, %v5935
      %v5966 = vadd.f32 %v5929, %v5936
      %v5967 = vadd.f32 %v5930, %v5935
      %v5968 = vadd.f32 %v5931, %v5936
      %v5969 = vadd.f32 %v5932, %v5935
      %v5970 = vadd.f32 %v5933, %v5936
      %5971 = vst [vmem:[%s548] sm:$0xff] %v5939
      %5972 = vst [vmem:[%s548 + $0x8] sm:$0xff] %v5940
      %5973 = vst [vmem:[%s548 + $0x10] sm:$0xff] %v5941
      %5974 = vst [vmem:[%s548 + $0x18] sm:$0xff] %v5942
      %5975 = vst [vmem:[%s548 + $0x20] sm:$0xff] %v5943
      %5976 = vst [vmem:[%s548 + $0x28] sm:$0xff] %v5944
      %5977 = vst [vmem:[%s548 + $0x30] sm:$0xff] %v5945
      %5978 = vst [vmem:[%s548 + $0x38] sm:$0xff] %v5946
      %5979 = vst [vmem:[%s548 + $0x40] sm:$0xff] %v5947
      %5980 = vst [vmem:[%s548 + $0x48] sm:$0xff] %v5948
      %5981 = vst [vmem:[%s548 + $0x50] sm:$0xff] %v5949
      %5982 = vst [vmem:[%s548 + $0x58] sm:$0xff] %v5950
      %5983 = vst [vmem:[%s548 + $0x60] sm:$0xff] %v5951
      %5984 = vst [vmem:[%s548 + $0x68] sm:$0xff] %v5952
      %5985 = vst [vmem:[%s548 + $0x70] sm:$0xff] %v5953
      %5986 = vst [vmem:[%s548 + $0x78] sm:$0xff] %v5954
      %5987 = vst [vmem:[%s548 + $0x80] sm:$0xff] %v5955
      %5988 = vst [vmem:[%s548 + $0x88] sm:$0xff] %v5956
      %5989 = vst [vmem:[%s548 + $0x90] sm:$0xff] %v5957
      %5990 = vst [vmem:[%s548 + $0x98] sm:$0xff] %v5958
      %5991 = vst [vmem:[%s548 + $0xa0] sm:$0xff] %v5959
      %5992 = vst [vmem:[%s548 + $0xa8] sm:$0xff] %v5960
      %5993 = vst [vmem:[%s548 + $0xb0] sm:$0xff] %v5961
      %5994 = vst [vmem:[%s548 + $0xb8] sm:$0xff] %v5962
      %5995 = vst [vmem:[%s548 + $0xc0] sm:$0xff] %v5963
      %5996 = vst [vmem:[%s548 + $0xc8] sm:$0xff] %v5964
      %5997 = vst [vmem:[%s548 + $0xd0] sm:$0xff] %v5965
      %5998 = vst [vmem:[%s548 + $0xd8] sm:$0xff] %v5966
      %5999 = vst [vmem:[%s548 + $0xe0] sm:$0xff] %v5967
      %6000 = vst [vmem:[%s548 + $0xe8] sm:$0xff] %v5968
      %6001 = vst [vmem:[%s548 + $0xf0] sm:$0xff] %v5969
      %6002 = vst [vmem:[%s548 + $0xf8] sm:$0xff] %v5970
      %p6003 = scmp.lt.s32.totalorder %s28, 1
      %s6004 = scalar_select %p6003, %s28, 1
      %s6005 = smul.addr %s6004, 32
      %s6006 = smul.addr %s6005, 8
      %s6007 = scalar_lea.vmem %s17, %s6006
      // Predicated region
      $region89: #{transformer_forward.3} parent=87 // pred_check
        %p6008 = pneg %p408
      $region90: #{transformer_forward.3} parent=87 // pred_check_branch
        %6010 = sbr.rel (%p6008) target = $region92
      $region91: #{transformer_forward.3} parent=87 // pred_region
        _
      $region92: #{transformer_forward.3} parent=87 // pred_fallthru
        _
    $region88: #{transformer_forward.3} parent=5 // pred_fallthru
      _
    %p6011 = scmp.le.s32.totalorder 2, %s23
    // Predicated region
    $region93: #{transformer_forward.3} parent=5 // pred_check
      %p6012 = pneg %p6011
    $region94: #{transformer_forward.3} parent=5 // pred_check_branch
      %6014 = sbr.rel (%p6012) target = $region96
    $region95: #{transformer_forward.3} parent=5 // pred_region
      %s6015 = ssub.s32 %s23, 2
      // Predicated region
      $region97: #{transformer_forward.3} parent=95 // pred_check
        %p6016 = pneg %p414
      $region98: #{transformer_forward.3} parent=95 // pred_check_branch
        %6018 = sbr.rel (%p6016) target = $region100
      $region99: #{transformer_forward.3} parent=95 // pred_region
        %p6019 = scmp.lt.s32.totalorder %s29, 1
        %s6020 = scalar_select %p6019, %s29, 1
        %s6021 = smul.addr %s6020, 32
        %s6022 = smul.addr %s6021, 8
        %s6023 = scalar_lea.vmem %s17, %s6022
      $region100: #{transformer_forward.3} parent=95 // pred_fallthru
        _
    $region96: #{transformer_forward.3} parent=5 // pred_fallthru
      _
  $region6: #{transformer_forward.3} parent=0 // loop_footer
    %s27 = sadd.s32 1, %s23
  $region7: #{transformer_forward.3} parent=0 // loop_footer_branch
    %22 = sbr.rel target = $region3
  $region8: #{transformer_forward.3} parent=0 // loop_exit
    _

</llo_original>
